<compile_context>
chip_gen: v5e
topology: v5e:2x2
jax: 0.10.0
libtpu: 0.0.40
codegen_flags: <defaults>
</compile_context>

<pallas_src>
import jax
import jax.numpy as jnp
from jax.experimental import pallas as pl
from jax.experimental.pallas import tpu as pltpu

K = 5        # 'K5' temporal kernel size
LANE = 128   # TPU lane width


def _round_up(n, m):
    return -(-n // m) * m


def _pool_select(bb, t_in, l_out):
    """Block-diagonal one-hot (bb*l_out, bb*t_in - K) bf16 selection matrix.

    Row bi*l_out + j picks column bi*t_in + 2j of the adjacent-max array, i.e. the
    MaxPool1d(kernel=2, ceil_mode=False) output j of stacked sequence bi, while
    skipping conv rows that straddle sequence boundaries in the stacked layout.
    """
    rows, cols = bb * l_out, bb * t_in - K
    r = jax.lax.broadcasted_iota(jnp.int32, (rows, cols), 0)
    c = jax.lax.broadcasted_iota(jnp.int32, (rows, cols), 1)
    tgt = (r // l_out) * t_in + 2 * (r % l_out)
    return (c == tgt).astype(jnp.bfloat16)


def _vmem_limit_bytes(needed):
    """Generation-aware VMEM request with headroom for Mosaic internal scratch."""
    try:
        phys = getattr(pltpu.get_tpu_info(), "vmem_capacity_bytes", 64 << 20)
    except Exception:                       # info query unavailable -> assume smallest
        phys = 64 << 20
    cap = min(phys - (8 << 20), 100 << 20)  # ~56 MiB on v7x, ~100 MiB on v5e/v6e
    return int(min(max(needed, 32 << 20), cap))


def _tconv_kernel(x_ref, w1_ref, s1_ref, c1_ref, w2_ref, s2_ref, c2_ref,
                  wfc_ref, bfc_ref, sel1_ref, sel2_ref, vf_ref, lg_ref):
    # x_ref:   (BB, T, Cin) bf16
    # w1_ref:  (K, Cin, Hp) bf16   w2_ref: (K, Hp, Hp) bf16   wfc_ref: (Hp, NCp) bf16
    # s*/c*/bfc: (1, Hp|NCp) f32 (fused BN scale / conv-bias+BN shift, fc bias)
    # sel1: (BB*L1p, BB*T - K) bf16   sel2: (BB*L2p, BB*L1p - K) bf16
    BB, T, _ = x_ref.shape
    Hp = w1_ref.shape[2]
    L2p = vf_ref.shape[1]

    # Stack the BB sequences along the sublane (time) axis -> one matmul per tap for
    # the whole block (cross-sequence rows are dropped by sel1 / sel2).
    if BB == 1:
        xs = x_ref[0]                                                   # (T, Cin)
    else:
        xs = jnp.concatenate([x_ref[bi] for bi in range(BB)], axis=0)   # (BB*T, Cin)

    def conv_bn_relu(h, w_ref, s, c):
        # K accumulating per-tap bf16 matmuls with f32 accumulation (no unfold slab).
        L = h.shape[0] - (K - 1)
        acc = jnp.zeros((L, Hp), jnp.float32)
        for k in range(K):
            acc = acc + jnp.dot(h[k:k + L, :], w_ref[k],
                                preferred_element_type=jnp.float32)
        return jnp.maximum(acc * s + c, 0.0)                            # (L, Hp) f32

    def maxpool2(h, sel):
        # Adjacent max, then stride-2 / boundary-skipping one-hot selection on the
        # MXU in bf16 (one-hot selection of a bf16 value is exact).
        L = h.shape[0]
        m = jnp.maximum(h[0:L - 1, :], h[1:L, :]).astype(jnp.bfloat16)
        return jnp.dot(sel, m, preferred_element_type=jnp.float32)

    # --- Conv1d(Cin->H, k=5, s=1, p=0) + BN(eval) + ReLU, MaxPool1d(2) ----------
    h1 = conv_bn_relu(xs, w1_ref, s1_ref[...], c1_ref[...])             # (BB*T-4, Hp)
    p1 = maxpool2(h1, sel1_ref[...]).astype(jnp.bfloat16)               # (BB*L1p, Hp)

    # --- Conv1d(H->H, k=5) + BN(eval) + ReLU, MaxPool1d(2) ----------------------
    h2 = conv_bn_relu(p1, w2_ref, s2_ref[...], c2_ref[...])             # (BB*L1p-4, Hp)
    vf = maxpool2(h2, sel2_ref[...])                                    # (BB*L2p, Hp)

    # --- fc: Linear(hidden_size -> num_classes) ---------------------------------
    lg = jnp.dot(vf.astype(jnp.bfloat16), wfc_ref[...],
                 preferred_element_type=jnp.float32) + bfc_ref[...]     # (BB*L2p, NCp)

    # Tiny static per-sequence stores only; all compute above is shared across BB.
    for bi in range(BB):
        vf_ref[bi] = vf[bi * L2p:(bi + 1) * L2p, :].astype(vf_ref.dtype)
        lg_ref[bi] = lg[bi * L2p:(bi + 1) * L2p, :].astype(lg_ref.dtype)


def init_params(key, input_size, hidden_size, num_classes, eps=1e-5):
    k1, k2, k3, k4, k5, k6 = jax.random.split(key, 6)
    w1 = jax.random.normal(k1, (K, input_size, hidden_size), jnp.float32) * 0.05
    b1 = jax.random.normal(k2, (hidden_size,), jnp.float32) * 0.05
    w2 = jax.random.normal(k3, (K, hidden_size, hidden_size), jnp.float32) * 0.05
    b2 = jax.random.normal(k4, (hidden_size,), jnp.float32) * 0.05
    wfc = jax.random.normal(k5, (hidden_size, num_classes), jnp.float32) * 0.05
    bfc = jax.random.normal(k6, (num_classes,), jnp.float32) * 0.05
    # BatchNorm1d (eval) default init: gamma=1, beta=0, running_mean=0, running_var=1.
    gamma = jnp.ones((hidden_size,), jnp.float32)
    beta = jnp.zeros((hidden_size,), jnp.float32)
    mean = jnp.zeros((hidden_size,), jnp.float32)
    var = jnp.ones((hidden_size,), jnp.float32)
    s = gamma / jnp.sqrt(var + eps)          # per-channel BN scale
    c1 = (b1 - mean) * s + beta              # conv bias fused into BN shift
    c2 = (b2 - mean) * s + beta
    return (w1, s.reshape(1, -1), c1.reshape(1, -1),
            w2, s.reshape(1, -1), c2.reshape(1, -1),
            wfc, bfc.reshape(1, -1))


def temporal_conv_forward(frame_feat, lgt, params, batch_block=1):
    """frame_feat: (B, C_in, T) as in the PyTorch module (NCL).  lgt: (B,) lengths."""
    B, Cin, T = frame_feat.shape
    w1, s1, c1, w2, s2, c2, wfc, bfc = params
    H = w1.shape[2]
    NC = wfc.shape[1]
    L1 = T - (K - 1)
    L1p = L1 // 2
    L2 = L1p - (K - 1)
    L2p = L2 // 2
    assert L2p >= 1, "sequence too short for ['K5','P2','K5','P2']"

    Hp = _round_up(H, LANE)
    NCp = _round_up(NC, LANE)

    BB = batch_block
    assert B % BB == 0, "batch_block must divide the batch size"
    nb = B // BB
    # NOTE: on v7x keep nb >= 2 so the "parallel" batch axis actually lands on both
    # TensorCores; batch_block only amortizes per-grid-step overhead.

    # NCL -> NLC in bf16 (single fused transpose+cast pass).  No channel padding is
    # needed: the per-tap matmuls contract over the raw Cin dimension.
    # TODO(synk): fuse this pass into the producer (or use allow_input_fusion) so the
    # activation is read from HBM exactly once.
    x = jnp.transpose(frame_feat, (0, 2, 1)).astype(jnp.bfloat16)

    # Hidden / class dims zero-padded to full 128-lane multiples; K taps kept as a
    # leading dim (per-tap matmuls).  Padding is zero so it contributes nothing.
    w1p = jnp.pad(w1, ((0, 0), (0, 0), (0, Hp - H))).astype(jnp.bfloat16)
    w2p = jnp.pad(w2, ((0, 0), (0, Hp - H), (0, Hp - H))).astype(jnp.bfloat16)
    wfcp = jnp.pad(wfc, ((0, Hp - H), (0, NCp - NC))).astype(jnp.bfloat16)
    s1p = jnp.pad(s1, ((0, 0), (0, Hp - H)))
    c1p = jnp.pad(c1, ((0, 0), (0, Hp - H)))
    s2p = jnp.pad(s2, ((0, 0), (0, Hp - H)))
    c2p = jnp.pad(c2, ((0, 0), (0, Hp - H)))
    bfcp = jnp.pad(bfc, ((0, 0), (0, NCp - NC)))

    # Grid-invariant pooling selection matrices (block-diagonal over the BB stack).
    sel1 = _pool_select(BB, T, L1p)
    sel2 = _pool_select(BB, L1p, L2p)

    # VMEM budget: single-buffered constants + double-buffered activation block +
    # double-buffered output blocks + in-kernel temporaries + headroom.
    const_bytes = (w1p.size + w2p.size + wfcp.size + sel1.size + sel2.size) * 2 \
        + (s1p.size + c1p.size + s2p.size + c2p.size + bfcp.size) * 4
    x_blk = BB * T * Cin * 2
    out_blk = BB * L2p * (Hp + NCp) * 4
    tmp_bytes = 6 * BB * T * Hp * 4
    vmem_limit = _vmem_limit_bytes(const_bytes + 2 * x_blk + 2 * out_blk
                                   + tmp_bytes + (4 << 20))

    def build(single_buffer_consts):
        pm = {"pipeline_mode": pl.Buffered(1)} if single_buffer_consts else {}

        def cspec(arr):   # grid-invariant operand: full-array block, single buffer
            nd = arr.ndim
            return pl.BlockSpec(arr.shape, lambda b: (0,) * nd, **pm)

        grid_spec = pltpu.PrefetchScalarGridSpec(
            num_scalar_prefetch=0,
            grid=(nb,),
            in_specs=[
                pl.BlockSpec((BB, T, Cin), lambda b: (b, 0, 0)),
                cspec(w1p), cspec(s1p), cspec(c1p),
                cspec(w2p), cspec(s2p), cspec(c2p),
                cspec(wfcp), cspec(bfcp),
                cspec(sel1), cspec(sel2),
            ],
            out_specs=[
                pl.BlockSpec((BB, L2p, Hp), lambda b: (b, 0, 0)),
                pl.BlockSpec((BB, L2p, NCp), lambda b: (b, 0, 0)),
            ],
        )
        return pl.pallas_call(
            _tconv_kernel,
            out_shape=(jax.ShapeDtypeStruct((B, L2p, Hp), jnp.float32),
                       jax.ShapeDtypeStruct((B, L2p, NCp), jnp.float32)),
            grid_spec=grid_spec,
            compiler_params=pltpu.CompilerParams(
                dimension_semantics=("parallel",),
                vmem_limit_bytes=vmem_limit),
        )

    args = (x, w1p, s1p, c1p, w2p, s2p, c2p, wfcp, bfcp, sel1, sel2)
    try:
        vf, lg = build(True)(*args)
    except Exception:
        # Fallback for jax builds without BlockSpec pipeline_mode support: identical
        # kernel, default (double-buffered) constants.
        vf, lg = build(False)(*args)

    # Slice off the lane padding (layout plumbing only).
    vf = vf[:, :, :H]
    lg = lg[:, :, :NC]

    # TODO(synk): nn.Dropout(p=0.3) is identity in eval mode; no stochastic dropout.
    # update_lgt for ['K5','P2','K5','P2']; torch.div defaults to true (float)
    # division, which is what the reference module computes (the actual pooled length
    # floors with ceil_mode=False -> mask downstream accordingly).
    feat_len = (((lgt.astype(jnp.float32) - 4.0) / 2.0) - 4.0) / 2.0

    return {
        # permute(2,0,1) of the (B, H, L') PyTorch tensor == (L', B, H) here
        'visual_feat': jnp.transpose(vf, (1, 0, 2)),
        'conv_logits': jnp.transpose(lg, (1, 0, 2)),
        'feat_len': feat_len,
    }


def _ref_forward(frame_feat, params):
    """Pure-JAX reference (same math: bf16 MXU operands, f32 accumulation)."""
    w1, s1, c1, w2, s2, c2, wfc, bfc = params
    x = jnp.transpose(frame_feat, (0, 2, 1)).astype(jnp.bfloat16)

    def conv_bn_relu(hb, w, s, c):
        kk = w.shape[0]
        L = hb.shape[1] - kk + 1
        wb = w.astype(jnp.bfloat16)
        acc = jnp.zeros((hb.shape[0], L, w.shape[2]), jnp.float32)
        for k in range(kk):
            acc = acc + jnp.einsum('btc,ch->bth', hb[:, k:k + L, :], wb[k],
                                   preferred_element_type=jnp.float32)
        return jnp.maximum(acc * s[None] + c[None], 0.0)

    def pool2(h):
        Lp = h.shape[1] // 2
        return jnp.maximum(h[:, 0:2 * Lp:2, :], h[:, 1:2 * Lp:2, :])

    h = pool2(conv_bn_relu(x, w1, s1, c1)).astype(jnp.bfloat16)
    h = pool2(conv_bn_relu(h, w2, s2, c2))
    lg = jnp.einsum('bth,hn->btn', h.astype(jnp.bfloat16), wfc.astype(jnp.bfloat16),
                    preferred_element_type=jnp.float32) + bfc[None]
    return jnp.transpose(h, (1, 0, 2)), jnp.transpose(lg, (1, 0, 2))


if __name__ == "__main__":
    key = jax.random.PRNGKey(0)
    kx, kp = jax.random.split(key)
    B, Cin, H, T, NC = 2, 16, 32, 24, 10   # input_size=16, hidden_size=32, num_classes=10

    frame_feat = jax.random.normal(kx, (B, Cin, T), dtype=jnp.float32)
    lgt = jnp.array([24, 20], dtype=jnp.int32)
    params = init_params(kp, Cin, H, NC)

    vf_ref, lg_ref = _ref_forward(frame_feat, params)

    # bb=1 keeps the grid length 2 (both v7x TensorCores busy); bb=2 exercises the
    # batch-stacked single-matmul-per-conv path.
    for bb in (1, 2):
        out = temporal_conv_forward(frame_feat, lgt, params, batch_block=bb)
        jax.block_until_ready(out)
        assert out['visual_feat'].shape == (3, B, H)
        assert out['conv_logits'].shape == (3, B, NC)
        assert jnp.allclose(out['visual_feat'], vf_ref, atol=1e-2, rtol=1e-2)
        assert jnp.allclose(out['conv_logits'], lg_ref, atol=1e-2, rtol=1e-2)

    print("KERNEL_OK")
</pallas_src>

<mosaic_0001>
module attributes {stable_mosaic.version = 11 : i64} {
  func.func @_tconv_kernel(%arg0: i32, %arg1: memref<1x24x16xbf16, #tpu.memory_space<vmem>>, %arg2: memref<5x16x128xbf16, #tpu.memory_space<vmem>>, %arg3: memref<1x128xf32, #tpu.memory_space<vmem>>, %arg4: memref<1x128xf32, #tpu.memory_space<vmem>>, %arg5: memref<5x128x128xbf16, #tpu.memory_space<vmem>>, %arg6: memref<1x128xf32, #tpu.memory_space<vmem>>, %arg7: memref<1x128xf32, #tpu.memory_space<vmem>>, %arg8: memref<128x128xbf16, #tpu.memory_space<vmem>>, %arg9: memref<1x128xf32, #tpu.memory_space<vmem>>, %arg10: memref<10x19xbf16, #tpu.memory_space<vmem>>, %arg11: memref<3x5xbf16, #tpu.memory_space<vmem>>, %arg12: memref<1x3x128xf32, #tpu.memory_space<vmem>>, %arg13: memref<1x3x128xf32, #tpu.memory_space<vmem>>) attributes {dimension_semantics = [#tpu.dimension_semantics<parallel>], iteration_bounds = array<i64: 2>, scalar_prefetch = 0 : i64, scratch_operands = 0 : i64, tpu.core_type = #tpu.core_type<tc>, window_params = [{transform_indices = @transform_0, window_bounds = array<i64: 1, 24, 16>}, {pipeline_mode = #tpu.pipeline_mode<synchronous>, transform_indices = @transform_1, window_bounds = array<i64: 5, 16, 128>}, {pipeline_mode = #tpu.pipeline_mode<synchronous>, transform_indices = @transform_2, window_bounds = array<i64: 1, 128>}, {pipeline_mode = #tpu.pipeline_mode<synchronous>, transform_indices = @transform_3, window_bounds = array<i64: 1, 128>}, {pipeline_mode = #tpu.pipeline_mode<synchronous>, transform_indices = @transform_4, window_bounds = array<i64: 5, 128, 128>}, {pipeline_mode = #tpu.pipeline_mode<synchronous>, transform_indices = @transform_5, window_bounds = array<i64: 1, 128>}, {pipeline_mode = #tpu.pipeline_mode<synchronous>, transform_indices = @transform_6, window_bounds = array<i64: 1, 128>}, {pipeline_mode = #tpu.pipeline_mode<synchronous>, transform_indices = @transform_7, window_bounds = array<i64: 128, 128>}, {pipeline_mode = #tpu.pipeline_mode<synchronous>, transform_indices = @transform_8, window_bounds = array<i64: 1, 128>}, {pipeline_mode = #tpu.pipeline_mode<synchronous>, transform_indices = @transform_9, window_bounds = array<i64: 10, 19>}, {pipeline_mode = #tpu.pipeline_mode<synchronous>, transform_indices = @transform_10, window_bounds = array<i64: 3, 5>}, {transform_indices = @transform_11, window_bounds = array<i64: 1, 3, 128>}, {transform_indices = @transform_12, window_bounds = array<i64: 1, 3, 128>}]} {
    %c0 = arith.constant 0 : index
    %c0_0 = arith.constant 0 : index
    %c0_1 = arith.constant 0 : index
    %0 = vector.load %arg1[%c0, %c0_0, %c0_1] : memref<1x24x16xbf16, #tpu.memory_space<vmem>>, vector<1x24x16xbf16>
    %1 = vector.shape_cast %0 : vector<1x24x16xbf16> to vector<24x16xbf16>
    %c0_2 = arith.constant 0 : index
    %c0_3 = arith.constant 0 : index
    %2 = vector.load %arg3[%c0_2, %c0_3] : memref<1x128xf32, #tpu.memory_space<vmem>>, vector<1x128xf32>
    %c0_4 = arith.constant 0 : index
    %c0_5 = arith.constant 0 : index
    %3 = vector.load %arg4[%c0_4, %c0_5] : memref<1x128xf32, #tpu.memory_space<vmem>>, vector<1x128xf32>
    %cst = arith.constant 0.000000e+00 : f32
    %4 = vector.broadcast %cst : f32 to vector<20x128xf32>
    %5 = vector.extract_strided_slice %1 {offsets = [0, 0], sizes = [20, 16], strides = [1, 1]} : vector<24x16xbf16> to vector<20x16xbf16>
    %c0_6 = arith.constant 0 : index
    %c0_7 = arith.constant 0 : index
    %c0_8 = arith.constant 0 : index
    %6 = vector.load %arg2[%c0_6, %c0_7, %c0_8] : memref<5x16x128xbf16, #tpu.memory_space<vmem>>, vector<1x16x128xbf16>
    %7 = vector.shape_cast %6 : vector<1x16x128xbf16> to vector<16x128xbf16>
    %cst_9 = arith.constant dense<0.000000e+00> : vector<20x128xf32>
    %8 = tpu.matmul %5, %7, %cst_9 {dimension_numbers = #tpu.dot_dimension_numbers<[1], [0], [0], [1], [0, 0, 1, 1], [], []>} : vector<20x16xbf16>, vector<16x128xbf16>, vector<20x128xf32> -> vector<20x128xf32>
    %9 = arith.addf %4, %8 : vector<20x128xf32>
    %10 = vector.extract_strided_slice %1 {offsets = [1, 0], sizes = [20, 16], strides = [1, 1]} : vector<24x16xbf16> to vector<20x16xbf16>
    %c1 = arith.constant 1 : index
    %c0_10 = arith.constant 0 : index
    %c0_11 = arith.constant 0 : index
    %11 = vector.load %arg2[%c1, %c0_10, %c0_11] : memref<5x16x128xbf16, #tpu.memory_space<vmem>>, vector<1x16x128xbf16>
    %12 = vector.shape_cast %11 : vector<1x16x128xbf16> to vector<16x128xbf16>
    %cst_12 = arith.constant dense<0.000000e+00> : vector<20x128xf32>
    %13 = tpu.matmul %10, %12, %cst_12 {dimension_numbers = #tpu.dot_dimension_numbers<[1], [0], [0], [1], [0, 0, 1, 1], [], []>} : vector<20x16xbf16>, vector<16x128xbf16>, vector<20x128xf32> -> vector<20x128xf32>
    %14 = arith.addf %9, %13 : vector<20x128xf32>
    %15 = vector.extract_strided_slice %1 {offsets = [2, 0], sizes = [20, 16], strides = [1, 1]} : vector<24x16xbf16> to vector<20x16xbf16>
    %c2 = arith.constant 2 : index
    %c0_13 = arith.constant 0 : index
    %c0_14 = arith.constant 0 : index
    %16 = vector.load %arg2[%c2, %c0_13, %c0_14] : memref<5x16x128xbf16, #tpu.memory_space<vmem>>, vector<1x16x128xbf16>
    %17 = vector.shape_cast %16 : vector<1x16x128xbf16> to vector<16x128xbf16>
    %cst_15 = arith.constant dense<0.000000e+00> : vector<20x128xf32>
    %18 = tpu.matmul %15, %17, %cst_15 {dimension_numbers = #tpu.dot_dimension_numbers<[1], [0], [0], [1], [0, 0, 1, 1], [], []>} : vector<20x16xbf16>, vector<16x128xbf16>, vector<20x128xf32> -> vector<20x128xf32>
    %19 = arith.addf %14, %18 : vector<20x128xf32>
    %20 = vector.extract_strided_slice %1 {offsets = [3, 0], sizes = [20, 16], strides = [1, 1]} : vector<24x16xbf16> to vector<20x16xbf16>
    %c3 = arith.constant 3 : index
    %c0_16 = arith.constant 0 : index
    %c0_17 = arith.constant 0 : index
    %21 = vector.load %arg2[%c3, %c0_16, %c0_17] : memref<5x16x128xbf16, #tpu.memory_space<vmem>>, vector<1x16x128xbf16>
    %22 = vector.shape_cast %21 : vector<1x16x128xbf16> to vector<16x128xbf16>
    %cst_18 = arith.constant dense<0.000000e+00> : vector<20x128xf32>
    %23 = tpu.matmul %20, %22, %cst_18 {dimension_numbers = #tpu.dot_dimension_numbers<[1], [0], [0], [1], [0, 0, 1, 1], [], []>} : vector<20x16xbf16>, vector<16x128xbf16>, vector<20x128xf32> -> vector<20x128xf32>
    %24 = arith.addf %19, %23 : vector<20x128xf32>
    %25 = vector.extract_strided_slice %1 {offsets = [4, 0], sizes = [20, 16], strides = [1, 1]} : vector<24x16xbf16> to vector<20x16xbf16>
    %c4 = arith.constant 4 : index
    %c0_19 = arith.constant 0 : index
    %c0_20 = arith.constant 0 : index
    %26 = vector.load %arg2[%c4, %c0_19, %c0_20] : memref<5x16x128xbf16, #tpu.memory_space<vmem>>, vector<1x16x128xbf16>
    %27 = vector.shape_cast %26 : vector<1x16x128xbf16> to vector<16x128xbf16>
    %cst_21 = arith.constant dense<0.000000e+00> : vector<20x128xf32>
    %28 = tpu.matmul %25, %27, %cst_21 {dimension_numbers = #tpu.dot_dimension_numbers<[1], [0], [0], [1], [0, 0, 1, 1], [], []>} : vector<20x16xbf16>, vector<16x128xbf16>, vector<20x128xf32> -> vector<20x128xf32>
    %29 = arith.addf %24, %28 : vector<20x128xf32>
    %30 = vector.broadcast %2 : vector<1x128xf32> to vector<20x128xf32>
    %31 = arith.mulf %29, %30 : vector<20x128xf32>
    %32 = vector.broadcast %3 : vector<1x128xf32> to vector<20x128xf32>
    %33 = arith.addf %31, %32 : vector<20x128xf32>
    %cst_22 = arith.constant 0.000000e+00 : f32
    %34 = vector.broadcast %cst_22 : f32 to vector<20x128xf32>
    %35 = arith.maximumf %33, %34 : vector<20x128xf32>
    %c0_23 = arith.constant 0 : index
    %c0_24 = arith.constant 0 : index
    %36 = vector.load %arg10[%c0_23, %c0_24] : memref<10x19xbf16, #tpu.memory_space<vmem>>, vector<10x19xbf16>
    %37 = vector.extract_strided_slice %35 {offsets = [0, 0], sizes = [19, 128], strides = [1, 1]} : vector<20x128xf32> to vector<19x128xf32>
    %38 = vector.extract_strided_slice %35 {offsets = [1, 0], sizes = [19, 128], strides = [1, 1]} : vector<20x128xf32> to vector<19x128xf32>
    %39 = arith.maximumf %37, %38 : vector<19x128xf32>
    %40 = arith.truncf %39 : vector<19x128xf32> to vector<19x128xbf16>
    %cst_25 = arith.constant dense<0.000000e+00> : vector<10x128xf32>
    %41 = tpu.matmul %36, %40, %cst_25 {dimension_numbers = #tpu.dot_dimension_numbers<[1], [0], [0], [1], [0, 0, 1, 1], [], []>} : vector<10x19xbf16>, vector<19x128xbf16>, vector<10x128xf32> -> vector<10x128xf32>
    %42 = arith.truncf %41 : vector<10x128xf32> to vector<10x128xbf16>
    %c0_26 = arith.constant 0 : index
    %c0_27 = arith.constant 0 : index
    %43 = vector.load %arg6[%c0_26, %c0_27] : memref<1x128xf32, #tpu.memory_space<vmem>>, vector<1x128xf32>
    %c0_28 = arith.constant 0 : index
    %c0_29 = arith.constant 0 : index
    %44 = vector.load %arg7[%c0_28, %c0_29] : memref<1x128xf32, #tpu.memory_space<vmem>>, vector<1x128xf32>
    %cst_30 = arith.constant 0.000000e+00 : f32
    %45 = vector.broadcast %cst_30 : f32 to vector<6x128xf32>
    %46 = vector.extract_strided_slice %42 {offsets = [0, 0], sizes = [6, 128], strides = [1, 1]} : vector<10x128xbf16> to vector<6x128xbf16>
    %c0_31 = arith.constant 0 : index
    %c0_32 = arith.constant 0 : index
    %c0_33 = arith.constant 0 : index
    %47 = vector.load %arg5[%c0_31, %c0_32, %c0_33] : memref<5x128x128xbf16, #tpu.memory_space<vmem>>, vector<1x128x128xbf16>
    %48 = vector.shape_cast %47 : vector<1x128x128xbf16> to vector<128x128xbf16>
    %cst_34 = arith.constant dense<0.000000e+00> : vector<6x128xf32>
    %49 = tpu.matmul %46, %48, %cst_34 {dimension_numbers = #tpu.dot_dimension_numbers<[1], [0], [0], [1], [0, 0, 1, 1], [], []>} : vector<6x128xbf16>, vector<128x128xbf16>, vector<6x128xf32> -> vector<6x128xf32>
    %50 = arith.addf %45, %49 : vector<6x128xf32>
    %51 = vector.extract_strided_slice %42 {offsets = [1, 0], sizes = [6, 128], strides = [1, 1]} : vector<10x128xbf16> to vector<6x128xbf16>
    %c1_35 = arith.constant 1 : index
    %c0_36 = arith.constant 0 : index
    %c0_37 = arith.constant 0 : index
    %52 = vector.load %arg5[%c1_35, %c0_36, %c0_37] : memref<5x128x128xbf16, #tpu.memory_space<vmem>>, vector<1x128x128xbf16>
    %53 = vector.shape_cast %52 : vector<1x128x128xbf16> to vector<128x128xbf16>
    %cst_38 = arith.constant dense<0.000000e+00> : vector<6x128xf32>
    %54 = tpu.matmul %51, %53, %cst_38 {dimension_numbers = #tpu.dot_dimension_numbers<[1], [0], [0], [1], [0, 0, 1, 1], [], []>} : vector<6x128xbf16>, vector<128x128xbf16>, vector<6x128xf32> -> vector<6x128xf32>
    %55 = arith.addf %50, %54 : vector<6x128xf32>
    %56 = vector.extract_strided_slice %42 {offsets = [2, 0], sizes = [6, 128], strides = [1, 1]} : vector<10x128xbf16> to vector<6x128xbf16>
    %c2_39 = arith.constant 2 : index
    %c0_40 = arith.constant 0 : index
    %c0_41 = arith.constant 0 : index
    %57 = vector.load %arg5[%c2_39, %c0_40, %c0_41] : memref<5x128x128xbf16, #tpu.memory_space<vmem>>, vector<1x128x128xbf16>
    %58 = vector.shape_cast %57 : vector<1x128x128xbf16> to vector<128x128xbf16>
    %cst_42 = arith.constant dense<0.000000e+00> : vector<6x128xf32>
    %59 = tpu.matmul %56, %58, %cst_42 {dimension_numbers = #tpu.dot_dimension_numbers<[1], [0], [0], [1], [0, 0, 1, 1], [], []>} : vector<6x128xbf16>, vector<128x128xbf16>, vector<6x128xf32> -> vector<6x128xf32>
    %60 = arith.addf %55, %59 : vector<6x128xf32>
    %61 = vector.extract_strided_slice %42 {offsets = [3, 0], sizes = [6, 128], strides = [1, 1]} : vector<10x128xbf16> to vector<6x128xbf16>
    %c3_43 = arith.constant 3 : index
    %c0_44 = arith.constant 0 : index
    %c0_45 = arith.constant 0 : index
    %62 = vector.load %arg5[%c3_43, %c0_44, %c0_45] : memref<5x128x128xbf16, #tpu.memory_space<vmem>>, vector<1x128x128xbf16>
    %63 = vector.shape_cast %62 : vector<1x128x128xbf16> to vector<128x128xbf16>
    %cst_46 = arith.constant dense<0.000000e+00> : vector<6x128xf32>
    %64 = tpu.matmul %61, %63, %cst_46 {dimension_numbers = #tpu.dot_dimension_numbers<[1], [0], [0], [1], [0, 0, 1, 1], [], []>} : vector<6x128xbf16>, vector<128x128xbf16>, vector<6x128xf32> -> vector<6x128xf32>
    %65 = arith.addf %60, %64 : vector<6x128xf32>
    %66 = vector.extract_strided_slice %42 {offsets = [4, 0], sizes = [6, 128], strides = [1, 1]} : vector<10x128xbf16> to vector<6x128xbf16>
    %c4_47 = arith.constant 4 : index
    %c0_48 = arith.constant 0 : index
    %c0_49 = arith.constant 0 : index
    %67 = vector.load %arg5[%c4_47, %c0_48, %c0_49] : memref<5x128x128xbf16, #tpu.memory_space<vmem>>, vector<1x128x128xbf16>
    %68 = vector.shape_cast %67 : vector<1x128x128xbf16> to vector<128x128xbf16>
    %cst_50 = arith.constant dense<0.000000e+00> : vector<6x128xf32>
    %69 = tpu.matmul %66, %68, %cst_50 {dimension_numbers = #tpu.dot_dimension_numbers<[1], [0], [0], [1], [0, 0, 1, 1], [], []>} : vector<6x128xbf16>, vector<128x128xbf16>, vector<6x128xf32> -> vector<6x128xf32>
    %70 = arith.addf %65, %69 : vector<6x128xf32>
    %71 = vector.broadcast %43 : vector<1x128xf32> to vector<6x128xf32>
    %72 = arith.mulf %70, %71 : vector<6x128xf32>
    %73 = vector.broadcast %44 : vector<1x128xf32> to vector<6x128xf32>
    %74 = arith.addf %72, %73 : vector<6x128xf32>
    %cst_51 = arith.constant 0.000000e+00 : f32
    %75 = vector.broadcast %cst_51 : f32 to vector<6x128xf32>
    %76 = arith.maximumf %74, %75 : vector<6x128xf32>
    %c0_52 = arith.constant 0 : index
    %c0_53 = arith.constant 0 : index
    %77 = vector.load %arg11[%c0_52, %c0_53] : memref<3x5xbf16, #tpu.memory_space<vmem>>, vector<3x5xbf16>
    %78 = vector.extract_strided_slice %76 {offsets = [0, 0], sizes = [5, 128], strides = [1, 1]} : vector<6x128xf32> to vector<5x128xf32>
    %79 = vector.extract_strided_slice %76 {offsets = [1, 0], sizes = [5, 128], strides = [1, 1]} : vector<6x128xf32> to vector<5x128xf32>
    %80 = arith.maximumf %78, %79 : vector<5x128xf32>
    %81 = arith.truncf %80 : vector<5x128xf32> to vector<5x128xbf16>
    %cst_54 = arith.constant dense<0.000000e+00> : vector<3x128xf32>
    %82 = tpu.matmul %77, %81, %cst_54 {dimension_numbers = #tpu.dot_dimension_numbers<[1], [0], [0], [1], [0, 0, 1, 1], [], []>} : vector<3x5xbf16>, vector<5x128xbf16>, vector<3x128xf32> -> vector<3x128xf32>
    %83 = arith.truncf %82 : vector<3x128xf32> to vector<3x128xbf16>
    %c0_55 = arith.constant 0 : index
    %c0_56 = arith.constant 0 : index
    %84 = vector.load %arg8[%c0_55, %c0_56] : memref<128x128xbf16, #tpu.memory_space<vmem>>, vector<128x128xbf16>
    %cst_57 = arith.constant dense<0.000000e+00> : vector<3x128xf32>
    %85 = tpu.matmul %83, %84, %cst_57 {dimension_numbers = #tpu.dot_dimension_numbers<[1], [0], [0], [1], [0, 0, 1, 1], [], []>} : vector<3x128xbf16>, vector<128x128xbf16>, vector<3x128xf32> -> vector<3x128xf32>
    %c0_58 = arith.constant 0 : index
    %c0_59 = arith.constant 0 : index
    %86 = vector.load %arg9[%c0_58, %c0_59] : memref<1x128xf32, #tpu.memory_space<vmem>>, vector<1x128xf32>
    %87 = vector.broadcast %86 : vector<1x128xf32> to vector<3x128xf32>
    %88 = arith.addf %85, %87 : vector<3x128xf32>
    %c0_60 = arith.constant 0 : index
    %c0_61 = arith.constant 0 : index
    %c0_62 = arith.constant 0 : index
    %89 = vector.load %arg12[%c0_60, %c0_61, %c0_62] : memref<1x3x128xf32, #tpu.memory_space<vmem>>, vector<1x3x128xf32>
    %90 = vector.shape_cast %89 : vector<1x3x128xf32> to vector<3x128xf32>
    %91 = vector.shape_cast %82 : vector<3x128xf32> to vector<1x3x128xf32>
    tpu.vector_store %arg12[%c0_60, %c0_61, %c0_62], %91 {strides = array<i32>} : memref<1x3x128xf32, #tpu.memory_space<vmem>>, vector<1x3x128xf32>,
    %c0_63 = arith.constant 0 : index
    %c0_64 = arith.constant 0 : index
    %c0_65 = arith.constant 0 : index
    %92 = vector.load %arg13[%c0_63, %c0_64, %c0_65] : memref<1x3x128xf32, #tpu.memory_space<vmem>>, vector<1x3x128xf32>
    %93 = vector.shape_cast %92 : vector<1x3x128xf32> to vector<3x128xf32>
    %94 = vector.shape_cast %88 : vector<3x128xf32> to vector<1x3x128xf32>
    tpu.vector_store %arg13[%c0_63, %c0_64, %c0_65], %94 {strides = array<i32>} : memref<1x3x128xf32, #tpu.memory_space<vmem>>, vector<1x3x128xf32>,
    return
  }
  func.func @transform_0(%arg0: i32) -> (i32, i32, i32) {
    %c0_i32 = arith.constant 0 : i32
    %c0_i32_0 = arith.constant 0 : i32
    %c0_i32_1 = arith.constant 0 : i32
    return %arg0, %c0_i32, %c0_i32_0 : i32, i32, i32
  }
  func.func @transform_1(%arg0: i32) -> (i32, i32, i32) {
    %c0_i32 = arith.constant 0 : i32
    %c0_i32_0 = arith.constant 0 : i32
    %c0_i32_1 = arith.constant 0 : i32
    %c0_i32_2 = arith.constant 0 : i32
    return %c0_i32, %c0_i32_0, %c0_i32_1 : i32, i32, i32
  }
  func.func @transform_2(%arg0: i32) -> (i32, i32) {
    %c0_i32 = arith.constant 0 : i32
    %c0_i32_0 = arith.constant 0 : i32
    %c0_i32_1 = arith.constant 0 : i32
    return %c0_i32, %c0_i32_0 : i32, i32
  }
  func.func @transform_3(%arg0: i32) -> (i32, i32) {
    %c0_i32 = arith.constant 0 : i32
    %c0_i32_0 = arith.constant 0 : i32
    %c0_i32_1 = arith.constant 0 : i32
    return %c0_i32, %c0_i32_0 : i32, i32
  }
  func.func @transform_4(%arg0: i32) -> (i32, i32, i32) {
    %c0_i32 = arith.constant 0 : i32
    %c0_i32_0 = arith.constant 0 : i32
    %c0_i32_1 = arith.constant 0 : i32
    %c0_i32_2 = arith.constant 0 : i32
    return %c0_i32, %c0_i32_0, %c0_i32_1 : i32, i32, i32
  }
  func.func @transform_5(%arg0: i32) -> (i32, i32) {
    %c0_i32 = arith.constant 0 : i32
    %c0_i32_0 = arith.constant 0 : i32
    %c0_i32_1 = arith.constant 0 : i32
    return %c0_i32, %c0_i32_0 : i32, i32
  }
  func.func @transform_6(%arg0: i32) -> (i32, i32) {
    %c0_i32 = arith.constant 0 : i32
    %c0_i32_0 = arith.constant 0 : i32
    %c0_i32_1 = arith.constant 0 : i32
    return %c0_i32, %c0_i32_0 : i32, i32
  }
  func.func @transform_7(%arg0: i32) -> (i32, i32) {
    %c0_i32 = arith.constant 0 : i32
    %c0_i32_0 = arith.constant 0 : i32
    %c0_i32_1 = arith.constant 0 : i32
    return %c0_i32, %c0_i32_0 : i32, i32
  }
  func.func @transform_8(%arg0: i32) -> (i32, i32) {
    %c0_i32 = arith.constant 0 : i32
    %c0_i32_0 = arith.constant 0 : i32
    %c0_i32_1 = arith.constant 0 : i32
    return %c0_i32, %c0_i32_0 : i32, i32
  }
  func.func @transform_9(%arg0: i32) -> (i32, i32) {
    %c0_i32 = arith.constant 0 : i32
    %c0_i32_0 = arith.constant 0 : i32
    %c0_i32_1 = arith.constant 0 : i32
    return %c0_i32, %c0_i32_0 : i32, i32
  }
  func.func @transform_10(%arg0: i32) -> (i32, i32) {
    %c0_i32 = arith.constant 0 : i32
    %c0_i32_0 = arith.constant 0 : i32
    %c0_i32_1 = arith.constant 0 : i32
    return %c0_i32, %c0_i32_0 : i32, i32
  }
  func.func @transform_11(%arg0: i32) -> (i32, i32, i32) {
    %c0_i32 = arith.constant 0 : i32
    %c0_i32_0 = arith.constant 0 : i32
    %c0_i32_1 = arith.constant 0 : i32
    return %arg0, %c0_i32, %c0_i32_0 : i32, i32, i32
  }
  func.func @transform_12(%arg0: i32) -> (i32, i32, i32) {
    %c0_i32 = arith.constant 0 : i32
    %c0_i32_0 = arith.constant 0 : i32
    %c0_i32_1 = arith.constant 0 : i32
    return %arg0, %c0_i32, %c0_i32_0 : i32, i32, i32
  }
}

module attributes {stable_mosaic.version = 11 : i64} {
  func.func @_tconv_kernel(%arg0: i32, %arg1: memref<1x24x16xbf16, #tpu.memory_space<vmem>>, %arg2: memref<5x16x128xbf16, #tpu.memory_space<vmem>>, %arg3: memref<1x128xf32, #tpu.memory_space<vmem>>, %arg4: memref<1x128xf32, #tpu.memory_space<vmem>>, %arg5: memref<5x128x128xbf16, #tpu.memory_space<vmem>>, %arg6: memref<1x128xf32, #tpu.memory_space<vmem>>, %arg7: memref<1x128xf32, #tpu.memory_space<vmem>>, %arg8: memref<128x128xbf16, #tpu.memory_space<vmem>>, %arg9: memref<1x128xf32, #tpu.memory_space<vmem>>, %arg10: memref<10x19xbf16, #tpu.memory_space<vmem>>, %arg11: memref<3x5xbf16, #tpu.memory_space<vmem>>, %arg12: memref<1x3x128xf32, #tpu.memory_space<vmem>>, %arg13: memref<1x3x128xf32, #tpu.memory_space<vmem>>) attributes {dimension_semantics = [#tpu.dimension_semantics<parallel>], iteration_bounds = array<i64: 2>, scalar_prefetch = 0 : i64, scratch_operands = 0 : i64, tpu.core_type = #tpu.core_type<tc>, window_params = [{transform_indices = @transform_0, window_bounds = array<i64: 1, 24, 16>}, {pipeline_mode = #tpu.pipeline_mode<synchronous>, transform_indices = @transform_1, window_bounds = array<i64: 5, 16, 128>}, {pipeline_mode = #tpu.pipeline_mode<synchronous>, transform_indices = @transform_2, window_bounds = array<i64: 1, 128>}, {pipeline_mode = #tpu.pipeline_mode<synchronous>, transform_indices = @transform_3, window_bounds = array<i64: 1, 128>}, {pipeline_mode = #tpu.pipeline_mode<synchronous>, transform_indices = @transform_4, window_bounds = array<i64: 5, 128, 128>}, {pipeline_mode = #tpu.pipeline_mode<synchronous>, transform_indices = @transform_5, window_bounds = array<i64: 1, 128>}, {pipeline_mode = #tpu.pipeline_mode<synchronous>, transform_indices = @transform_6, window_bounds = array<i64: 1, 128>}, {pipeline_mode = #tpu.pipeline_mode<synchronous>, transform_indices = @transform_7, window_bounds = array<i64: 128, 128>}, {pipeline_mode = #tpu.pipeline_mode<synchronous>, transform_indices = @transform_8, window_bounds = array<i64: 1, 128>}, {pipeline_mode = #tpu.pipeline_mode<synchronous>, transform_indices = @transform_9, window_bounds = array<i64: 10, 19>}, {pipeline_mode = #tpu.pipeline_mode<synchronous>, transform_indices = @transform_10, window_bounds = array<i64: 3, 5>}, {transform_indices = @transform_11, window_bounds = array<i64: 1, 3, 128>}, {transform_indices = @transform_12, window_bounds = array<i64: 1, 3, 128>}]} {
    %c0 = arith.constant 0 : index
    %c0_0 = arith.constant 0 : index
    %c0_1 = arith.constant 0 : index
    %0 = vector.load %arg1[%c0, %c0_0, %c0_1] : memref<1x24x16xbf16, #tpu.memory_space<vmem>>, vector<1x24x16xbf16>
    %1 = vector.shape_cast %0 : vector<1x24x16xbf16> to vector<24x16xbf16>
    %c0_2 = arith.constant 0 : index
    %c0_3 = arith.constant 0 : index
    %2 = vector.load %arg3[%c0_2, %c0_3] : memref<1x128xf32, #tpu.memory_space<vmem>>, vector<1x128xf32>
    %c0_4 = arith.constant 0 : index
    %c0_5 = arith.constant 0 : index
    %3 = vector.load %arg4[%c0_4, %c0_5] : memref<1x128xf32, #tpu.memory_space<vmem>>, vector<1x128xf32>
    %cst = arith.constant 0.000000e+00 : f32
    %4 = vector.broadcast %cst : f32 to vector<20x128xf32>
    %5 = vector.extract_strided_slice %1 {offsets = [0, 0], sizes = [20, 16], strides = [1, 1]} : vector<24x16xbf16> to vector<20x16xbf16>
    %c0_6 = arith.constant 0 : index
    %c0_7 = arith.constant 0 : index
    %c0_8 = arith.constant 0 : index
    %6 = vector.load %arg2[%c0_6, %c0_7, %c0_8] : memref<5x16x128xbf16, #tpu.memory_space<vmem>>, vector<1x16x128xbf16>
    %7 = vector.shape_cast %6 : vector<1x16x128xbf16> to vector<16x128xbf16>
    %cst_9 = arith.constant dense<0.000000e+00> : vector<20x128xf32>
    %8 = tpu.matmul %5, %7, %cst_9 {dimension_numbers = #tpu.dot_dimension_numbers<[1], [0], [0], [1], [0, 0, 1, 1], [], []>} : vector<20x16xbf16>, vector<16x128xbf16>, vector<20x128xf32> -> vector<20x128xf32>
    %9 = arith.addf %4, %8 : vector<20x128xf32>
    %10 = vector.extract_strided_slice %1 {offsets = [1, 0], sizes = [20, 16], strides = [1, 1]} : vector<24x16xbf16> to vector<20x16xbf16>
    %c1 = arith.constant 1 : index
    %c0_10 = arith.constant 0 : index
    %c0_11 = arith.constant 0 : index
    %11 = vector.load %arg2[%c1, %c0_10, %c0_11] : memref<5x16x128xbf16, #tpu.memory_space<vmem>>, vector<1x16x128xbf16>
    %12 = vector.shape_cast %11 : vector<1x16x128xbf16> to vector<16x128xbf16>
    %cst_12 = arith.constant dense<0.000000e+00> : vector<20x128xf32>
    %13 = tpu.matmul %10, %12, %cst_12 {dimension_numbers = #tpu.dot_dimension_numbers<[1], [0], [0], [1], [0, 0, 1, 1], [], []>} : vector<20x16xbf16>, vector<16x128xbf16>, vector<20x128xf32> -> vector<20x128xf32>
    %14 = arith.addf %9, %13 : vector<20x128xf32>
    %15 = vector.extract_strided_slice %1 {offsets = [2, 0], sizes = [20, 16], strides = [1, 1]} : vector<24x16xbf16> to vector<20x16xbf16>
    %c2 = arith.constant 2 : index
    %c0_13 = arith.constant 0 : index
    %c0_14 = arith.constant 0 : index
    %16 = vector.load %arg2[%c2, %c0_13, %c0_14] : memref<5x16x128xbf16, #tpu.memory_space<vmem>>, vector<1x16x128xbf16>
    %17 = vector.shape_cast %16 : vector<1x16x128xbf16> to vector<16x128xbf16>
    %cst_15 = arith.constant dense<0.000000e+00> : vector<20x128xf32>
    %18 = tpu.matmul %15, %17, %cst_15 {dimension_numbers = #tpu.dot_dimension_numbers<[1], [0], [0], [1], [0, 0, 1, 1], [], []>} : vector<20x16xbf16>, vector<16x128xbf16>, vector<20x128xf32> -> vector<20x128xf32>
    %19 = arith.addf %14, %18 : vector<20x128xf32>
    %20 = vector.extract_strided_slice %1 {offsets = [3, 0], sizes = [20, 16], strides = [1, 1]} : vector<24x16xbf16> to vector<20x16xbf16>
    %c3 = arith.constant 3 : index
    %c0_16 = arith.constant 0 : index
    %c0_17 = arith.constant 0 : index
    %21 = vector.load %arg2[%c3, %c0_16, %c0_17] : memref<5x16x128xbf16, #tpu.memory_space<vmem>>, vector<1x16x128xbf16>
    %22 = vector.shape_cast %21 : vector<1x16x128xbf16> to vector<16x128xbf16>
    %cst_18 = arith.constant dense<0.000000e+00> : vector<20x128xf32>
    %23 = tpu.matmul %20, %22, %cst_18 {dimension_numbers = #tpu.dot_dimension_numbers<[1], [0], [0], [1], [0, 0, 1, 1], [], []>} : vector<20x16xbf16>, vector<16x128xbf16>, vector<20x128xf32> -> vector<20x128xf32>
    %24 = arith.addf %19, %23 : vector<20x128xf32>
    %25 = vector.extract_strided_slice %1 {offsets = [4, 0], sizes = [20, 16], strides = [1, 1]} : vector<24x16xbf16> to vector<20x16xbf16>
    %c4 = arith.constant 4 : index
    %c0_19 = arith.constant 0 : index
    %c0_20 = arith.constant 0 : index
    %26 = vector.load %arg2[%c4, %c0_19, %c0_20] : memref<5x16x128xbf16, #tpu.memory_space<vmem>>, vector<1x16x128xbf16>
    %27 = vector.shape_cast %26 : vector<1x16x128xbf16> to vector<16x128xbf16>
    %cst_21 = arith.constant dense<0.000000e+00> : vector<20x128xf32>
    %28 = tpu.matmul %25, %27, %cst_21 {dimension_numbers = #tpu.dot_dimension_numbers<[1], [0], [0], [1], [0, 0, 1, 1], [], []>} : vector<20x16xbf16>, vector<16x128xbf16>, vector<20x128xf32> -> vector<20x128xf32>
    %29 = arith.addf %24, %28 : vector<20x128xf32>
    %30 = vector.broadcast %2 : vector<1x128xf32> to vector<20x128xf32>
    %31 = arith.mulf %29, %30 : vector<20x128xf32>
    %32 = vector.broadcast %3 : vector<1x128xf32> to vector<20x128xf32>
    %33 = arith.addf %31, %32 : vector<20x128xf32>
    %cst_22 = arith.constant 0.000000e+00 : f32
    %34 = vector.broadcast %cst_22 : f32 to vector<20x128xf32>
    %35 = arith.maximumf %33, %34 : vector<20x128xf32>
    %c0_23 = arith.constant 0 : index
    %c0_24 = arith.constant 0 : index
    %36 = vector.load %arg10[%c0_23, %c0_24] : memref<10x19xbf16, #tpu.memory_space<vmem>>, vector<10x19xbf16>
    %37 = vector.extract_strided_slice %35 {offsets = [0, 0], sizes = [19, 128], strides = [1, 1]} : vector<20x128xf32> to vector<19x128xf32>
    %38 = vector.extract_strided_slice %35 {offsets = [1, 0], sizes = [19, 128], strides = [1, 1]} : vector<20x128xf32> to vector<19x128xf32>
    %39 = arith.maximumf %37, %38 : vector<19x128xf32>
    %40 = arith.truncf %39 : vector<19x128xf32> to vector<19x128xbf16>
    %cst_25 = arith.constant dense<0.000000e+00> : vector<10x128xf32>
    %41 = tpu.matmul %36, %40, %cst_25 {dimension_numbers = #tpu.dot_dimension_numbers<[1], [0], [0], [1], [0, 0, 1, 1], [], []>} : vector<10x19xbf16>, vector<19x128xbf16>, vector<10x128xf32> -> vector<10x128xf32>
    %42 = arith.truncf %41 : vector<10x128xf32> to vector<10x128xbf16>
    %c0_26 = arith.constant 0 : index
    %c0_27 = arith.constant 0 : index
    %43 = vector.load %arg6[%c0_26, %c0_27] : memref<1x128xf32, #tpu.memory_space<vmem>>, vector<1x128xf32>
    %c0_28 = arith.constant 0 : index
    %c0_29 = arith.constant 0 : index
    %44 = vector.load %arg7[%c0_28, %c0_29] : memref<1x128xf32, #tpu.memory_space<vmem>>, vector<1x128xf32>
    %cst_30 = arith.constant 0.000000e+00 : f32
    %45 = vector.broadcast %cst_30 : f32 to vector<6x128xf32>
    %46 = vector.extract_strided_slice %42 {offsets = [0, 0], sizes = [6, 128], strides = [1, 1]} : vector<10x128xbf16> to vector<6x128xbf16>
    %c0_31 = arith.constant 0 : index
    %c0_32 = arith.constant 0 : index
    %c0_33 = arith.constant 0 : index
    %47 = vector.load %arg5[%c0_31, %c0_32, %c0_33] : memref<5x128x128xbf16, #tpu.memory_space<vmem>>, vector<1x128x128xbf16>
    %48 = vector.shape_cast %47 : vector<1x128x128xbf16> to vector<128x128xbf16>
    %cst_34 = arith.constant dense<0.000000e+00> : vector<6x128xf32>
    %49 = tpu.matmul %46, %48, %cst_34 {dimension_numbers = #tpu.dot_dimension_numbers<[1], [0], [0], [1], [0, 0, 1, 1], [], []>} : vector<6x128xbf16>, vector<128x128xbf16>, vector<6x128xf32> -> vector<6x128xf32>
    %50 = arith.addf %45, %49 : vector<6x128xf32>
    %51 = vector.extract_strided_slice %42 {offsets = [1, 0], sizes = [6, 128], strides = [1, 1]} : vector<10x128xbf16> to vector<6x128xbf16>
    %c1_35 = arith.constant 1 : index
    %c0_36 = arith.constant 0 : index
    %c0_37 = arith.constant 0 : index
    %52 = vector.load %arg5[%c1_35, %c0_36, %c0_37] : memref<5x128x128xbf16, #tpu.memory_space<vmem>>, vector<1x128x128xbf16>
    %53 = vector.shape_cast %52 : vector<1x128x128xbf16> to vector<128x128xbf16>
    %cst_38 = arith.constant dense<0.000000e+00> : vector<6x128xf32>
    %54 = tpu.matmul %51, %53, %cst_38 {dimension_numbers = #tpu.dot_dimension_numbers<[1], [0], [0], [1], [0, 0, 1, 1], [], []>} : vector<6x128xbf16>, vector<128x128xbf16>, vector<6x128xf32> -> vector<6x128xf32>
    %55 = arith.addf %50, %54 : vector<6x128xf32>
    %56 = vector.extract_strided_slice %42 {offsets = [2, 0], sizes = [6, 128], strides = [1, 1]} : vector<10x128xbf16> to vector<6x128xbf16>
    %c2_39 = arith.constant 2 : index
    %c0_40 = arith.constant 0 : index
    %c0_41 = arith.constant 0 : index
    %57 = vector.load %arg5[%c2_39, %c0_40, %c0_41] : memref<5x128x128xbf16, #tpu.memory_space<vmem>>, vector<1x128x128xbf16>
    %58 = vector.shape_cast %57 : vector<1x128x128xbf16> to vector<128x128xbf16>
    %cst_42 = arith.constant dense<0.000000e+00> : vector<6x128xf32>
    %59 = tpu.matmul %56, %58, %cst_42 {dimension_numbers = #tpu.dot_dimension_numbers<[1], [0], [0], [1], [0, 0, 1, 1], [], []>} : vector<6x128xbf16>, vector<128x128xbf16>, vector<6x128xf32> -> vector<6x128xf32>
    %60 = arith.addf %55, %59 : vector<6x128xf32>
    %61 = vector.extract_strided_slice %42 {offsets = [3, 0], sizes = [6, 128], strides = [1, 1]} : vector<10x128xbf16> to vector<6x128xbf16>
    %c3_43 = arith.constant 3 : index
    %c0_44 = arith.constant 0 : index
    %c0_45 = arith.constant 0 : index
    %62 = vector.load %arg5[%c3_43, %c0_44, %c0_45] : memref<5x128x128xbf16, #tpu.memory_space<vmem>>, vector<1x128x128xbf16>
    %63 = vector.shape_cast %62 : vector<1x128x128xbf16> to vector<128x128xbf16>
    %cst_46 = arith.constant dense<0.000000e+00> : vector<6x128xf32>
    %64 = tpu.matmul %61, %63, %cst_46 {dimension_numbers = #tpu.dot_dimension_numbers<[1], [0], [0], [1], [0, 0, 1, 1], [], []>} : vector<6x128xbf16>, vector<128x128xbf16>, vector<6x128xf32> -> vector<6x128xf32>
    %65 = arith.addf %60, %64 : vector<6x128xf32>
    %66 = vector.extract_strided_slice %42 {offsets = [4, 0], sizes = [6, 128], strides = [1, 1]} : vector<10x128xbf16> to vector<6x128xbf16>
    %c4_47 = arith.constant 4 : index
    %c0_48 = arith.constant 0 : index
    %c0_49 = arith.constant 0 : index
    %67 = vector.load %arg5[%c4_47, %c0_48, %c0_49] : memref<5x128x128xbf16, #tpu.memory_space<vmem>>, vector<1x128x128xbf16>
    %68 = vector.shape_cast %67 : vector<1x128x128xbf16> to vector<128x128xbf16>
    %cst_50 = arith.constant dense<0.000000e+00> : vector<6x128xf32>
    %69 = tpu.matmul %66, %68, %cst_50 {dimension_numbers = #tpu.dot_dimension_numbers<[1], [0], [0], [1], [0, 0, 1, 1], [], []>} : vector<6x128xbf16>, vector<128x128xbf16>, vector<6x128xf32> -> vector<6x128xf32>
    %70 = arith.addf %65, %69 : vector<6x128xf32>
    %71 = vector.broadcast %43 : vector<1x128xf32> to vector<6x128xf32>
    %72 = arith.mulf %70, %71 : vector<6x128xf32>
    %73 = vector.broadcast %44 : vector<1x128xf32> to vector<6x128xf32>
    %74 = arith.addf %72, %73 : vector<6x128xf32>
    %cst_51 = arith.constant 0.000000e+00 : f32
    %75 = vector.broadcast %cst_51 : f32 to vector<6x128xf32>
    %76 = arith.maximumf %74, %75 : vector<6x128xf32>
    %c0_52 = arith.constant 0 : index
    %c0_53 = arith.constant 0 : index
    %77 = vector.load %arg11[%c0_52, %c0_53] : memref<3x5xbf16, #tpu.memory_space<vmem>>, vector<3x5xbf16>
    %78 = vector.extract_strided_slice %76 {offsets = [0, 0], sizes = [5, 128], strides = [1, 1]} : vector<6x128xf32> to vector<5x128xf32>
    %79 = vector.extract_strided_slice %76 {offsets = [1, 0], sizes = [5, 128], strides = [1, 1]} : vector<6x128xf32> to vector<5x128xf32>
    %80 = arith.maximumf %78, %79 : vector<5x128xf32>
    %81 = arith.truncf %80 : vector<5x128xf32> to vector<5x128xbf16>
    %cst_54 = arith.constant dense<0.000000e+00> : vector<3x128xf32>
    %82 = tpu.matmul %77, %81, %cst_54 {dimension_numbers = #tpu.dot_dimension_numbers<[1], [0], [0], [1], [0, 0, 1, 1], [], []>} : vector<3x5xbf16>, vector<5x128xbf16>, vector<3x128xf32> -> vector<3x128xf32>
    %83 = arith.truncf %82 : vector<3x128xf32> to vector<3x128xbf16>
    %c0_55 = arith.constant 0 : index
    %c0_56 = arith.constant 0 : index
    %84 = vector.load %arg8[%c0_55, %c0_56] : memref<128x128xbf16, #tpu.memory_space<vmem>>, vector<128x128xbf16>
    %cst_57 = arith.constant dense<0.000000e+00> : vector<3x128xf32>
    %85 = tpu.matmul %83, %84, %cst_57 {dimension_numbers = #tpu.dot_dimension_numbers<[1], [0], [0], [1], [0, 0, 1, 1], [], []>} : vector<3x128xbf16>, vector<128x128xbf16>, vector<3x128xf32> -> vector<3x128xf32>
    %c0_58 = arith.constant 0 : index
    %c0_59 = arith.constant 0 : index
    %86 = vector.load %arg9[%c0_58, %c0_59] : memref<1x128xf32, #tpu.memory_space<vmem>>, vector<1x128xf32>
    %87 = vector.broadcast %86 : vector<1x128xf32> to vector<3x128xf32>
    %88 = arith.addf %85, %87 : vector<3x128xf32>
    %c0_60 = arith.constant 0 : index
    %c0_61 = arith.constant 0 : index
    %c0_62 = arith.constant 0 : index
    %89 = vector.load %arg12[%c0_60, %c0_61, %c0_62] : memref<1x3x128xf32, #tpu.memory_space<vmem>>, vector<1x3x128xf32>
    %90 = vector.shape_cast %89 : vector<1x3x128xf32> to vector<3x128xf32>
    %91 = vector.shape_cast %82 : vector<3x128xf32> to vector<1x3x128xf32>
    tpu.vector_store %arg12[%c0_60, %c0_61, %c0_62], %91 {strides = array<i32>} : memref<1x3x128xf32, #tpu.memory_space<vmem>>, vector<1x3x128xf32>,
    %c0_63 = arith.constant 0 : index
    %c0_64 = arith.constant 0 : index
    %c0_65 = arith.constant 0 : index
    %92 = vector.load %arg13[%c0_63, %c0_64, %c0_65] : memref<1x3x128xf32, #tpu.memory_space<vmem>>, vector<1x3x128xf32>
    %93 = vector.shape_cast %92 : vector<1x3x128xf32> to vector<3x128xf32>
    %94 = vector.shape_cast %88 : vector<3x128xf32> to vector<1x3x128xf32>
    tpu.vector_store %arg13[%c0_63, %c0_64, %c0_65], %94 {strides = array<i32>} : memref<1x3x128xf32, #tpu.memory_space<vmem>>, vector<1x3x128xf32>,
    return
  }
  func.func @transform_0(%arg0: i32) -> (i32, i32, i32) {
    %c0_i32 = arith.constant 0 : i32
    %c0_i32_0 = arith.constant 0 : i32
    %c0_i32_1 = arith.constant 0 : i32
    return %arg0, %c0_i32, %c0_i32_0 : i32, i32, i32
  }
  func.func @transform_1(%arg0: i32) -> (i32, i32, i32) {
    %c0_i32 = arith.constant 0 : i32
    %c0_i32_0 = arith.constant 0 : i32
    %c0_i32_1 = arith.constant 0 : i32
    %c0_i32_2 = arith.constant 0 : i32
    return %c0_i32, %c0_i32_0, %c0_i32_1 : i32, i32, i32
  }
  func.func @transform_2(%arg0: i32) -> (i32, i32) {
    %c0_i32 = arith.constant 0 : i32
    %c0_i32_0 = arith.constant 0 : i32
    %c0_i32_1 = arith.constant 0 : i32
    return %c0_i32, %c0_i32_0 : i32, i32
  }
  func.func @transform_3(%arg0: i32) -> (i32, i32) {
    %c0_i32 = arith.constant 0 : i32
    %c0_i32_0 = arith.constant 0 : i32
    %c0_i32_1 = arith.constant 0 : i32
    return %c0_i32, %c0_i32_0 : i32, i32
  }
  func.func @transform_4(%arg0: i32) -> (i32, i32, i32) {
    %c0_i32 = arith.constant 0 : i32
    %c0_i32_0 = arith.constant 0 : i32
    %c0_i32_1 = arith.constant 0 : i32
    %c0_i32_2 = arith.constant 0 : i32
    return %c0_i32, %c0_i32_0, %c0_i32_1 : i32, i32, i32
  }
  func.func @transform_5(%arg0: i32) -> (i32, i32) {
    %c0_i32 = arith.constant 0 : i32
    %c0_i32_0 = arith.constant 0 : i32
    %c0_i32_1 = arith.constant 0 : i32
    return %c0_i32, %c0_i32_0 : i32, i32
  }
  func.func @transform_6(%arg0: i32) -> (i32, i32) {
    %c0_i32 = arith.constant 0 : i32
    %c0_i32_0 = arith.constant 0 : i32
    %c0_i32_1 = arith.constant 0 : i32
    return %c0_i32, %c0_i32_0 : i32, i32
  }
  func.func @transform_7(%arg0: i32) -> (i32, i32) {
    %c0_i32 = arith.constant 0 : i32
    %c0_i32_0 = arith.constant 0 : i32
    %c0_i32_1 = arith.constant 0 : i32
    return %c0_i32, %c0_i32_0 : i32, i32
  }
  func.func @transform_8(%arg0: i32) -> (i32, i32) {
    %c0_i32 = arith.constant 0 : i32
    %c0_i32_0 = arith.constant 0 : i32
    %c0_i32_1 = arith.constant 0 : i32
    return %c0_i32, %c0_i32_0 : i32, i32
  }
  func.func @transform_9(%arg0: i32) -> (i32, i32) {
    %c0_i32 = arith.constant 0 : i32
    %c0_i32_0 = arith.constant 0 : i32
    %c0_i32_1 = arith.constant 0 : i32
    return %c0_i32, %c0_i32_0 : i32, i32
  }
  func.func @transform_10(%arg0: i32) -> (i32, i32) {
    %c0_i32 = arith.constant 0 : i32
    %c0_i32_0 = arith.constant 0 : i32
    %c0_i32_1 = arith.constant 0 : i32
    return %c0_i32, %c0_i32_0 : i32, i32
  }
  func.func @transform_11(%arg0: i32) -> (i32, i32, i32) {
    %c0_i32 = arith.constant 0 : i32
    %c0_i32_0 = arith.constant 0 : i32
    %c0_i32_1 = arith.constant 0 : i32
    return %arg0, %c0_i32, %c0_i32_0 : i32, i32, i32
  }
  func.func @transform_12(%arg0: i32) -> (i32, i32, i32) {
    %c0_i32 = arith.constant 0 : i32
    %c0_i32_0 = arith.constant 0 : i32
    %c0_i32_1 = arith.constant 0 : i32
    return %arg0, %c0_i32, %c0_i32_0 : i32, i32, i32
  }
}

</mosaic_0001>

<llo_original>
// kernel: tpu_custom_call.1
$region0: #{tpu_custom_call.1}
  #allocation0 [shape = 'u32[]', space=smem, size = 0x4, offset = 0x4, fixed_abs, tag = 'smem constant byte address 0x4 - core index']
  #allocation1 [shape = 'u32[72,128]{1,0:T(1,128)}', space=vmem, size = 0x9000, scoped, tag = 'internal scratch']
  %s0 = inlined_call_operand.vmem [shape: bf16[2,24,16], index: 0, kind: input, shape index: {}]
  %s1 = inlined_call_operand.vmem [shape: bf16[5,16,128], index: 1, kind: input, shape index: {}]
  %s2 = inlined_call_operand.hbm [shape: f32[1,128], index: 2, kind: input, shape index: {}]
  %s3 = inlined_call_operand.hbm [shape: f32[1,128], index: 3, kind: input, shape index: {}]
  %s4 = inlined_call_operand.hbm [shape: bf16[5,128,128], index: 4, kind: input, shape index: {}]
  %s5 = inlined_call_operand.hbm [shape: f32[1,128], index: 5, kind: input, shape index: {}]
  %s6 = inlined_call_operand.hbm [shape: f32[1,128], index: 6, kind: input, shape index: {}]
  %s7 = inlined_call_operand.hbm [shape: bf16[128,128], index: 7, kind: input, shape index: {}]
  %s8 = inlined_call_operand.hbm [shape: f32[1,128], index: 8, kind: input, shape index: {}]
  %s9 = inlined_call_operand.vmem [shape: bf16[10,19], index: 9, kind: input, shape index: {}]
  %s10 = inlined_call_operand.hbm [shape: bf16[3,5], index: 10, kind: input, shape index: {}]
  %s11 = inlined_call_operand.vmem [shape: f32[2,3,128], index: 11, kind: output, shape index: {0}]
  %s12 = inlined_call_operand.vmem [shape: f32[2,3,128], index: 12, kind: output, shape index: {1}]
  %13 = xla_tuple %s11, %s12
  %s14 = sld [smem:[#allocation0]]
  $region117: #{tpu_custom_call.1} parent=0
    _
  %s16 = ssub.s32 1, %s14
  %s17 = scalar_select 0, %s16, %s14
  $region1: #{tpu_custom_call.1} parent=0
    #allocation2 [shape = 'u8[512]{0}', space=vmem, size = 0x400, scoped, tag = 'input window, operand 2, single buffered']
    #allocation3 [shape = 's32[2]{0}', space=sflag, size = 0x8, scoped, tag = 'scoped memory for tpu_custom_call.1']
    #allocation4 [shape = 'u8[512]{0}', space=vmem, size = 0x400, scoped, tag = 'input window, operand 3, single buffered']
    #allocation5 [shape = 's32[1]{0}', space=sflag, size = 0x4, scoped, tag = 'scoped memory for tpu_custom_call.1']
    #allocation6 [shape = 'u8[163840]{0}', space=vmem, size = 0x28000, scoped, tag = 'input window, operand 4, single buffered']
    #allocation7 [shape = 'u8[512]{0}', space=vmem, size = 0x400, scoped, tag = 'input window, operand 5, single buffered']
    #allocation8 [shape = 's32[1]{0}', space=sflag, size = 0x4, scoped, tag = 'scoped memory for tpu_custom_call.1']
    #allocation9 [shape = 'u8[512]{0}', space=vmem, size = 0x400, scoped, tag = 'input window, operand 6, single buffered']
    #allocation10 [shape = 'u8[32768]{0}', space=vmem, size = 0x8000, scoped, tag = 'input window, operand 7, single buffered']
    #allocation11 [shape = 's32[1]{0}', space=sflag, size = 0x4, scoped, tag = 'scoped memory for tpu_custom_call.1']
    #allocation12 [shape = 'u8[512]{0}', space=vmem, size = 0x400, scoped, tag = 'input window, operand 8, single buffered']
    #allocation13 [shape = 'u8[1024]{0}', space=vmem, size = 0x400, scoped, tag = 'input window, operand 10, single buffered']
    #allocation14 [shape = 's32[1]{0}', space=sflag, size = 0x4, scoped, tag = 'scoped memory for tpu_custom_call.1']
    %18 = vsyncpa [#allocation3], 0
    %19 = vsyncpa [#allocation5], 0
    %20 = vsyncpa [#allocation8], 0
    %21 = vsyncpa [#allocation11], 0
    %22 = vsyncpa [#allocation14], 0
    loop: start=0, step=1, limit=4
    $region2: #{tpu_custom_call.1} parent=1 // loop_pre_header
      _
    $region3: #{tpu_custom_call.1} parent=1 // loop_header
      %s24 = sphi 0, %s28
      %p25 = scmp.ge.s32.totalorder %s24, 4
      %s34 = sphi 0, %s36
      %s37 = sphi 0, %s34
      %s38 = sphi 0, %s37
      %s54 = sphi 0, %s38
      %s58 = sphi 0, %s58
      %s60 = sphi 0, %s58
      %s61 = sphi 0, %s60
      %s75 = sphi 0, %s61
      %s79 = sphi 0, %s79
      %s81 = sphi 0, %s79
      %s82 = sphi 0, %s81
      %s96 = sphi 0, %s82
      %s100 = sphi 0, %s100
      %s102 = sphi 0, %s100
      %s103 = sphi 0, %s102
      %s117 = sphi 0, %s103
      %s121 = sphi 0, %s121
      %s123 = sphi 0, %s121
      %s124 = sphi 0, %s123
      %s138 = sphi 0, %s124
      %s142 = sphi 0, %s142
      %s144 = sphi 0, %s142
      %s145 = sphi 0, %s144
      %s159 = sphi 0, %s145
      %s163 = sphi 0, %s163
      %s165 = sphi 0, %s163
      %s166 = sphi 0, %s165
      %s180 = sphi 0, %s166
      %s184 = sphi 0, %s184
      %s186 = sphi 0, %s184
      %s187 = sphi 0, %s186
      %s201 = sphi 0, %s187
      %s205 = sphi 0, %s205
      %s207 = sphi 0, %s205
      %s208 = sphi 0, %s207
      %s222 = sphi 0, %s208
      %s226 = sphi 0, %s226
      %s228 = sphi 0, %s226
      %s229 = sphi 0, %s228
      %s243 = sphi 0, %s229
      %s247 = sphi 0, %s247
      %s249 = sphi 0, %s247
      %s250 = sphi 0, %s249
      %s264 = sphi 0, %s250
      %s270 = sphi 0, %s272
      %s273 = sphi 0, %s270
      %s274 = sphi 0, %s273
      %s290 = sphi 0, %s274
      %s296 = sphi 0, %s298
      %s299 = sphi 0, %s296
      %s300 = sphi 0, %s299
      %s316 = sphi 0, %s300
    $region4: #{tpu_custom_call.1} parent=1 // loop_header_branch
      %27 = sbr.rel (%p25) target = $region8
    $region5: #{tpu_custom_call.1} parent=1 // loop_body
      %s29 = ssub.s32 %s24, 1
      %s30 = ssub.s32 %s24, 2
      %s31 = sadd.s32 %s24, 1
      %s32 = ssub.s32 %s24, %s31
      %p33 = scmp.eq.s32.totalorder %s32, 0
      %s35 = sadd.s32 %s34, 1
      %s36 = scalar_select %p33, %s34, %s35
      %p39 = pneg %p33
      %p40 = scmp.eq.s32.totalorder %s24, 1
      %p41 = por %p39, %p40
      %p42 = scmp.ne.s32.totalorder %s34, %s37
      %p43 = scmp.eq.s32.totalorder %s24, 0
      %p44 = por %p42, %p43
      %p45 = scmp.ne.s32.totalorder %s34, %s37
      %p46 = scmp.eq.s32.totalorder %s29, 1
      %p47 = por %p45, %p46
      %p48 = scmp.ne.s32.totalorder %s37, %s38
      %p49 = scmp.eq.s32.totalorder %s29, 0
      %p50 = por %p48, %p49
      %p51 = scmp.ne.s32.totalorder %s37, %s38
      %p52 = scmp.eq.s32.totalorder %s30, 1
      %p53 = por %p51, %p52
      %p55 = scmp.ne.s32.totalorder %s38, %s54
      %p56 = scmp.eq.s32.totalorder %s30, 0
      %p57 = por %p55, %p56
      %s59 = sadd.s32 %s58, 1
      %p62 = scmp.eq.s32.totalorder %s24, 1
      %p63 = scmp.ne.s32.totalorder %s58, %s60
      %p64 = scmp.eq.s32.totalorder %s24, 0
      %p65 = por %p63, %p64
      %p66 = scmp.ne.s32.totalorder %s58, %s60
      %p67 = scmp.eq.s32.totalorder %s29, 1
      %p68 = por %p66, %p67
      %p69 = scmp.ne.s32.totalorder %s60, %s61
      %p70 = scmp.eq.s32.totalorder %s29, 0
      %p71 = por %p69, %p70
      %p72 = scmp.ne.s32.totalorder %s60, %s61
      %p73 = scmp.eq.s32.totalorder %s30, 1
      %p74 = por %p72, %p73
      %p76 = scmp.ne.s32.totalorder %s61, %s75
      %p77 = scmp.eq.s32.totalorder %s30, 0
      %p78 = por %p76, %p77
      %s80 = sadd.s32 %s79, 1
      %p83 = scmp.eq.s32.totalorder %s24, 1
      %p84 = scmp.ne.s32.totalorder %s79, %s81
      %p85 = scmp.eq.s32.totalorder %s24, 0
      %p86 = por %p84, %p85
      %p87 = scmp.ne.s32.totalorder %s79, %s81
      %p88 = scmp.eq.s32.totalorder %s29, 1
      %p89 = por %p87, %p88
      %p90 = scmp.ne.s32.totalorder %s81, %s82
      %p91 = scmp.eq.s32.totalorder %s29, 0
      %p92 = por %p90, %p91
      %p93 = scmp.ne.s32.totalorder %s81, %s82
      %p94 = scmp.eq.s32.totalorder %s30, 1
      %p95 = por %p93, %p94
      %p97 = scmp.ne.s32.totalorder %s82, %s96
      %p98 = scmp.eq.s32.totalorder %s30, 0
      %p99 = por %p97, %p98
      %s101 = sadd.s32 %s100, 1
      %p104 = scmp.eq.s32.totalorder %s24, 1
      %p105 = scmp.ne.s32.totalorder %s100, %s102
      %p106 = scmp.eq.s32.totalorder %s24, 0
      %p107 = por %p105, %p106
      %p108 = scmp.ne.s32.totalorder %s100, %s102
      %p109 = scmp.eq.s32.totalorder %s29, 1
      %p110 = por %p108, %p109
      %p111 = scmp.ne.s32.totalorder %s102, %s103
      %p112 = scmp.eq.s32.totalorder %s29, 0
      %p113 = por %p111, %p112
      %p114 = scmp.ne.s32.totalorder %s102, %s103
      %p115 = scmp.eq.s32.totalorder %s30, 1
      %p116 = por %p114, %p115
      %p118 = scmp.ne.s32.totalorder %s103, %s117
      %p119 = scmp.eq.s32.totalorder %s30, 0
      %p120 = por %p118, %p119
      %s122 = sadd.s32 %s121, 1
      %p125 = scmp.eq.s32.totalorder %s24, 1
      %p126 = scmp.ne.s32.totalorder %s121, %s123
      %p127 = scmp.eq.s32.totalorder %s24, 0
      %p128 = por %p126, %p127
      %p129 = scmp.ne.s32.totalorder %s121, %s123
      %p130 = scmp.eq.s32.totalorder %s29, 1
      %p131 = por %p129, %p130
      %p132 = scmp.ne.s32.totalorder %s123, %s124
      %p133 = scmp.eq.s32.totalorder %s29, 0
      %p134 = por %p132, %p133
      %p135 = scmp.ne.s32.totalorder %s123, %s124
      %p136 = scmp.eq.s32.totalorder %s30, 1
      %p137 = por %p135, %p136
      %p139 = scmp.ne.s32.totalorder %s124, %s138
      %p140 = scmp.eq.s32.totalorder %s30, 0
      %p141 = por %p139, %p140
      %s143 = sadd.s32 %s142, 1
      %p146 = scmp.eq.s32.totalorder %s24, 1
      %p147 = scmp.ne.s32.totalorder %s142, %s144
      %p148 = scmp.eq.s32.totalorder %s24, 0
      %p149 = por %p147, %p148
      %p150 = scmp.ne.s32.totalorder %s142, %s144
      %p151 = scmp.eq.s32.totalorder %s29, 1
      %p152 = por %p150, %p151
      %p153 = scmp.ne.s32.totalorder %s144, %s145
      %p154 = scmp.eq.s32.totalorder %s29, 0
      %p155 = por %p153, %p154
      %p156 = scmp.ne.s32.totalorder %s144, %s145
      %p157 = scmp.eq.s32.totalorder %s30, 1
      %p158 = por %p156, %p157
      %p160 = scmp.ne.s32.totalorder %s145, %s159
      %p161 = scmp.eq.s32.totalorder %s30, 0
      %p162 = por %p160, %p161
      %s164 = sadd.s32 %s163, 1
      %p167 = scmp.eq.s32.totalorder %s24, 1
      %p168 = scmp.ne.s32.totalorder %s163, %s165
      %p169 = scmp.eq.s32.totalorder %s24, 0
      %p170 = por %p168, %p169
      %p171 = scmp.ne.s32.totalorder %s163, %s165
      %p172 = scmp.eq.s32.totalorder %s29, 1
      %p173 = por %p171, %p172
      %p174 = scmp.ne.s32.totalorder %s165, %s166
      %p175 = scmp.eq.s32.totalorder %s29, 0
      %p176 = por %p174, %p175
      %p177 = scmp.ne.s32.totalorder %s165, %s166
      %p178 = scmp.eq.s32.totalorder %s30, 1
      %p179 = por %p177, %p178
      %p181 = scmp.ne.s32.totalorder %s166, %s180
      %p182 = scmp.eq.s32.totalorder %s30, 0
      %p183 = por %p181, %p182
      %s185 = sadd.s32 %s184, 1
      %p188 = scmp.eq.s32.totalorder %s24, 1
      %p189 = scmp.ne.s32.totalorder %s184, %s186
      %p190 = scmp.eq.s32.totalorder %s24, 0
      %p191 = por %p189, %p190
      %p192 = scmp.ne.s32.totalorder %s184, %s186
      %p193 = scmp.eq.s32.totalorder %s29, 1
      %p194 = por %p192, %p193
      %p195 = scmp.ne.s32.totalorder %s186, %s187
      %p196 = scmp.eq.s32.totalorder %s29, 0
      %p197 = por %p195, %p196
      %p198 = scmp.ne.s32.totalorder %s186, %s187
      %p199 = scmp.eq.s32.totalorder %s30, 1
      %p200 = por %p198, %p199
      %p202 = scmp.ne.s32.totalorder %s187, %s201
      %p203 = scmp.eq.s32.totalorder %s30, 0
      %p204 = por %p202, %p203
      %s206 = sadd.s32 %s205, 1
      %p209 = scmp.eq.s32.totalorder %s24, 1
      %p210 = scmp.ne.s32.totalorder %s205, %s207
      %p211 = scmp.eq.s32.totalorder %s24, 0
      %p212 = por %p210, %p211
      %p213 = scmp.ne.s32.totalorder %s205, %s207
      %p214 = scmp.eq.s32.totalorder %s29, 1
      %p215 = por %p213, %p214
      %p216 = scmp.ne.s32.totalorder %s207, %s208
      %p217 = scmp.eq.s32.totalorder %s29, 0
      %p218 = por %p216, %p217
      %p219 = scmp.ne.s32.totalorder %s207, %s208
      %p220 = scmp.eq.s32.totalorder %s30, 1
      %p221 = por %p219, %p220
      %p223 = scmp.ne.s32.totalorder %s208, %s222
      %p224 = scmp.eq.s32.totalorder %s30, 0
      %p225 = por %p223, %p224
      %s227 = sadd.s32 %s226, 1
      %p230 = scmp.eq.s32.totalorder %s24, 1
      %p231 = scmp.ne.s32.totalorder %s226, %s228
      %p232 = scmp.eq.s32.totalorder %s24, 0
      %p233 = por %p231, %p232
      %p234 = scmp.ne.s32.totalorder %s226, %s228
      %p235 = scmp.eq.s32.totalorder %s29, 1
      %p236 = por %p234, %p235
      %p237 = scmp.ne.s32.totalorder %s228, %s229
      %p238 = scmp.eq.s32.totalorder %s29, 0
      %p239 = por %p237, %p238
      %p240 = scmp.ne.s32.totalorder %s228, %s229
      %p241 = scmp.eq.s32.totalorder %s30, 1
      %p242 = por %p240, %p241
      %p244 = scmp.ne.s32.totalorder %s229, %s243
      %p245 = scmp.eq.s32.totalorder %s30, 0
      %p246 = por %p244, %p245
      %s248 = sadd.s32 %s247, 1
      %p251 = scmp.eq.s32.totalorder %s24, 1
      %p252 = scmp.ne.s32.totalorder %s247, %s249
      %p253 = scmp.eq.s32.totalorder %s24, 0
      %p254 = por %p252, %p253
      %p255 = scmp.ne.s32.totalorder %s247, %s249
      %p256 = scmp.eq.s32.totalorder %s29, 1
      %p257 = por %p255, %p256
      %p258 = scmp.ne.s32.totalorder %s249, %s250
      %p259 = scmp.eq.s32.totalorder %s29, 0
      %p260 = por %p258, %p259
      %p261 = scmp.ne.s32.totalorder %s249, %s250
      %p262 = scmp.eq.s32.totalorder %s30, 1
      %p263 = por %p261, %p262
      %p265 = scmp.ne.s32.totalorder %s250, %s264
      %p266 = scmp.eq.s32.totalorder %s30, 0
      %p267 = por %p265, %p266
      %s268 = ssub.s32 %s24, %s31
      %p269 = scmp.eq.s32.totalorder %s268, 0
      %s271 = sadd.s32 %s270, 1
      %s272 = scalar_select %p269, %s270, %s271
      %p275 = pneg %p269
      %p276 = scmp.eq.s32.totalorder %s24, 1
      %p277 = por %p275, %p276
      %p278 = scmp.ne.s32.totalorder %s270, %s273
      %p279 = scmp.eq.s32.totalorder %s24, 0
      %p280 = por %p278, %p279
      %p281 = scmp.ne.s32.totalorder %s270, %s273
      %p282 = scmp.eq.s32.totalorder %s29, 1
      %p283 = por %p281, %p282
      %p284 = scmp.ne.s32.totalorder %s273, %s274
      %p285 = scmp.eq.s32.totalorder %s29, 0
      %p286 = por %p284, %p285
      %p287 = scmp.ne.s32.totalorder %s273, %s274
      %p288 = scmp.eq.s32.totalorder %s30, 1
      %p289 = por %p287, %p288
      %p291 = scmp.ne.s32.totalorder %s274, %s290
      %p292 = scmp.eq.s32.totalorder %s30, 0
      %p293 = por %p291, %p292
      %s294 = ssub.s32 %s24, %s31
      %p295 = scmp.eq.s32.totalorder %s294, 0
      %s297 = sadd.s32 %s296, 1
      %s298 = scalar_select %p295, %s296, %s297
      %p301 = pneg %p295
      %p302 = scmp.eq.s32.totalorder %s24, 1
      %p303 = por %p301, %p302
      %p304 = scmp.ne.s32.totalorder %s296, %s299
      %p305 = scmp.eq.s32.totalorder %s24, 0
      %p306 = por %p304, %p305
      %p307 = scmp.ne.s32.totalorder %s296, %s299
      %p308 = scmp.eq.s32.totalorder %s29, 1
      %p309 = por %p307, %p308
      %p310 = scmp.ne.s32.totalorder %s299, %s300
      %p311 = scmp.eq.s32.totalorder %s29, 0
      %p312 = por %p310, %p311
      %p313 = scmp.ne.s32.totalorder %s299, %s300
      %p314 = scmp.eq.s32.totalorder %s30, 1
      %p315 = por %p313, %p314
      %p317 = scmp.ne.s32.totalorder %s300, %s316
      %p318 = scmp.eq.s32.totalorder %s30, 0
      %p319 = por %p317, %p318
      %p320 = scmp.le.s32.totalorder 1, %s24
      %p321 = scmp.lt.s32.totalorder %s24, 3
      %p322 = pnand %p320, %p321
      %p323 = pneg %p322
      // Predicated region
      $region9: #{tpu_custom_call.1} parent=5 // pred_check
        _
      $region10: #{tpu_custom_call.1} parent=5 // pred_check_branch
        %325 = sbr.rel (%p322) target = $region12
      $region11: #{tpu_custom_call.1} parent=5 // pred_region
        %s326 = ssub.s32 %s24, 1
        // Predicated region
        $region13: #{tpu_custom_call.1} parent=11 // pred_check
          %p327 = pneg %p71
        $region14: #{tpu_custom_call.1} parent=11 // pred_check_branch
          %329 = sbr.rel (%p327) target = $region16
        $region15: #{tpu_custom_call.1} parent=11 // pred_region
          _
        $region16: #{tpu_custom_call.1} parent=11 // pred_fallthru
          _
        // Predicated region
        $region17: #{tpu_custom_call.1} parent=11 // pred_check
          %p330 = pneg %p92
        $region18: #{tpu_custom_call.1} parent=11 // pred_check_branch
          %332 = sbr.rel (%p330) target = $region20
        $region19: #{tpu_custom_call.1} parent=11 // pred_region
          %334 = vsyncadd [#allocation3], 0
          %s336 = sshll.u32 %s2, 4
          %s337 = int_to_ptr.hbm [resolvable:$true] %s336
          %s338 = sshll.u32 [#allocation2], 4
          %s339 = int_to_ptr.vmem [resolvable:$true] %s338
          %341 = dma.hbm_to_vmem [thread:$0]  %s337, 16, %s339, [#allocation3]
        $region20: #{tpu_custom_call.1} parent=11 // pred_fallthru
          _
        // Predicated region
        $region21: #{tpu_custom_call.1} parent=11 // pred_check
          %p342 = pneg %p113
        $region22: #{tpu_custom_call.1} parent=11 // pred_check_branch
          %344 = sbr.rel (%p342) target = $region24
        $region23: #{tpu_custom_call.1} parent=11 // pred_region
          %346 = vsyncadd [#allocation5], 0
          %s348 = sshll.u32 %s3, 4
          %s349 = int_to_ptr.hbm [resolvable:$true] %s348
          %s350 = sshll.u32 [#allocation4], 4
          %s351 = int_to_ptr.vmem [resolvable:$true] %s350
          %353 = dma.hbm_to_vmem [thread:$0]  %s349, 16, %s351, [#allocation5]
        $region24: #{tpu_custom_call.1} parent=11 // pred_fallthru
          _
        // Predicated region
        $region25: #{tpu_custom_call.1} parent=11 // pred_check
          %p354 = pneg %p134
        $region26: #{tpu_custom_call.1} parent=11 // pred_check_branch
          %356 = sbr.rel (%p354) target = $region28
        $region27: #{tpu_custom_call.1} parent=11 // pred_region
          %358 = vsyncadd [#allocation5], 0
          %s359 = sshll.u32 %s4, 4
          %s360 = int_to_ptr.hbm [resolvable:$true] %s359
          %s361 = sshll.u32 [#allocation6], 4
          %s362 = int_to_ptr.vmem [resolvable:$true] %s361
          %367 = dma.hbm_to_vmem [thread:$0]  %s360, 5120, %s362, [#allocation5], 64, 64, 4
        $region28: #{tpu_custom_call.1} parent=11 // pred_fallthru
          _
        // Predicated region
        $region29: #{tpu_custom_call.1} parent=11 // pred_check
          %p368 = pneg %p155
        $region30: #{tpu_custom_call.1} parent=11 // pred_check_branch
          %370 = sbr.rel (%p368) target = $region32
        $region31: #{tpu_custom_call.1} parent=11 // pred_region
          %372 = vsyncadd [#allocation8], 0
          %s374 = sshll.u32 %s5, 4
          %s375 = int_to_ptr.hbm [resolvable:$true] %s374
          %s376 = sshll.u32 [#allocation7], 4
          %s377 = int_to_ptr.vmem [resolvable:$true] %s376
          %379 = dma.hbm_to_vmem [thread:$0]  %s375, 16, %s377, [#allocation8]
        $region32: #{tpu_custom_call.1} parent=11 // pred_fallthru
          _
        // Predicated region
        $region33: #{tpu_custom_call.1} parent=11 // pred_check
          %p380 = pneg %p176
        $region34: #{tpu_custom_call.1} parent=11 // pred_check_branch
          %382 = sbr.rel (%p380) target = $region36
        $region35: #{tpu_custom_call.1} parent=11 // pred_region
          %384 = vsyncadd [#allocation8], 0
          %s386 = sshll.u32 %s6, 4
          %s387 = int_to_ptr.hbm [resolvable:$true] %s386
          %s388 = sshll.u32 [#allocation9], 4
          %s389 = int_to_ptr.vmem [resolvable:$true] %s388
          %391 = dma.hbm_to_vmem [thread:$0]  %s387, 16, %s389, [#allocation8]
        $region36: #{tpu_custom_call.1} parent=11 // pred_fallthru
          _
        // Predicated region
        $region37: #{tpu_custom_call.1} parent=11 // pred_check
          %p392 = pneg %p197
        $region38: #{tpu_custom_call.1} parent=11 // pred_check_branch
          %394 = sbr.rel (%p392) target = $region40
        $region39: #{tpu_custom_call.1} parent=11 // pred_region
          %396 = vsyncadd [#allocation11], 0
          %s397 = sshll.u32 %s7, 4
          %s398 = int_to_ptr.hbm [resolvable:$true] %s397
          %s399 = sshll.u32 [#allocation10], 4
          %s400 = int_to_ptr.vmem [resolvable:$true] %s399
          %405 = dma.hbm_to_vmem [thread:$0]  %s398, 1024, %s400, [#allocation11], 64, 64, 4
        $region40: #{tpu_custom_call.1} parent=11 // pred_fallthru
          _
        // Predicated region
        $region41: #{tpu_custom_call.1} parent=11 // pred_check
          %p406 = pneg %p218
        $region42: #{tpu_custom_call.1} parent=11 // pred_check_branch
          %408 = sbr.rel (%p406) target = $region44
        $region43: #{tpu_custom_call.1} parent=11 // pred_region
          %410 = vsyncadd [#allocation11], 0
          %s412 = sshll.u32 %s8, 4
          %s413 = int_to_ptr.hbm [resolvable:$true] %s412
          %s414 = sshll.u32 [#allocation12], 4
          %s415 = int_to_ptr.vmem [resolvable:$true] %s414
          %417 = dma.hbm_to_vmem [thread:$0]  %s413, 16, %s415, [#allocation11]
        $region44: #{tpu_custom_call.1} parent=11 // pred_fallthru
          _
        // Predicated region
        $region45: #{tpu_custom_call.1} parent=11 // pred_check
          %p418 = pneg %p239
        $region46: #{tpu_custom_call.1} parent=11 // pred_check_branch
          %420 = sbr.rel (%p418) target = $region48
        $region47: #{tpu_custom_call.1} parent=11 // pred_region
          _
        $region48: #{tpu_custom_call.1} parent=11 // pred_fallthru
          _
        // Predicated region
        $region49: #{tpu_custom_call.1} parent=11 // pred_check
          %p421 = pneg %p260
        $region50: #{tpu_custom_call.1} parent=11 // pred_check_branch
          %423 = sbr.rel (%p421) target = $region52
        $region51: #{tpu_custom_call.1} parent=11 // pred_region
          %425 = vsyncadd [#allocation14], 0
          %s427 = sshll.u32 %s10, 4
          %s428 = int_to_ptr.hbm [resolvable:$true] %s427
          %s429 = sshll.u32 [#allocation13], 4
          %s430 = int_to_ptr.vmem [resolvable:$true] %s429
          %432 = dma.hbm_to_vmem [thread:$0]  %s428, 32, %s430, [#allocation14]
        $region52: #{tpu_custom_call.1} parent=11 // pred_fallthru
          _
      $region12: #{tpu_custom_call.1} parent=5 // pred_fallthru
        _
      %p433 = scmp.lt.s32.totalorder %s24, 2
      // Predicated region
      $region53: #{tpu_custom_call.1} parent=5 // pred_check
        %p434 = pneg %p433
      $region54: #{tpu_custom_call.1} parent=5 // pred_check_branch
        %436 = sbr.rel (%p434) target = $region56
      $region55: #{tpu_custom_call.1} parent=5 // pred_region
        // Predicated region
        $region57: #{tpu_custom_call.1} parent=55 // pred_check
          %p437 = pneg %p44
        $region58: #{tpu_custom_call.1} parent=55 // pred_check_branch
          %439 = sbr.rel (%p437) target = $region60
        $region59: #{tpu_custom_call.1} parent=55 // pred_region
          %p440 = scmp.lt.s32.totalorder %s24, 1
          %s441 = scalar_select %p440, %s24, 1
          %s442 = smul.addr %s441, 3
          %s443 = smul.addr %s442, 4
          %s444 = scalar_lea.vmem %s0, %s443
        $region60: #{tpu_custom_call.1} parent=55 // pred_fallthru
          _
      $region56: #{tpu_custom_call.1} parent=5 // pred_fallthru
        _
      %p445 = scmp.le.s32.totalorder 1, %s24
      %p446 = scmp.lt.s32.totalorder %s24, 3
      %p447 = pnand %p445, %p446
      %p448 = pneg %p447
      // Predicated region
      $region61: #{tpu_custom_call.1} parent=5 // pred_check
        _
      $region62: #{tpu_custom_call.1} parent=5 // pred_check_branch
        %450 = sbr.rel (%p447) target = $region64
      $region63: #{tpu_custom_call.1} parent=5 // pred_region
        %s451 = ssub.s32 %s24, 1
        // Predicated region
        $region65: #{tpu_custom_call.1} parent=63 // pred_check
          %p452 = pneg %p92
        $region66: #{tpu_custom_call.1} parent=63 // pred_check_branch
          %454 = sbr.rel (%p452) target = $region68
        $region67: #{tpu_custom_call.1} parent=63 // pred_region
          %456 = dma.done [#allocation3], 16
        $region68: #{tpu_custom_call.1} parent=63 // pred_fallthru
          _
        // Predicated region
        $region69: #{tpu_custom_call.1} parent=63 // pred_check
          %p457 = pneg %p113
        $region70: #{tpu_custom_call.1} parent=63 // pred_check_branch
          %459 = sbr.rel (%p457) target = $region72
        $region71: #{tpu_custom_call.1} parent=63 // pred_region
          %461 = dma.done [#allocation5], 16
        $region72: #{tpu_custom_call.1} parent=63 // pred_fallthru
          _
        // Predicated region
        $region73: #{tpu_custom_call.1} parent=63 // pred_check
          %p462 = pneg %p134
        $region74: #{tpu_custom_call.1} parent=63 // pred_check_branch
          %464 = sbr.rel (%p462) target = $region76
        $region75: #{tpu_custom_call.1} parent=63 // pred_region
          %466 = dma.done [#allocation5], 5120
        $region76: #{tpu_custom_call.1} parent=63 // pred_fallthru
          _
        // Predicated region
        $region77: #{tpu_custom_call.1} parent=63 // pred_check
          %p467 = pneg %p155
        $region78: #{tpu_custom_call.1} parent=63 // pred_check_branch
          %469 = sbr.rel (%p467) target = $region80
        $region79: #{tpu_custom_call.1} parent=63 // pred_region
          %471 = dma.done [#allocation8], 16
        $region80: #{tpu_custom_call.1} parent=63 // pred_fallthru
          _
        // Predicated region
        $region81: #{tpu_custom_call.1} parent=63 // pred_check
          %p472 = pneg %p176
        $region82: #{tpu_custom_call.1} parent=63 // pred_check_branch
          %474 = sbr.rel (%p472) target = $region84
        $region83: #{tpu_custom_call.1} parent=63 // pred_region
          %476 = dma.done [#allocation8], 16
        $region84: #{tpu_custom_call.1} parent=63 // pred_fallthru
          _
        // Predicated region
        $region85: #{tpu_custom_call.1} parent=63 // pred_check
          %p477 = pneg %p197
        $region86: #{tpu_custom_call.1} parent=63 // pred_check_branch
          %479 = sbr.rel (%p477) target = $region88
        $region87: #{tpu_custom_call.1} parent=63 // pred_region
          %481 = dma.done [#allocation11], 1024
        $region88: #{tpu_custom_call.1} parent=63 // pred_fallthru
          _
        // Predicated region
        $region89: #{tpu_custom_call.1} parent=63 // pred_check
          %p482 = pneg %p218
        $region90: #{tpu_custom_call.1} parent=63 // pred_check_branch
          %484 = sbr.rel (%p482) target = $region92
        $region91: #{tpu_custom_call.1} parent=63 // pred_region
          %486 = dma.done [#allocation11], 16
        $region92: #{tpu_custom_call.1} parent=63 // pred_fallthru
          _
        // Predicated region
        $region93: #{tpu_custom_call.1} parent=63 // pred_check
          %p487 = pneg %p260
        $region94: #{tpu_custom_call.1} parent=63 // pred_check_branch
          %489 = sbr.rel (%p487) target = $region96
        $region95: #{tpu_custom_call.1} parent=63 // pred_region
          %491 = dma.done [#allocation14], 32
        $region96: #{tpu_custom_call.1} parent=63 // pred_fallthru
          _
        %p492 = scmp.lt.s32.totalorder %s29, 1
        %s493 = scalar_select %p492, %s29, 1
        %s494 = smul.addr %s493, 3
        %s495 = smul.addr %s494, 4
        %s496 = scalar_lea.vmem %s0, %s495
        %p497 = pneg %p50
        %p498 = pneg %p47
        %p499 = pneg %p71
        %p500 = pneg %p68
        %p501 = pneg %p92
        %p502 = pneg %p89
        %p503 = pneg %p113
        %p504 = pneg %p110
        %p505 = pneg %p134
        %p506 = pneg %p131
        %p507 = pneg %p155
        %p508 = pneg %p152
        %p509 = pneg %p176
        %p510 = pneg %p173
        %p511 = pneg %p197
        %p512 = pneg %p194
        %p513 = pneg %p218
        %p514 = pneg %p215
        %p515 = pneg %p239
        %p516 = pneg %p236
        %p517 = pneg %p260
        %p518 = pneg %p257
        %p519 = pneg %p286
        %p520 = pneg %p283
        %p521 = scmp.lt.s32.totalorder %s29, 1
        %s522 = scalar_select %p521, %s29, 1
        %s523 = smul.addr %s522, 4
        %s524 = scalar_lea.vmem %s11, %s523
        %p525 = pneg %p312
        %p526 = pneg %p309
        %p527 = scmp.lt.s32.totalorder %s29, 1
        %s528 = scalar_select %p527, %s29, 1
        %s529 = smul.addr %s528, 4
        %s530 = scalar_lea.vmem %s12, %s529
        %p531 = scmp.lt.s32.totalorder %s29, 1
        %s532 = scalar_select %p531, %s29, 1
        %s533 = smul.addr %s532, 3
        %s534 = smul.addr %s533, 4
        %s535 = scalar_lea.vmem %s0, %s534
        %p536 = scmp.lt.s32.totalorder %s29, 1
        %s537 = scalar_select %p536, %s29, 1
        %s538 = smul.addr %s537, 4
        %s539 = scalar_lea.vmem %s11, %s538
        %p540 = scmp.lt.s32.totalorder %s29, 1
        %s541 = scalar_select %p540, %s29, 1
        %s542 = smul.addr %s541, 4
        %s543 = scalar_lea.vmem %s12, %s542
        %v545 = vld [vmem:[%s535] sm:$0xf]
        %v546 = vld [vmem:[%s535 + $0x4] sm:$0xf]
        %v547 = vld [vmem:[%s535 + $0x8] sm:$0xf]
        %v548 = vld [vmem:[#allocation2] sm:$0x1]
        %v549 = vld [vmem:[#allocation4] sm:$0x1]
        %v550 = vld [vmem:[%s1] sm:$0xf]
        %v551 = vld [vmem:[%s1 + $0x4] sm:$0xf]
        %s552 = scalar_lea.vmem %s1, 8
        %v553 = vld [vmem:[%s552] sm:$0xf]
        %v554 = vld [vmem:[%s552 + $0x4] sm:$0xf]
        %v558 = vunpack.c.l.b16 %v545
        %v559 = vunpack.c.l.b16 %v546
        %v560 = vunpack.c.l.b16 %v547
        %v561 = vpack.c.b16 %v559, %v558
        %v562 = vpack.c.b16 %v560, %v560
        %vm563 = vsmask.f32 7424
        %v565 = vshrl.u32 %v561, 16
        %v567 = vshll.u32 %v561, 16
        %v569 = vrot.slane %v567, 1
        %v570 = vor.u32 %v565, %v569
        %v572 = vshll.u32 %v562, 16
        %v574 = vrot.slane %v572, 1
        %v575 = vsel %vm563, %v570, %v574
        %v576 = vshrl.u32 %v562, 16
        %v578 = vor.u32 %v576, %v574
        %v581 = vunpack.c.l.b16 %v553
        %v582 = vunpack.c.l.b16 %v554
        %v583 = vpack.c.b16 %v582, %v581
        %vm585 = vcmask 130048
        %v587 = vsel %vm585, %v575, 0
        %v590 = vsel %vm585, %v578, 0
        %592 = vmatpush.bf16.msra.mxu0 0
        %593 = vmatpush.bf16.msra.mxu0 0
        %594 = vmatpush.bf16.msra.mxu0 0
        %595 = vmatpush.bf16.msra.mxu0 0
        %596 = vmatpush.bf16.msra.mxu0 0
        %597 = vmatpush.bf16.msra.mxu0 0
        %598 = vmatpush.bf16.msra.mxu0 0
        %599 = vmatpush.bf16.msra.mxu0 %v583
        %600 = vmatmul.bf16.gmra.mxu0 %v587
        %v601 = vpop.f32.mrf.mxu0
        %v602 = vadd.f32 0.0, %v601
        %v603 = vpop.f32.mrf.mxu0
        %v604 = vadd.f32 0.0, %v603
        %605 = vmatmul.bf16.gmra.mxu0 %v590
        %v606 = vpop.f32.mrf.mxu0
        %v607 = vadd.f32 0.0, %v606
        %v608 = vpop.f32.mrf.mxu0
        %609 = vdwg.mxu0
        %v612 = vunpack.c.l.b16 %v550
        %v613 = vunpack.c.l.b16 %v551
        %v614 = vpack.c.b16 %v613, %v612
        %v616 = vsel %vm585, %v561, 0
        %v618 = vsel %vm585, %v562, 0
        %620 = vmatpush.bf16.msra.mxu0 0
        %621 = vmatpush.bf16.msra.mxu0 0
        %622 = vmatpush.bf16.msra.mxu0 0
        %623 = vmatpush.bf16.msra.mxu0 0
        %624 = vmatpush.bf16.msra.mxu0 0
        %625 = vmatpush.bf16.msra.mxu0 0
        %626 = vmatpush.bf16.msra.mxu0 0
        %627 = vmatpush.bf16.msra.mxu0 %v614
        %628 = vmatmul.bf16.gmra.mxu0 %v616
        %v629 = vpop.f32.mrf.mxu0
        %v630 = vadd.f32 %v602, %v629
        %v631 = vpop.f32.mrf.mxu0
        %v632 = vadd.f32 %v604, %v631
        %633 = vmatmul.bf16.gmra.mxu0 %v618
        %v634 = vpop.f32.mrf.mxu0
        %v635 = vadd.f32 %v607, %v634
        %v636 = vpop.f32.mrf.mxu0
        %637 = vdwg.mxu0
        %s638 = scalar_lea.vmem %s1, 16
        %v639 = vld [vmem:[%s638] sm:$0xf]
        %v640 = vld [vmem:[%s638 + $0x4] sm:$0xf]
        %vm641 = vcmask 1046528
        %v642 = vrot.slane %v561, 1
        %v643 = vrot.slane %v562, 1
        %v644 = vsel %vm641, %v642, %v643
        %v647 = vunpack.c.l.b16 %v639
        %v648 = vunpack.c.l.b16 %v640
        %v649 = vpack.c.b16 %v648, %v647
        %v652 = vsel %vm585, %v644, 0
        %v655 = vsel %vm585, %v643, 0
        %657 = vmatpush.bf16.msra.mxu0 0
        %658 = vmatpush.bf16.msra.mxu0 0
        %659 = vmatpush.bf16.msra.mxu0 0
        %660 = vmatpush.bf16.msra.mxu0 0
        %661 = vmatpush.bf16.msra.mxu0 0
        %662 = vmatpush.bf16.msra.mxu0 0
        %663 = vmatpush.bf16.msra.mxu0 0
        %664 = vmatpush.bf16.msra.mxu0 %v649
        %665 = vmatmul.bf16.gmra.mxu0 %v652
        %v666 = vpop.f32.mrf.mxu0
        %v667 = vadd.f32 0.0, %v666
        %v668 = vpop.f32.mrf.mxu0
        %v669 = vadd.f32 0.0, %v668
        %670 = vmatmul.bf16.gmra.mxu0 %v655
        %v671 = vpop.f32.mrf.mxu0
        %v672 = vadd.f32 0.0, %v671
        %v673 = vpop.f32.mrf.mxu0
        %674 = vdwg.mxu0
        %v675 = vadd.f32 %v630, %v667
        %v676 = vadd.f32 %v632, %v669
        %v677 = vadd.f32 %v635, %v672
        %s678 = scalar_lea.vmem %s1, 24
        %v679 = vld [vmem:[%s678] sm:$0xf]
        %v680 = vld [vmem:[%s678 + $0x4] sm:$0xf]
        %vm681 = vsmask.f32 6400
        %v682 = vrot.slane %v565, 1
        %v683 = vrot.slane %v567, 2
        %v684 = vor.u32 %v682, %v683
        %v685 = vrot.slane %v576, 1
        %v686 = vrot.slane %v572, 2
        %v687 = vor.u32 %v685, %v686
        %v688 = vsel %vm681, %v684, %v687
        %v691 = vunpack.c.l.b16 %v679
        %v692 = vunpack.c.l.b16 %v680
        %v693 = vpack.c.b16 %v692, %v691
        %v696 = vsel %vm585, %v688, 0
        %v699 = vsel %vm585, %v687, 0
        %701 = vmatpush.bf16.msra.mxu0 0
        %702 = vmatpush.bf16.msra.mxu0 0
        %703 = vmatpush.bf16.msra.mxu0 0
        %704 = vmatpush.bf16.msra.mxu0 0
        %705 = vmatpush.bf16.msra.mxu0 0
        %706 = vmatpush.bf16.msra.mxu0 0
        %707 = vmatpush.bf16.msra.mxu0 0
        %708 = vmatpush.bf16.msra.mxu0 %v693
        %709 = vmatmul.bf16.gmra.mxu0 %v696
        %v710 = vpop.f32.mrf.mxu0
        %v711 = vadd.f32 0.0, %v710
        %v712 = vpop.f32.mrf.mxu0
        %v713 = vadd.f32 0.0, %v712
        %714 = vmatmul.bf16.gmra.mxu0 %v699
        %v715 = vpop.f32.mrf.mxu0
        %v716 = vadd.f32 0.0, %v715
        %v717 = vpop.f32.mrf.mxu0
        %718 = vdwg.mxu0
        %v719 = vadd.f32 %v675, %v711
        %v720 = vadd.f32 %v676, %v713
        %v721 = vadd.f32 %v677, %v716
        %s722 = scalar_lea.vmem %s1, 32
        %v723 = vld [vmem:[%s722] sm:$0xf]
        %v724 = vld [vmem:[%s722 + $0x4] sm:$0xf]
        %vm725 = vcmask 1045504
        %v726 = vrot.slane %v561, 2
        %v727 = vrot.slane %v562, 2
        %v728 = vsel %vm725, %v726, %v727
        %v731 = vunpack.c.l.b16 %v723
        %v732 = vunpack.c.l.b16 %v724
        %v733 = vpack.c.b16 %v732, %v731
        %v736 = vsel %vm585, %v728, 0
        %v739 = vsel %vm585, %v727, 0
        %741 = vmatpush.bf16.msra.mxu0 0
        %742 = vmatpush.bf16.msra.mxu0 0
        %743 = vmatpush.bf16.msra.mxu0 0
        %744 = vmatpush.bf16.msra.mxu0 0
        %745 = vmatpush.bf16.msra.mxu0 0
        %746 = vmatpush.bf16.msra.mxu0 0
        %747 = vmatpush.bf16.msra.mxu0 0
        %748 = vmatpush.bf16.msra.mxu0 %v733
        %749 = vmatmul.bf16.gmra.mxu0 %v736
        %v750 = vpop.f32.mrf.mxu0
        %v751 = vadd.f32 0.0, %v750
        %v752 = vpop.f32.mrf.mxu0
        %v753 = vadd.f32 0.0, %v752
        %754 = vmatmul.bf16.gmra.mxu0 %v739
        %v755 = vpop.f32.mrf.mxu0
        %v756 = vadd.f32 0.0, %v755
        %v757 = vpop.f32.mrf.mxu0
        %758 = vdwg.mxu0
        %v759 = vadd.f32 %v719, %v751
        %v760 = vadd.f32 %v720, %v753
        %v761 = vadd.f32 %v721, %v756
        %v763 = vperm.slane %v548, 0
        %v765 = vmul.f32 %v759, %v763
        %v766 = vmul.f32 %v760, %v763
        %v767 = vmul.f32 %v761, %v763
        %v769 = vperm.slane %v549, 0
        %v771 = vadd.f32 %v765, %v769
        %v772 = vadd.f32 %v766, %v769
        %v773 = vadd.f32 %v767, %v769
        %v774 = vmax.f32 %v771, 0.0
        %v775 = vmax.f32 %v772, 0.0
        %v776 = vmax.f32 %v773, 0.0
        %v777 = vld [vmem:[%s9] sm:$0xf]
        %v778 = vld [vmem:[%s9 + $0x4] sm:$0x1]
        %vm782 = vcmask 1046528
        %v783 = vrot.slane %v774, 1
        %v784 = vrot.slane %v775, 1
        %v785 = vsel %vm782, %v783, %v784
        %v786 = vrot.slane %v776, 1
        %v787 = vsel %vm782, %v784, %v786
        %v791 = vmax.f32 %v774, %v785
        %v792 = vmax.f32 %v775, %v787
        %v793 = vmax.f32 %v776, %v786
        %v794 = vpack.c.bf16 %v792, %v791
        %v795 = vpack.c.bf16 %v793, %v793
        %v798 = vunpack.c.l.b16 %v777
        %v799 = vunpack.c.l.b16 %v778
        %v800 = vpack.c.b16 %v799, %v798
        %vm801 = vcmask 154624
        %v803 = vsel %vm801, %v800, 0
        %vm805 = vcmask 1040384
        %vm806 = vcmask 1041408
        %v807 = vsel %vm805, 4294967295, 65535
        %v808 = vsel %vm806, %v807, 0
        %v810 = vand.u32 %v795, %v808
        %812 = vmatpush.bf16.msra.mxu0 0
        %813 = vmatpush.bf16.msra.mxu0 0
        %814 = vmatpush.bf16.msra.mxu0 0
        %815 = vmatpush.bf16.msra.mxu0 0
        %816 = vmatpush.bf16.msra.mxu0 0
        %817 = vmatpush.bf16.msra.mxu0 0
        %818 = vmatpush.bf16.msra.mxu0 %v810
        %819 = vmatpush.bf16.msra.mxu0 %v794
        %820 = vmatmul.bf16.gmra.mxu0 %v803
        %v821 = vpop.f32.mrf.mxu0
        %v822 = vadd.f32 0.0, %v821
        %v823 = vpop.f32.mrf.mxu0
        %v824 = vadd.f32 0.0, %v823
        %825 = vdwg.mxu0
        %v826 = vpack.c.bf16 %v822, %v822
        %v827 = vpack.c.bf16 %v824, %v824
        %v828 = vld [vmem:[#allocation7] sm:$0x1]
        %v829 = vld [vmem:[#allocation9] sm:$0x1]
        %v830 = vld [vmem:[#allocation6] sm:$0xf]
        %v831 = vld [vmem:[#allocation6 + $0x4] sm:$0xf]
        %v832 = vld [vmem:[#allocation6 + $0x8] sm:$0xf]
        %v833 = vld [vmem:[#allocation6 + $0xc] sm:$0xf]
        %v834 = vld [vmem:[#allocation6 + $0x10] sm:$0xf]
        %v835 = vld [vmem:[#allocation6 + $0x14] sm:$0xf]
        %v836 = vld [vmem:[#allocation6 + $0x18] sm:$0xf]
        %v837 = vld [vmem:[#allocation6 + $0x1c] sm:$0xf]
        %v838 = vld [vmem:[#allocation6 + $0x20] sm:$0xf]
        %v839 = vld [vmem:[#allocation6 + $0x24] sm:$0xf]
        %v840 = vld [vmem:[#allocation6 + $0x28] sm:$0xf]
        %v841 = vld [vmem:[#allocation6 + $0x2c] sm:$0xf]
        %v842 = vld [vmem:[#allocation6 + $0x30] sm:$0xf]
        %v843 = vld [vmem:[#allocation6 + $0x34] sm:$0xf]
        %v844 = vld [vmem:[#allocation6 + $0x38] sm:$0xf]
        %v845 = vld [vmem:[#allocation6 + $0x3c] sm:$0xf]
        %s846 = scalar_lea.vmem [#allocation6], 64
        %v847 = vld [vmem:[%s846] sm:$0xf]
        %v848 = vld [vmem:[%s846 + $0x4] sm:$0xf]
        %v849 = vld [vmem:[%s846 + $0x8] sm:$0xf]
        %v850 = vld [vmem:[%s846 + $0xc] sm:$0xf]
        %v851 = vld [vmem:[%s846 + $0x10] sm:$0xf]
        %v852 = vld [vmem:[%s846 + $0x14] sm:$0xf]
        %v853 = vld [vmem:[%s846 + $0x18] sm:$0xf]
        %v854 = vld [vmem:[%s846 + $0x1c] sm:$0xf]
        %v855 = vld [vmem:[%s846 + $0x20] sm:$0xf]
        %v856 = vld [vmem:[%s846 + $0x24] sm:$0xf]
        %v857 = vld [vmem:[%s846 + $0x28] sm:$0xf]
        %v858 = vld [vmem:[%s846 + $0x2c] sm:$0xf]
        %v859 = vld [vmem:[%s846 + $0x30] sm:$0xf]
        %v860 = vld [vmem:[%s846 + $0x34] sm:$0xf]
        %v861 = vld [vmem:[%s846 + $0x38] sm:$0xf]
        %v862 = vld [vmem:[%s846 + $0x3c] sm:$0xf]
        %v864 = vunpack.c.l.b16 %v826
        %v865 = vpack.c.b16 %v864, %v864
        %v867 = vshrl.u32 %v865, 16
        %v869 = vshll.u32 %v865, 16
        %v871 = vrot.slane %v869, 1
        %v872 = vor.u32 %v867, %v871
        %v890 = vunpack.c.l.b16 %v847
        %v891 = vunpack.c.l.b16 %v848
        %v892 = vunpack.c.l.b16 %v849
        %v893 = vunpack.c.l.b16 %v850
        %v894 = vunpack.c.l.b16 %v851
        %v895 = vunpack.c.l.b16 %v852
        %v896 = vunpack.c.l.b16 %v853
        %v897 = vunpack.c.l.b16 %v854
        %v898 = vunpack.c.l.b16 %v855
        %v899 = vunpack.c.l.b16 %v856
        %v900 = vunpack.c.l.b16 %v857
        %v901 = vunpack.c.l.b16 %v858
        %v902 = vunpack.c.l.b16 %v859
        %v903 = vunpack.c.l.b16 %v860
        %v904 = vunpack.c.l.b16 %v861
        %v905 = vunpack.c.l.b16 %v862
        %v906 = vpack.c.b16 %v891, %v890
        %v907 = vpack.c.b16 %v893, %v892
        %v908 = vpack.c.b16 %v895, %v894
        %v909 = vpack.c.b16 %v897, %v896
        %v910 = vpack.c.b16 %v899, %v898
        %v911 = vpack.c.b16 %v901, %v900
        %v912 = vpack.c.b16 %v903, %v902
        %v913 = vpack.c.b16 %v905, %v904
        %922 = vmatpush.bf16.msra.mxu0 %v913
        %923 = vmatpush.bf16.msra.mxu0 %v912
        %924 = vmatpush.bf16.msra.mxu0 %v911
        %925 = vmatpush.bf16.msra.mxu0 %v910
        %926 = vmatpush.bf16.msra.mxu0 %v909
        %927 = vmatpush.bf16.msra.mxu0 %v908
        %928 = vmatpush.bf16.msra.mxu0 %v907
        %929 = vmatpush.bf16.msra.mxu0 %v906
        %930 = vmatmul.bf16.gmra.mxu0 %v872
        %v931 = vpop.f32.mrf.mxu0
        %v932 = vadd.f32 0.0, %v931
        %v933 = vpop.f32.mrf.mxu0
        %934 = vdwg.mxu0
        %v951 = vunpack.c.l.b16 %v830
        %v952 = vunpack.c.l.b16 %v831
        %v953 = vunpack.c.l.b16 %v832
        %v954 = vunpack.c.l.b16 %v833
        %v955 = vunpack.c.l.b16 %v834
        %v956 = vunpack.c.l.b16 %v835
        %v957 = vunpack.c.l.b16 %v836
        %v958 = vunpack.c.l.b16 %v837
        %v959 = vunpack.c.l.b16 %v838
        %v960 = vunpack.c.l.b16 %v839
        %v961 = vunpack.c.l.b16 %v840
        %v962 = vunpack.c.l.b16 %v841
        %v963 = vunpack.c.l.b16 %v842
        %v964 = vunpack.c.l.b16 %v843
        %v965 = vunpack.c.l.b16 %v844
        %v966 = vunpack.c.l.b16 %v845
        %v967 = vpack.c.b16 %v952, %v951
        %v968 = vpack.c.b16 %v954, %v953
        %v969 = vpack.c.b16 %v956, %v955
        %v970 = vpack.c.b16 %v958, %v957
        %v971 = vpack.c.b16 %v960, %v959
        %v972 = vpack.c.b16 %v962, %v961
        %v973 = vpack.c.b16 %v964, %v963
        %v974 = vpack.c.b16 %v966, %v965
        %983 = vmatpush.bf16.msra.mxu0 %v974
        %984 = vmatpush.bf16.msra.mxu0 %v973
        %985 = vmatpush.bf16.msra.mxu0 %v972
        %986 = vmatpush.bf16.msra.mxu0 %v971
        %987 = vmatpush.bf16.msra.mxu0 %v970
        %988 = vmatpush.bf16.msra.mxu0 %v969
        %989 = vmatpush.bf16.msra.mxu0 %v968
        %990 = vmatpush.bf16.msra.mxu0 %v967
        %991 = vmatmul.bf16.gmra.mxu0 %v826
        %v992 = vpop.f32.mrf.mxu0
        %v993 = vadd.f32 %v932, %v992
        %v994 = vpop.f32.mrf.mxu0
        %995 = vdwg.mxu0
        %s996 = scalar_lea.vmem [#allocation6], 128
        %v997 = vld [vmem:[%s996] sm:$0xf]
        %v998 = vld [vmem:[%s996 + $0x4] sm:$0xf]
        %v999 = vld [vmem:[%s996 + $0x8] sm:$0xf]
        %v1000 = vld [vmem:[%s996 + $0xc] sm:$0xf]
        %v1001 = vld [vmem:[%s996 + $0x10] sm:$0xf]
        %v1002 = vld [vmem:[%s996 + $0x14] sm:$0xf]
        %v1003 = vld [vmem:[%s996 + $0x18] sm:$0xf]
        %v1004 = vld [vmem:[%s996 + $0x1c] sm:$0xf]
        %v1005 = vld [vmem:[%s996 + $0x20] sm:$0xf]
        %v1006 = vld [vmem:[%s996 + $0x24] sm:$0xf]
        %v1007 = vld [vmem:[%s996 + $0x28] sm:$0xf]
        %v1008 = vld [vmem:[%s996 + $0x2c] sm:$0xf]
        %v1009 = vld [vmem:[%s996 + $0x30] sm:$0xf]
        %v1010 = vld [vmem:[%s996 + $0x34] sm:$0xf]
        %v1011 = vld [vmem:[%s996 + $0x38] sm:$0xf]
        %v1012 = vld [vmem:[%s996 + $0x3c] sm:$0xf]
        %v1013 = vrot.slane %v865, 1
        %v1031 = vunpack.c.l.b16 %v997
        %v1032 = vunpack.c.l.b16 %v998
        %v1033 = vunpack.c.l.b16 %v999
        %v1034 = vunpack.c.l.b16 %v1000
        %v1035 = vunpack.c.l.b16 %v1001
        %v1036 = vunpack.c.l.b16 %v1002
        %v1037 = vunpack.c.l.b16 %v1003
        %v1038 = vunpack.c.l.b16 %v1004
        %v1039 = vunpack.c.l.b16 %v1005
        %v1040 = vunpack.c.l.b16 %v1006
        %v1041 = vunpack.c.l.b16 %v1007
        %v1042 = vunpack.c.l.b16 %v1008
        %v1043 = vunpack.c.l.b16 %v1009
        %v1044 = vunpack.c.l.b16 %v1010
        %v1045 = vunpack.c.l.b16 %v1011
        %v1046 = vunpack.c.l.b16 %v1012
        %v1047 = vpack.c.b16 %v1032, %v1031
        %v1048 = vpack.c.b16 %v1034, %v1033
        %v1049 = vpack.c.b16 %v1036, %v1035
        %v1050 = vpack.c.b16 %v1038, %v1037
        %v1051 = vpack.c.b16 %v1040, %v1039
        %v1052 = vpack.c.b16 %v1042, %v1041
        %v1053 = vpack.c.b16 %v1044, %v1043
        %v1054 = vpack.c.b16 %v1046, %v1045
        %1063 = vmatpush.bf16.msra.mxu0 %v1054
        %1064 = vmatpush.bf16.msra.mxu0 %v1053
        %1065 = vmatpush.bf16.msra.mxu0 %v1052
        %1066 = vmatpush.bf16.msra.mxu0 %v1051
        %1067 = vmatpush.bf16.msra.mxu0 %v1050
        %1068 = vmatpush.bf16.msra.mxu0 %v1049
        %1069 = vmatpush.bf16.msra.mxu0 %v1048
        %1070 = vmatpush.bf16.msra.mxu0 %v1047
        %1071 = vmatmul.bf16.gmra.mxu0 %v1013
        %v1072 = vpop.f32.mrf.mxu0
        %v1073 = vadd.f32 0.0, %v1072
        %v1074 = vpop.f32.mrf.mxu0
        %1075 = vdwg.mxu0
        %v1076 = vadd.f32 %v993, %v1073
        %s1077 = scalar_lea.vmem [#allocation6], 192
        %v1078 = vld [vmem:[%s1077] sm:$0xf]
        %v1079 = vld [vmem:[%s1077 + $0x4] sm:$0xf]
        %v1080 = vld [vmem:[%s1077 + $0x8] sm:$0xf]
        %v1081 = vld [vmem:[%s1077 + $0xc] sm:$0xf]
        %v1082 = vld [vmem:[%s1077 + $0x10] sm:$0xf]
        %v1083 = vld [vmem:[%s1077 + $0x14] sm:$0xf]
        %v1084 = vld [vmem:[%s1077 + $0x18] sm:$0xf]
        %v1085 = vld [vmem:[%s1077 + $0x1c] sm:$0xf]
        %v1086 = vld [vmem:[%s1077 + $0x20] sm:$0xf]
        %v1087 = vld [vmem:[%s1077 + $0x24] sm:$0xf]
        %v1088 = vld [vmem:[%s1077 + $0x28] sm:$0xf]
        %v1089 = vld [vmem:[%s1077 + $0x2c] sm:$0xf]
        %v1090 = vld [vmem:[%s1077 + $0x30] sm:$0xf]
        %v1091 = vld [vmem:[%s1077 + $0x34] sm:$0xf]
        %v1092 = vld [vmem:[%s1077 + $0x38] sm:$0xf]
        %v1093 = vld [vmem:[%s1077 + $0x3c] sm:$0xf]
        %v1095 = vunpack.c.l.b16 %v827
        %v1096 = vpack.c.b16 %v1095, %v864
        %v1098 = vshrl.u32 %v1096, 16
        %v1100 = vrot.slane %v1098, 1
        %v1101 = vshll.u32 %v1096, 16
        %v1103 = vrot.slane %v1101, 2
        %v1104 = vor.u32 %v1100, %v1103
        %v1122 = vunpack.c.l.b16 %v1078
        %v1123 = vunpack.c.l.b16 %v1079
        %v1124 = vunpack.c.l.b16 %v1080
        %v1125 = vunpack.c.l.b16 %v1081
        %v1126 = vunpack.c.l.b16 %v1082
        %v1127 = vunpack.c.l.b16 %v1083
        %v1128 = vunpack.c.l.b16 %v1084
        %v1129 = vunpack.c.l.b16 %v1085
        %v1130 = vunpack.c.l.b16 %v1086
        %v1131 = vunpack.c.l.b16 %v1087
        %v1132 = vunpack.c.l.b16 %v1088
        %v1133 = vunpack.c.l.b16 %v1089
        %v1134 = vunpack.c.l.b16 %v1090
        %v1135 = vunpack.c.l.b16 %v1091
        %v1136 = vunpack.c.l.b16 %v1092
        %v1137 = vunpack.c.l.b16 %v1093
        %v1138 = vpack.c.b16 %v1123, %v1122
        %v1139 = vpack.c.b16 %v1125, %v1124
        %v1140 = vpack.c.b16 %v1127, %v1126
        %v1141 = vpack.c.b16 %v1129, %v1128
        %v1142 = vpack.c.b16 %v1131, %v1130
        %v1143 = vpack.c.b16 %v1133, %v1132
        %v1144 = vpack.c.b16 %v1135, %v1134
        %v1145 = vpack.c.b16 %v1137, %v1136
        %1154 = vmatpush.bf16.msra.mxu0 %v1145
        %1155 = vmatpush.bf16.msra.mxu0 %v1144
        %1156 = vmatpush.bf16.msra.mxu0 %v1143
        %1157 = vmatpush.bf16.msra.mxu0 %v1142
        %1158 = vmatpush.bf16.msra.mxu0 %v1141
        %1159 = vmatpush.bf16.msra.mxu0 %v1140
        %1160 = vmatpush.bf16.msra.mxu0 %v1139
        %1161 = vmatpush.bf16.msra.mxu0 %v1138
        %1162 = vmatmul.bf16.gmra.mxu0 %v1104
        %v1163 = vpop.f32.mrf.mxu0
        %v1164 = vadd.f32 0.0, %v1163
        %v1165 = vpop.f32.mrf.mxu0
        %1166 = vdwg.mxu0
        %v1167 = vadd.f32 %v1076, %v1164
        %s1168 = scalar_lea.vmem [#allocation6], 256
        %v1169 = vld [vmem:[%s1168] sm:$0xf]
        %v1170 = vld [vmem:[%s1168 + $0x4] sm:$0xf]
        %v1171 = vld [vmem:[%s1168 + $0x8] sm:$0xf]
        %v1172 = vld [vmem:[%s1168 + $0xc] sm:$0xf]
        %v1173 = vld [vmem:[%s1168 + $0x10] sm:$0xf]
        %v1174 = vld [vmem:[%s1168 + $0x14] sm:$0xf]
        %v1175 = vld [vmem:[%s1168 + $0x18] sm:$0xf]
        %v1176 = vld [vmem:[%s1168 + $0x1c] sm:$0xf]
        %v1177 = vld [vmem:[%s1168 + $0x20] sm:$0xf]
        %v1178 = vld [vmem:[%s1168 + $0x24] sm:$0xf]
        %v1179 = vld [vmem:[%s1168 + $0x28] sm:$0xf]
        %v1180 = vld [vmem:[%s1168 + $0x2c] sm:$0xf]
        %v1181 = vld [vmem:[%s1168 + $0x30] sm:$0xf]
        %v1182 = vld [vmem:[%s1168 + $0x34] sm:$0xf]
        %v1183 = vld [vmem:[%s1168 + $0x38] sm:$0xf]
        %v1184 = vld [vmem:[%s1168 + $0x3c] sm:$0xf]
        %v1185 = vrot.slane %v1096, 2
        %v1203 = vunpack.c.l.b16 %v1169
        %v1204 = vunpack.c.l.b16 %v1170
        %v1205 = vunpack.c.l.b16 %v1171
        %v1206 = vunpack.c.l.b16 %v1172
        %v1207 = vunpack.c.l.b16 %v1173
        %v1208 = vunpack.c.l.b16 %v1174
        %v1209 = vunpack.c.l.b16 %v1175
        %v1210 = vunpack.c.l.b16 %v1176
        %v1211 = vunpack.c.l.b16 %v1177
        %v1212 = vunpack.c.l.b16 %v1178
        %v1213 = vunpack.c.l.b16 %v1179
        %v1214 = vunpack.c.l.b16 %v1180
        %v1215 = vunpack.c.l.b16 %v1181
        %v1216 = vunpack.c.l.b16 %v1182
        %v1217 = vunpack.c.l.b16 %v1183
        %v1218 = vunpack.c.l.b16 %v1184
        %v1219 = vpack.c.b16 %v1204, %v1203
        %v1220 = vpack.c.b16 %v1206, %v1205
        %v1221 = vpack.c.b16 %v1208, %v1207
        %v1222 = vpack.c.b16 %v1210, %v1209
        %v1223 = vpack.c.b16 %v1212, %v1211
        %v1224 = vpack.c.b16 %v1214, %v1213
        %v1225 = vpack.c.b16 %v1216, %v1215
        %v1226 = vpack.c.b16 %v1218, %v1217
        %1235 = vmatpush.bf16.msra.mxu0 %v1226
        %1236 = vmatpush.bf16.msra.mxu0 %v1225
        %1237 = vmatpush.bf16.msra.mxu0 %v1224
        %1238 = vmatpush.bf16.msra.mxu0 %v1223
        %1239 = vmatpush.bf16.msra.mxu0 %v1222
        %1240 = vmatpush.bf16.msra.mxu0 %v1221
        %1241 = vmatpush.bf16.msra.mxu0 %v1220
        %1242 = vmatpush.bf16.msra.mxu0 %v1219
        %1243 = vmatmul.bf16.gmra.mxu0 %v1185
        %v1244 = vpop.f32.mrf.mxu0
        %v1245 = vadd.f32 0.0, %v1244
        %v1246 = vpop.f32.mrf.mxu0
        %1247 = vdwg.mxu0
        %v1248 = vadd.f32 %v1167, %v1245
        %v1250 = vperm.slane %v828, 0
        %v1252 = vmul.f32 %v1248, %v1250
        %v1254 = vperm.slane %v829, 0
        %v1256 = vadd.f32 %v1252, %v1254
        %v1257 = vmax.f32 %v1256, 0.0
        %v1258 = vld [vmem:[#allocation13] sm:$0x3]
        %v1260 = vrot.slane %v1257, 1
        %v1262 = vmax.f32 %v1257, %v1260
        %v1263 = vpack.c.bf16 %v1262, %v1262
        %vm1264 = vcmask 39936
        %v1266 = vsel %vm1264, %v1258, 0
        %vm1268 = vcmask 1042432
        %v1269 = vsel %vm806, 4294967295, 65535
        %v1270 = vsel %vm1268, %v1269, 0
        %v1272 = vand.u32 %v1263, %v1270
        %1274 = vmatpush.bf16.msra.mxu0 0
        %1275 = vmatpush.bf16.msra.mxu0 0
        %1276 = vmatpush.bf16.msra.mxu0 0
        %1277 = vmatpush.bf16.msra.mxu0 0
        %1278 = vmatpush.bf16.msra.mxu0 0
        %1279 = vmatpush.bf16.msra.mxu0 0
        %1280 = vmatpush.bf16.msra.mxu0 0
        %1281 = vmatpush.bf16.msra.mxu0 %v1272
        %1282 = vmatmul.bf16.gmra.mxu0 %v1266
        %v1283 = vpop.f32.mrf.mxu0
        %v1284 = vadd.f32 0.0, %v1283
        %v1285 = vpop.f32.mrf.mxu0
        %1286 = vdwg.mxu0
        %v1287 = vpack.c.bf16 %v1284, %v1284
        %v1288 = vld [vmem:[#allocation10] sm:$0xf]
        %v1289 = vld [vmem:[#allocation10 + $0x4] sm:$0xf]
        %v1290 = vld [vmem:[#allocation10 + $0x8] sm:$0xf]
        %v1291 = vld [vmem:[#allocation10 + $0xc] sm:$0xf]
        %v1292 = vld [vmem:[#allocation10 + $0x10] sm:$0xf]
        %v1293 = vld [vmem:[#allocation10 + $0x14] sm:$0xf]
        %v1294 = vld [vmem:[#allocation10 + $0x18] sm:$0xf]
        %v1295 = vld [vmem:[#allocation10 + $0x1c] sm:$0xf]
        %v1296 = vld [vmem:[#allocation10 + $0x20] sm:$0xf]
        %v1297 = vld [vmem:[#allocation10 + $0x24] sm:$0xf]
        %v1298 = vld [vmem:[#allocation10 + $0x28] sm:$0xf]
        %v1299 = vld [vmem:[#allocation10 + $0x2c] sm:$0xf]
        %v1300 = vld [vmem:[#allocation10 + $0x30] sm:$0xf]
        %v1301 = vld [vmem:[#allocation10 + $0x34] sm:$0xf]
        %v1302 = vld [vmem:[#allocation10 + $0x38] sm:$0xf]
        %v1303 = vld [vmem:[#allocation10 + $0x3c] sm:$0xf]
        %v1304 = vld [vmem:[#allocation12] sm:$0x1]
        %v1306 = vperm.slane %v1304, 0
        %v1324 = vunpack.c.l.b16 %v1288
        %v1325 = vunpack.c.l.b16 %v1289
        %v1326 = vunpack.c.l.b16 %v1290
        %v1327 = vunpack.c.l.b16 %v1291
        %v1328 = vunpack.c.l.b16 %v1292
        %v1329 = vunpack.c.l.b16 %v1293
        %v1330 = vunpack.c.l.b16 %v1294
        %v1331 = vunpack.c.l.b16 %v1295
        %v1332 = vunpack.c.l.b16 %v1296
        %v1333 = vunpack.c.l.b16 %v1297
        %v1334 = vunpack.c.l.b16 %v1298
        %v1335 = vunpack.c.l.b16 %v1299
        %v1336 = vunpack.c.l.b16 %v1300
        %v1337 = vunpack.c.l.b16 %v1301
        %v1338 = vunpack.c.l.b16 %v1302
        %v1339 = vunpack.c.l.b16 %v1303
        %v1340 = vpack.c.b16 %v1325, %v1324
        %v1341 = vpack.c.b16 %v1327, %v1326
        %v1342 = vpack.c.b16 %v1329, %v1328
        %v1343 = vpack.c.b16 %v1331, %v1330
        %v1344 = vpack.c.b16 %v1333, %v1332
        %v1345 = vpack.c.b16 %v1335, %v1334
        %v1346 = vpack.c.b16 %v1337, %v1336
        %v1347 = vpack.c.b16 %v1339, %v1338
        %1356 = vmatpush.bf16.msra.mxu0 %v1347
        %1357 = vmatpush.bf16.msra.mxu0 %v1346
        %1358 = vmatpush.bf16.msra.mxu0 %v1345
        %1359 = vmatpush.bf16.msra.mxu0 %v1344
        %1360 = vmatpush.bf16.msra.mxu0 %v1343
        %1361 = vmatpush.bf16.msra.mxu0 %v1342
        %1362 = vmatpush.bf16.msra.mxu0 %v1341
        %1363 = vmatpush.bf16.msra.mxu0 %v1340
        %1364 = vmatmul.bf16.gmra.mxu0 %v1287
        %v1365 = vpop.f32.mrf.mxu0
        %v1366 = vadd.f32 %v1306, %v1365
        %v1367 = vpop.f32.mrf.mxu0
        %1368 = vdwg.mxu0
        %1369 = vst [vmem:[%s539] sm:$0x7] %v1284
        %1370 = vst [vmem:[%s543] sm:$0x7] %v1366
        %p1371 = scmp.lt.s32.totalorder %s29, 1
        %s1372 = scalar_select %p1371, %s29, 1
        %s1373 = smul.addr %s1372, 4
        %s1374 = scalar_lea.vmem %s11, %s1373
        %p1375 = scmp.lt.s32.totalorder %s29, 1
        %s1376 = scalar_select %p1375, %s29, 1
        %s1377 = smul.addr %s1376, 4
        %s1378 = scalar_lea.vmem %s12, %s1377
        // Predicated region
        $region97: #{tpu_custom_call.1} parent=63 // pred_check
          %p1379 = pneg %p283
        $region98: #{tpu_custom_call.1} parent=63 // pred_check_branch
          %1381 = sbr.rel (%p1379) target = $region100
        $region99: #{tpu_custom_call.1} parent=63 // pred_region
          _
        $region100: #{tpu_custom_call.1} parent=63 // pred_fallthru
          _
        // Predicated region
        $region101: #{tpu_custom_call.1} parent=63 // pred_check
          %p1382 = pneg %p309
        $region102: #{tpu_custom_call.1} parent=63 // pred_check_branch
          %1384 = sbr.rel (%p1382) target = $region104
        $region103: #{tpu_custom_call.1} parent=63 // pred_region
          _
        $region104: #{tpu_custom_call.1} parent=63 // pred_fallthru
          _
      $region64: #{tpu_custom_call.1} parent=5 // pred_fallthru
        _
      %p1385 = scmp.le.s32.totalorder 2, %s24
      // Predicated region
      $region105: #{tpu_custom_call.1} parent=5 // pred_check
        %p1386 = pneg %p1385
      $region106: #{tpu_custom_call.1} parent=5 // pred_check_branch
        %1388 = sbr.rel (%p1386) target = $region108
      $region107: #{tpu_custom_call.1} parent=5 // pred_region
        %s1389 = ssub.s32 %s24, 2
        // Predicated region
        $region109: #{tpu_custom_call.1} parent=107 // pred_check
          %p1390 = pneg %p289
        $region110: #{tpu_custom_call.1} parent=107 // pred_check_branch
          %1392 = sbr.rel (%p1390) target = $region112
        $region111: #{tpu_custom_call.1} parent=107 // pred_region
          %p1393 = scmp.lt.s32.totalorder %s30, 1
          %s1394 = scalar_select %p1393, %s30, 1
          %s1395 = smul.addr %s1394, 4
          %s1396 = scalar_lea.vmem %s11, %s1395
        $region112: #{tpu_custom_call.1} parent=107 // pred_fallthru
          _
        // Predicated region
        $region113: #{tpu_custom_call.1} parent=107 // pred_check
          %p1397 = pneg %p315
        $region114: #{tpu_custom_call.1} parent=107 // pred_check_branch
          %1399 = sbr.rel (%p1397) target = $region116
        $region115: #{tpu_custom_call.1} parent=107 // pred_region
          %p1400 = scmp.lt.s32.totalorder %s30, 1
          %s1401 = scalar_select %p1400, %s30, 1
          %s1402 = smul.addr %s1401, 4
          %s1403 = scalar_lea.vmem %s12, %s1402
        $region116: #{tpu_custom_call.1} parent=107 // pred_fallthru
          _
      $region108: #{tpu_custom_call.1} parent=5 // pred_fallthru
        _
    $region6: #{tpu_custom_call.1} parent=1 // loop_footer
      %s28 = sadd.s32 1, %s24
    $region7: #{tpu_custom_call.1} parent=1 // loop_footer_branch
      %23 = sbr.rel target = $region3
    $region8: #{tpu_custom_call.1} parent=1 // loop_exit
      _
    %1404 = vsyncpa [#allocation3], 1
    %s1405 = scalar_lea.sflag [#allocation3], 1
    %1406 = vsyncpa %s1405, 1
    %1407 = vsyncpa [#allocation5], 1
    %1408 = vsyncpa [#allocation8], 1
    %1409 = vsyncpa [#allocation11], 1
    %1410 = vsyncpa [#allocation14], 1

// kernel: tpu_custom_call.1
$region0: #{tpu_custom_call.1}
  #allocation0 [shape = 'u32[]', space=smem, size = 0x4, offset = 0x4, fixed_abs, tag = 'smem constant byte address 0x4 - core index']
  #allocation1 [shape = 'u32[72,128]{1,0:T(1,128)}', space=vmem, size = 0x9000, scoped, tag = 'internal scratch']
  %s0 = inlined_call_operand.vmem [shape: bf16[2,24,16], index: 0, kind: input, shape index: {}]
  %s1 = inlined_call_operand.vmem [shape: bf16[5,16,128], index: 1, kind: input, shape index: {}]
  %s2 = inlined_call_operand.hbm [shape: f32[1,128], index: 2, kind: input, shape index: {}]
  %s3 = inlined_call_operand.hbm [shape: f32[1,128], index: 3, kind: input, shape index: {}]
  %s4 = inlined_call_operand.hbm [shape: bf16[5,128,128], index: 4, kind: input, shape index: {}]
  %s5 = inlined_call_operand.hbm [shape: f32[1,128], index: 5, kind: input, shape index: {}]
  %s6 = inlined_call_operand.hbm [shape: f32[1,128], index: 6, kind: input, shape index: {}]
  %s7 = inlined_call_operand.hbm [shape: bf16[128,128], index: 7, kind: input, shape index: {}]
  %s8 = inlined_call_operand.hbm [shape: f32[1,128], index: 8, kind: input, shape index: {}]
  %s9 = inlined_call_operand.vmem [shape: bf16[10,19], index: 9, kind: input, shape index: {}]
  %s10 = inlined_call_operand.hbm [shape: bf16[3,5], index: 10, kind: input, shape index: {}]
  %s11 = inlined_call_operand.vmem [shape: f32[2,3,128], index: 11, kind: output, shape index: {0}]
  %s12 = inlined_call_operand.vmem [shape: f32[2,3,128], index: 12, kind: output, shape index: {1}]
  %13 = xla_tuple %s11, %s12
  %s14 = sld [smem:[#allocation0]]
  $region117: #{tpu_custom_call.1} parent=0
    _
  %s16 = ssub.s32 1, %s14
  %s17 = scalar_select 0, %s16, %s14
  $region1: #{tpu_custom_call.1} parent=0
    #allocation2 [shape = 'u8[512]{0}', space=vmem, size = 0x400, scoped, tag = 'input window, operand 2, single buffered']
    #allocation3 [shape = 's32[2]{0}', space=sflag, size = 0x8, scoped, tag = 'scoped memory for tpu_custom_call.1']
    #allocation4 [shape = 'u8[512]{0}', space=vmem, size = 0x400, scoped, tag = 'input window, operand 3, single buffered']
    #allocation5 [shape = 's32[1]{0}', space=sflag, size = 0x4, scoped, tag = 'scoped memory for tpu_custom_call.1']
    #allocation6 [shape = 'u8[163840]{0}', space=vmem, size = 0x28000, scoped, tag = 'input window, operand 4, single buffered']
    #allocation7 [shape = 'u8[512]{0}', space=vmem, size = 0x400, scoped, tag = 'input window, operand 5, single buffered']
    #allocation8 [shape = 's32[1]{0}', space=sflag, size = 0x4, scoped, tag = 'scoped memory for tpu_custom_call.1']
    #allocation9 [shape = 'u8[512]{0}', space=vmem, size = 0x400, scoped, tag = 'input window, operand 6, single buffered']
    #allocation10 [shape = 'u8[32768]{0}', space=vmem, size = 0x8000, scoped, tag = 'input window, operand 7, single buffered']
    #allocation11 [shape = 's32[1]{0}', space=sflag, size = 0x4, scoped, tag = 'scoped memory for tpu_custom_call.1']
    #allocation12 [shape = 'u8[512]{0}', space=vmem, size = 0x400, scoped, tag = 'input window, operand 8, single buffered']
    #allocation13 [shape = 'u8[1024]{0}', space=vmem, size = 0x400, scoped, tag = 'input window, operand 10, single buffered']
    #allocation14 [shape = 's32[1]{0}', space=sflag, size = 0x4, scoped, tag = 'scoped memory for tpu_custom_call.1']
    %18 = vsyncpa [#allocation3], 0
    %19 = vsyncpa [#allocation5], 0
    %20 = vsyncpa [#allocation8], 0
    %21 = vsyncpa [#allocation11], 0
    %22 = vsyncpa [#allocation14], 0
    loop: start=0, step=1, limit=4
    $region2: #{tpu_custom_call.1} parent=1 // loop_pre_header
      _
    $region3: #{tpu_custom_call.1} parent=1 // loop_header
      %s24 = sphi 0, %s28
      %p25 = scmp.ge.s32.totalorder %s24, 4
      %s34 = sphi 0, %s36
      %s37 = sphi 0, %s34
      %s38 = sphi 0, %s37
      %s54 = sphi 0, %s38
      %s58 = sphi 0, %s58
      %s60 = sphi 0, %s58
      %s61 = sphi 0, %s60
      %s75 = sphi 0, %s61
      %s79 = sphi 0, %s79
      %s81 = sphi 0, %s79
      %s82 = sphi 0, %s81
      %s96 = sphi 0, %s82
      %s100 = sphi 0, %s100
      %s102 = sphi 0, %s100
      %s103 = sphi 0, %s102
      %s117 = sphi 0, %s103
      %s121 = sphi 0, %s121
      %s123 = sphi 0, %s121
      %s124 = sphi 0, %s123
      %s138 = sphi 0, %s124
      %s142 = sphi 0, %s142
      %s144 = sphi 0, %s142
      %s145 = sphi 0, %s144
      %s159 = sphi 0, %s145
      %s163 = sphi 0, %s163
      %s165 = sphi 0, %s163
      %s166 = sphi 0, %s165
      %s180 = sphi 0, %s166
      %s184 = sphi 0, %s184
      %s186 = sphi 0, %s184
      %s187 = sphi 0, %s186
      %s201 = sphi 0, %s187
      %s205 = sphi 0, %s205
      %s207 = sphi 0, %s205
      %s208 = sphi 0, %s207
      %s222 = sphi 0, %s208
      %s226 = sphi 0, %s226
      %s228 = sphi 0, %s226
      %s229 = sphi 0, %s228
      %s243 = sphi 0, %s229
      %s247 = sphi 0, %s247
      %s249 = sphi 0, %s247
      %s250 = sphi 0, %s249
      %s264 = sphi 0, %s250
      %s270 = sphi 0, %s272
      %s273 = sphi 0, %s270
      %s274 = sphi 0, %s273
      %s290 = sphi 0, %s274
      %s296 = sphi 0, %s298
      %s299 = sphi 0, %s296
      %s300 = sphi 0, %s299
      %s316 = sphi 0, %s300
    $region4: #{tpu_custom_call.1} parent=1 // loop_header_branch
      %27 = sbr.rel (%p25) target = $region8
    $region5: #{tpu_custom_call.1} parent=1 // loop_body
      %s29 = ssub.s32 %s24, 1
      %s30 = ssub.s32 %s24, 2
      %s31 = sadd.s32 %s24, 1
      %s32 = ssub.s32 %s24, %s31
      %p33 = scmp.eq.s32.totalorder %s32, 0
      %s35 = sadd.s32 %s34, 1
      %s36 = scalar_select %p33, %s34, %s35
      %p39 = pneg %p33
      %p40 = scmp.eq.s32.totalorder %s24, 1
      %p41 = por %p39, %p40
      %p42 = scmp.ne.s32.totalorder %s34, %s37
      %p43 = scmp.eq.s32.totalorder %s24, 0
      %p44 = por %p42, %p43
      %p45 = scmp.ne.s32.totalorder %s34, %s37
      %p46 = scmp.eq.s32.totalorder %s29, 1
      %p47 = por %p45, %p46
      %p48 = scmp.ne.s32.totalorder %s37, %s38
      %p49 = scmp.eq.s32.totalorder %s29, 0
      %p50 = por %p48, %p49
      %p51 = scmp.ne.s32.totalorder %s37, %s38
      %p52 = scmp.eq.s32.totalorder %s30, 1
      %p53 = por %p51, %p52
      %p55 = scmp.ne.s32.totalorder %s38, %s54
      %p56 = scmp.eq.s32.totalorder %s30, 0
      %p57 = por %p55, %p56
      %s59 = sadd.s32 %s58, 1
      %p62 = scmp.eq.s32.totalorder %s24, 1
      %p63 = scmp.ne.s32.totalorder %s58, %s60
      %p64 = scmp.eq.s32.totalorder %s24, 0
      %p65 = por %p63, %p64
      %p66 = scmp.ne.s32.totalorder %s58, %s60
      %p67 = scmp.eq.s32.totalorder %s29, 1
      %p68 = por %p66, %p67
      %p69 = scmp.ne.s32.totalorder %s60, %s61
      %p70 = scmp.eq.s32.totalorder %s29, 0
      %p71 = por %p69, %p70
      %p72 = scmp.ne.s32.totalorder %s60, %s61
      %p73 = scmp.eq.s32.totalorder %s30, 1
      %p74 = por %p72, %p73
      %p76 = scmp.ne.s32.totalorder %s61, %s75
      %p77 = scmp.eq.s32.totalorder %s30, 0
      %p78 = por %p76, %p77
      %s80 = sadd.s32 %s79, 1
      %p83 = scmp.eq.s32.totalorder %s24, 1
      %p84 = scmp.ne.s32.totalorder %s79, %s81
      %p85 = scmp.eq.s32.totalorder %s24, 0
      %p86 = por %p84, %p85
      %p87 = scmp.ne.s32.totalorder %s79, %s81
      %p88 = scmp.eq.s32.totalorder %s29, 1
      %p89 = por %p87, %p88
      %p90 = scmp.ne.s32.totalorder %s81, %s82
      %p91 = scmp.eq.s32.totalorder %s29, 0
      %p92 = por %p90, %p91
      %p93 = scmp.ne.s32.totalorder %s81, %s82
      %p94 = scmp.eq.s32.totalorder %s30, 1
      %p95 = por %p93, %p94
      %p97 = scmp.ne.s32.totalorder %s82, %s96
      %p98 = scmp.eq.s32.totalorder %s30, 0
      %p99 = por %p97, %p98
      %s101 = sadd.s32 %s100, 1
      %p104 = scmp.eq.s32.totalorder %s24, 1
      %p105 = scmp.ne.s32.totalorder %s100, %s102
      %p106 = scmp.eq.s32.totalorder %s24, 0
      %p107 = por %p105, %p106
      %p108 = scmp.ne.s32.totalorder %s100, %s102
      %p109 = scmp.eq.s32.totalorder %s29, 1
      %p110 = por %p108, %p109
      %p111 = scmp.ne.s32.totalorder %s102, %s103
      %p112 = scmp.eq.s32.totalorder %s29, 0
      %p113 = por %p111, %p112
      %p114 = scmp.ne.s32.totalorder %s102, %s103
      %p115 = scmp.eq.s32.totalorder %s30, 1
      %p116 = por %p114, %p115
      %p118 = scmp.ne.s32.totalorder %s103, %s117
      %p119 = scmp.eq.s32.totalorder %s30, 0
      %p120 = por %p118, %p119
      %s122 = sadd.s32 %s121, 1
      %p125 = scmp.eq.s32.totalorder %s24, 1
      %p126 = scmp.ne.s32.totalorder %s121, %s123
      %p127 = scmp.eq.s32.totalorder %s24, 0
      %p128 = por %p126, %p127
      %p129 = scmp.ne.s32.totalorder %s121, %s123
      %p130 = scmp.eq.s32.totalorder %s29, 1
      %p131 = por %p129, %p130
      %p132 = scmp.ne.s32.totalorder %s123, %s124
      %p133 = scmp.eq.s32.totalorder %s29, 0
      %p134 = por %p132, %p133
      %p135 = scmp.ne.s32.totalorder %s123, %s124
      %p136 = scmp.eq.s32.totalorder %s30, 1
      %p137 = por %p135, %p136
      %p139 = scmp.ne.s32.totalorder %s124, %s138
      %p140 = scmp.eq.s32.totalorder %s30, 0
      %p141 = por %p139, %p140
      %s143 = sadd.s32 %s142, 1
      %p146 = scmp.eq.s32.totalorder %s24, 1
      %p147 = scmp.ne.s32.totalorder %s142, %s144
      %p148 = scmp.eq.s32.totalorder %s24, 0
      %p149 = por %p147, %p148
      %p150 = scmp.ne.s32.totalorder %s142, %s144
      %p151 = scmp.eq.s32.totalorder %s29, 1
      %p152 = por %p150, %p151
      %p153 = scmp.ne.s32.totalorder %s144, %s145
      %p154 = scmp.eq.s32.totalorder %s29, 0
      %p155 = por %p153, %p154
      %p156 = scmp.ne.s32.totalorder %s144, %s145
      %p157 = scmp.eq.s32.totalorder %s30, 1
      %p158 = por %p156, %p157
      %p160 = scmp.ne.s32.totalorder %s145, %s159
      %p161 = scmp.eq.s32.totalorder %s30, 0
      %p162 = por %p160, %p161
      %s164 = sadd.s32 %s163, 1
      %p167 = scmp.eq.s32.totalorder %s24, 1
      %p168 = scmp.ne.s32.totalorder %s163, %s165
      %p169 = scmp.eq.s32.totalorder %s24, 0
      %p170 = por %p168, %p169
      %p171 = scmp.ne.s32.totalorder %s163, %s165
      %p172 = scmp.eq.s32.totalorder %s29, 1
      %p173 = por %p171, %p172
      %p174 = scmp.ne.s32.totalorder %s165, %s166
      %p175 = scmp.eq.s32.totalorder %s29, 0
      %p176 = por %p174, %p175
      %p177 = scmp.ne.s32.totalorder %s165, %s166
      %p178 = scmp.eq.s32.totalorder %s30, 1
      %p179 = por %p177, %p178
      %p181 = scmp.ne.s32.totalorder %s166, %s180
      %p182 = scmp.eq.s32.totalorder %s30, 0
      %p183 = por %p181, %p182
      %s185 = sadd.s32 %s184, 1
      %p188 = scmp.eq.s32.totalorder %s24, 1
      %p189 = scmp.ne.s32.totalorder %s184, %s186
      %p190 = scmp.eq.s32.totalorder %s24, 0
      %p191 = por %p189, %p190
      %p192 = scmp.ne.s32.totalorder %s184, %s186
      %p193 = scmp.eq.s32.totalorder %s29, 1
      %p194 = por %p192, %p193
      %p195 = scmp.ne.s32.totalorder %s186, %s187
      %p196 = scmp.eq.s32.totalorder %s29, 0
      %p197 = por %p195, %p196
      %p198 = scmp.ne.s32.totalorder %s186, %s187
      %p199 = scmp.eq.s32.totalorder %s30, 1
      %p200 = por %p198, %p199
      %p202 = scmp.ne.s32.totalorder %s187, %s201
      %p203 = scmp.eq.s32.totalorder %s30, 0
      %p204 = por %p202, %p203
      %s206 = sadd.s32 %s205, 1
      %p209 = scmp.eq.s32.totalorder %s24, 1
      %p210 = scmp.ne.s32.totalorder %s205, %s207
      %p211 = scmp.eq.s32.totalorder %s24, 0
      %p212 = por %p210, %p211
      %p213 = scmp.ne.s32.totalorder %s205, %s207
      %p214 = scmp.eq.s32.totalorder %s29, 1
      %p215 = por %p213, %p214
      %p216 = scmp.ne.s32.totalorder %s207, %s208
      %p217 = scmp.eq.s32.totalorder %s29, 0
      %p218 = por %p216, %p217
      %p219 = scmp.ne.s32.totalorder %s207, %s208
      %p220 = scmp.eq.s32.totalorder %s30, 1
      %p221 = por %p219, %p220
      %p223 = scmp.ne.s32.totalorder %s208, %s222
      %p224 = scmp.eq.s32.totalorder %s30, 0
      %p225 = por %p223, %p224
      %s227 = sadd.s32 %s226, 1
      %p230 = scmp.eq.s32.totalorder %s24, 1
      %p231 = scmp.ne.s32.totalorder %s226, %s228
      %p232 = scmp.eq.s32.totalorder %s24, 0
      %p233 = por %p231, %p232
      %p234 = scmp.ne.s32.totalorder %s226, %s228
      %p235 = scmp.eq.s32.totalorder %s29, 1
      %p236 = por %p234, %p235
      %p237 = scmp.ne.s32.totalorder %s228, %s229
      %p238 = scmp.eq.s32.totalorder %s29, 0
      %p239 = por %p237, %p238
      %p240 = scmp.ne.s32.totalorder %s228, %s229
      %p241 = scmp.eq.s32.totalorder %s30, 1
      %p242 = por %p240, %p241
      %p244 = scmp.ne.s32.totalorder %s229, %s243
      %p245 = scmp.eq.s32.totalorder %s30, 0
      %p246 = por %p244, %p245
      %s248 = sadd.s32 %s247, 1
      %p251 = scmp.eq.s32.totalorder %s24, 1
      %p252 = scmp.ne.s32.totalorder %s247, %s249
      %p253 = scmp.eq.s32.totalorder %s24, 0
      %p254 = por %p252, %p253
      %p255 = scmp.ne.s32.totalorder %s247, %s249
      %p256 = scmp.eq.s32.totalorder %s29, 1
      %p257 = por %p255, %p256
      %p258 = scmp.ne.s32.totalorder %s249, %s250
      %p259 = scmp.eq.s32.totalorder %s29, 0
      %p260 = por %p258, %p259
      %p261 = scmp.ne.s32.totalorder %s249, %s250
      %p262 = scmp.eq.s32.totalorder %s30, 1
      %p263 = por %p261, %p262
      %p265 = scmp.ne.s32.totalorder %s250, %s264
      %p266 = scmp.eq.s32.totalorder %s30, 0
      %p267 = por %p265, %p266
      %s268 = ssub.s32 %s24, %s31
      %p269 = scmp.eq.s32.totalorder %s268, 0
      %s271 = sadd.s32 %s270, 1
      %s272 = scalar_select %p269, %s270, %s271
      %p275 = pneg %p269
      %p276 = scmp.eq.s32.totalorder %s24, 1
      %p277 = por %p275, %p276
      %p278 = scmp.ne.s32.totalorder %s270, %s273
      %p279 = scmp.eq.s32.totalorder %s24, 0
      %p280 = por %p278, %p279
      %p281 = scmp.ne.s32.totalorder %s270, %s273
      %p282 = scmp.eq.s32.totalorder %s29, 1
      %p283 = por %p281, %p282
      %p284 = scmp.ne.s32.totalorder %s273, %s274
      %p285 = scmp.eq.s32.totalorder %s29, 0
      %p286 = por %p284, %p285
      %p287 = scmp.ne.s32.totalorder %s273, %s274
      %p288 = scmp.eq.s32.totalorder %s30, 1
      %p289 = por %p287, %p288
      %p291 = scmp.ne.s32.totalorder %s274, %s290
      %p292 = scmp.eq.s32.totalorder %s30, 0
      %p293 = por %p291, %p292
      %s294 = ssub.s32 %s24, %s31
      %p295 = scmp.eq.s32.totalorder %s294, 0
      %s297 = sadd.s32 %s296, 1
      %s298 = scalar_select %p295, %s296, %s297
      %p301 = pneg %p295
      %p302 = scmp.eq.s32.totalorder %s24, 1
      %p303 = por %p301, %p302
      %p304 = scmp.ne.s32.totalorder %s296, %s299
      %p305 = scmp.eq.s32.totalorder %s24, 0
      %p306 = por %p304, %p305
      %p307 = scmp.ne.s32.totalorder %s296, %s299
      %p308 = scmp.eq.s32.totalorder %s29, 1
      %p309 = por %p307, %p308
      %p310 = scmp.ne.s32.totalorder %s299, %s300
      %p311 = scmp.eq.s32.totalorder %s29, 0
      %p312 = por %p310, %p311
      %p313 = scmp.ne.s32.totalorder %s299, %s300
      %p314 = scmp.eq.s32.totalorder %s30, 1
      %p315 = por %p313, %p314
      %p317 = scmp.ne.s32.totalorder %s300, %s316
      %p318 = scmp.eq.s32.totalorder %s30, 0
      %p319 = por %p317, %p318
      %p320 = scmp.le.s32.totalorder 1, %s24
      %p321 = scmp.lt.s32.totalorder %s24, 3
      %p322 = pnand %p320, %p321
      %p323 = pneg %p322
      // Predicated region
      $region9: #{tpu_custom_call.1} parent=5 // pred_check
        _
      $region10: #{tpu_custom_call.1} parent=5 // pred_check_branch
        %325 = sbr.rel (%p322) target = $region12
      $region11: #{tpu_custom_call.1} parent=5 // pred_region
        %s326 = ssub.s32 %s24, 1
        // Predicated region
        $region13: #{tpu_custom_call.1} parent=11 // pred_check
          %p327 = pneg %p71
        $region14: #{tpu_custom_call.1} parent=11 // pred_check_branch
          %329 = sbr.rel (%p327) target = $region16
        $region15: #{tpu_custom_call.1} parent=11 // pred_region
          _
        $region16: #{tpu_custom_call.1} parent=11 // pred_fallthru
          _
        // Predicated region
        $region17: #{tpu_custom_call.1} parent=11 // pred_check
          %p330 = pneg %p92
        $region18: #{tpu_custom_call.1} parent=11 // pred_check_branch
          %332 = sbr.rel (%p330) target = $region20
        $region19: #{tpu_custom_call.1} parent=11 // pred_region
          %334 = vsyncadd [#allocation3], 0
          %s336 = sshll.u32 %s2, 4
          %s337 = int_to_ptr.hbm [resolvable:$true] %s336
          %s338 = sshll.u32 [#allocation2], 4
          %s339 = int_to_ptr.vmem [resolvable:$true] %s338
          %341 = dma.hbm_to_vmem [thread:$0]  %s337, 16, %s339, [#allocation3]
        $region20: #{tpu_custom_call.1} parent=11 // pred_fallthru
          _
        // Predicated region
        $region21: #{tpu_custom_call.1} parent=11 // pred_check
          %p342 = pneg %p113
        $region22: #{tpu_custom_call.1} parent=11 // pred_check_branch
          %344 = sbr.rel (%p342) target = $region24
        $region23: #{tpu_custom_call.1} parent=11 // pred_region
          %346 = vsyncadd [#allocation5], 0
          %s348 = sshll.u32 %s3, 4
          %s349 = int_to_ptr.hbm [resolvable:$true] %s348
          %s350 = sshll.u32 [#allocation4], 4
          %s351 = int_to_ptr.vmem [resolvable:$true] %s350
          %353 = dma.hbm_to_vmem [thread:$0]  %s349, 16, %s351, [#allocation5]
        $region24: #{tpu_custom_call.1} parent=11 // pred_fallthru
          _
        // Predicated region
        $region25: #{tpu_custom_call.1} parent=11 // pred_check
          %p354 = pneg %p134
        $region26: #{tpu_custom_call.1} parent=11 // pred_check_branch
          %356 = sbr.rel (%p354) target = $region28
        $region27: #{tpu_custom_call.1} parent=11 // pred_region
          %358 = vsyncadd [#allocation5], 0
          %s359 = sshll.u32 %s4, 4
          %s360 = int_to_ptr.hbm [resolvable:$true] %s359
          %s361 = sshll.u32 [#allocation6], 4
          %s362 = int_to_ptr.vmem [resolvable:$true] %s361
          %367 = dma.hbm_to_vmem [thread:$0]  %s360, 5120, %s362, [#allocation5], 64, 64, 4
        $region28: #{tpu_custom_call.1} parent=11 // pred_fallthru
          _
        // Predicated region
        $region29: #{tpu_custom_call.1} parent=11 // pred_check
          %p368 = pneg %p155
        $region30: #{tpu_custom_call.1} parent=11 // pred_check_branch
          %370 = sbr.rel (%p368) target = $region32
        $region31: #{tpu_custom_call.1} parent=11 // pred_region
          %372 = vsyncadd [#allocation8], 0
          %s374 = sshll.u32 %s5, 4
          %s375 = int_to_ptr.hbm [resolvable:$true] %s374
          %s376 = sshll.u32 [#allocation7], 4
          %s377 = int_to_ptr.vmem [resolvable:$true] %s376
          %379 = dma.hbm_to_vmem [thread:$0]  %s375, 16, %s377, [#allocation8]
        $region32: #{tpu_custom_call.1} parent=11 // pred_fallthru
          _
        // Predicated region
        $region33: #{tpu_custom_call.1} parent=11 // pred_check
          %p380 = pneg %p176
        $region34: #{tpu_custom_call.1} parent=11 // pred_check_branch
          %382 = sbr.rel (%p380) target = $region36
        $region35: #{tpu_custom_call.1} parent=11 // pred_region
          %384 = vsyncadd [#allocation8], 0
          %s386 = sshll.u32 %s6, 4
          %s387 = int_to_ptr.hbm [resolvable:$true] %s386
          %s388 = sshll.u32 [#allocation9], 4
          %s389 = int_to_ptr.vmem [resolvable:$true] %s388
          %391 = dma.hbm_to_vmem [thread:$0]  %s387, 16, %s389, [#allocation8]
        $region36: #{tpu_custom_call.1} parent=11 // pred_fallthru
          _
        // Predicated region
        $region37: #{tpu_custom_call.1} parent=11 // pred_check
          %p392 = pneg %p197
        $region38: #{tpu_custom_call.1} parent=11 // pred_check_branch
          %394 = sbr.rel (%p392) target = $region40
        $region39: #{tpu_custom_call.1} parent=11 // pred_region
          %396 = vsyncadd [#allocation11], 0
          %s397 = sshll.u32 %s7, 4
          %s398 = int_to_ptr.hbm [resolvable:$true] %s397
          %s399 = sshll.u32 [#allocation10], 4
          %s400 = int_to_ptr.vmem [resolvable:$true] %s399
          %405 = dma.hbm_to_vmem [thread:$0]  %s398, 1024, %s400, [#allocation11], 64, 64, 4
        $region40: #{tpu_custom_call.1} parent=11 // pred_fallthru
          _
        // Predicated region
        $region41: #{tpu_custom_call.1} parent=11 // pred_check
          %p406 = pneg %p218
        $region42: #{tpu_custom_call.1} parent=11 // pred_check_branch
          %408 = sbr.rel (%p406) target = $region44
        $region43: #{tpu_custom_call.1} parent=11 // pred_region
          %410 = vsyncadd [#allocation11], 0
          %s412 = sshll.u32 %s8, 4
          %s413 = int_to_ptr.hbm [resolvable:$true] %s412
          %s414 = sshll.u32 [#allocation12], 4
          %s415 = int_to_ptr.vmem [resolvable:$true] %s414
          %417 = dma.hbm_to_vmem [thread:$0]  %s413, 16, %s415, [#allocation11]
        $region44: #{tpu_custom_call.1} parent=11 // pred_fallthru
          _
        // Predicated region
        $region45: #{tpu_custom_call.1} parent=11 // pred_check
          %p418 = pneg %p239
        $region46: #{tpu_custom_call.1} parent=11 // pred_check_branch
          %420 = sbr.rel (%p418) target = $region48
        $region47: #{tpu_custom_call.1} parent=11 // pred_region
          _
        $region48: #{tpu_custom_call.1} parent=11 // pred_fallthru
          _
        // Predicated region
        $region49: #{tpu_custom_call.1} parent=11 // pred_check
          %p421 = pneg %p260
        $region50: #{tpu_custom_call.1} parent=11 // pred_check_branch
          %423 = sbr.rel (%p421) target = $region52
        $region51: #{tpu_custom_call.1} parent=11 // pred_region
          %425 = vsyncadd [#allocation14], 0
          %s427 = sshll.u32 %s10, 4
          %s428 = int_to_ptr.hbm [resolvable:$true] %s427
          %s429 = sshll.u32 [#allocation13], 4
          %s430 = int_to_ptr.vmem [resolvable:$true] %s429
          %432 = dma.hbm_to_vmem [thread:$0]  %s428, 32, %s430, [#allocation14]
        $region52: #{tpu_custom_call.1} parent=11 // pred_fallthru
          _
      $region12: #{tpu_custom_call.1} parent=5 // pred_fallthru
        _
      %p433 = scmp.lt.s32.totalorder %s24, 2
      // Predicated region
      $region53: #{tpu_custom_call.1} parent=5 // pred_check
        %p434 = pneg %p433
      $region54: #{tpu_custom_call.1} parent=5 // pred_check_branch
        %436 = sbr.rel (%p434) target = $region56
      $region55: #{tpu_custom_call.1} parent=5 // pred_region
        // Predicated region
        $region57: #{tpu_custom_call.1} parent=55 // pred_check
          %p437 = pneg %p44
        $region58: #{tpu_custom_call.1} parent=55 // pred_check_branch
          %439 = sbr.rel (%p437) target = $region60
        $region59: #{tpu_custom_call.1} parent=55 // pred_region
          %p440 = scmp.lt.s32.totalorder %s24, 1
          %s441 = scalar_select %p440, %s24, 1
          %s442 = smul.addr %s441, 3
          %s443 = smul.addr %s442, 4
          %s444 = scalar_lea.vmem %s0, %s443
        $region60: #{tpu_custom_call.1} parent=55 // pred_fallthru
          _
      $region56: #{tpu_custom_call.1} parent=5 // pred_fallthru
        _
      %p445 = scmp.le.s32.totalorder 1, %s24
      %p446 = scmp.lt.s32.totalorder %s24, 3
      %p447 = pnand %p445, %p446
      %p448 = pneg %p447
      // Predicated region
      $region61: #{tpu_custom_call.1} parent=5 // pred_check
        _
      $region62: #{tpu_custom_call.1} parent=5 // pred_check_branch
        %450 = sbr.rel (%p447) target = $region64
      $region63: #{tpu_custom_call.1} parent=5 // pred_region
        %s451 = ssub.s32 %s24, 1
        // Predicated region
        $region65: #{tpu_custom_call.1} parent=63 // pred_check
          %p452 = pneg %p92
        $region66: #{tpu_custom_call.1} parent=63 // pred_check_branch
          %454 = sbr.rel (%p452) target = $region68
        $region67: #{tpu_custom_call.1} parent=63 // pred_region
          %456 = dma.done [#allocation3], 16
        $region68: #{tpu_custom_call.1} parent=63 // pred_fallthru
          _
        // Predicated region
        $region69: #{tpu_custom_call.1} parent=63 // pred_check
          %p457 = pneg %p113
        $region70: #{tpu_custom_call.1} parent=63 // pred_check_branch
          %459 = sbr.rel (%p457) target = $region72
        $region71: #{tpu_custom_call.1} parent=63 // pred_region
          %461 = dma.done [#allocation5], 16
        $region72: #{tpu_custom_call.1} parent=63 // pred_fallthru
          _
        // Predicated region
        $region73: #{tpu_custom_call.1} parent=63 // pred_check
          %p462 = pneg %p134
        $region74: #{tpu_custom_call.1} parent=63 // pred_check_branch
          %464 = sbr.rel (%p462) target = $region76
        $region75: #{tpu_custom_call.1} parent=63 // pred_region
          %466 = dma.done [#allocation5], 5120
        $region76: #{tpu_custom_call.1} parent=63 // pred_fallthru
          _
        // Predicated region
        $region77: #{tpu_custom_call.1} parent=63 // pred_check
          %p467 = pneg %p155
        $region78: #{tpu_custom_call.1} parent=63 // pred_check_branch
          %469 = sbr.rel (%p467) target = $region80
        $region79: #{tpu_custom_call.1} parent=63 // pred_region
          %471 = dma.done [#allocation8], 16
        $region80: #{tpu_custom_call.1} parent=63 // pred_fallthru
          _
        // Predicated region
        $region81: #{tpu_custom_call.1} parent=63 // pred_check
          %p472 = pneg %p176
        $region82: #{tpu_custom_call.1} parent=63 // pred_check_branch
          %474 = sbr.rel (%p472) target = $region84
        $region83: #{tpu_custom_call.1} parent=63 // pred_region
          %476 = dma.done [#allocation8], 16
        $region84: #{tpu_custom_call.1} parent=63 // pred_fallthru
          _
        // Predicated region
        $region85: #{tpu_custom_call.1} parent=63 // pred_check
          %p477 = pneg %p197
        $region86: #{tpu_custom_call.1} parent=63 // pred_check_branch
          %479 = sbr.rel (%p477) target = $region88
        $region87: #{tpu_custom_call.1} parent=63 // pred_region
          %481 = dma.done [#allocation11], 1024
        $region88: #{tpu_custom_call.1} parent=63 // pred_fallthru
          _
        // Predicated region
        $region89: #{tpu_custom_call.1} parent=63 // pred_check
          %p482 = pneg %p218
        $region90: #{tpu_custom_call.1} parent=63 // pred_check_branch
          %484 = sbr.rel (%p482) target = $region92
        $region91: #{tpu_custom_call.1} parent=63 // pred_region
          %486 = dma.done [#allocation11], 16
        $region92: #{tpu_custom_call.1} parent=63 // pred_fallthru
          _
        // Predicated region
        $region93: #{tpu_custom_call.1} parent=63 // pred_check
          %p487 = pneg %p260
        $region94: #{tpu_custom_call.1} parent=63 // pred_check_branch
          %489 = sbr.rel (%p487) target = $region96
        $region95: #{tpu_custom_call.1} parent=63 // pred_region
          %491 = dma.done [#allocation14], 32
        $region96: #{tpu_custom_call.1} parent=63 // pred_fallthru
          _
        %p492 = scmp.lt.s32.totalorder %s29, 1
        %s493 = scalar_select %p492, %s29, 1
        %s494 = smul.addr %s493, 3
        %s495 = smul.addr %s494, 4
        %s496 = scalar_lea.vmem %s0, %s495
        %p497 = pneg %p50
        %p498 = pneg %p47
        %p499 = pneg %p71
        %p500 = pneg %p68
        %p501 = pneg %p92
        %p502 = pneg %p89
        %p503 = pneg %p113
        %p504 = pneg %p110
        %p505 = pneg %p134
        %p506 = pneg %p131
        %p507 = pneg %p155
        %p508 = pneg %p152
        %p509 = pneg %p176
        %p510 = pneg %p173
        %p511 = pneg %p197
        %p512 = pneg %p194
        %p513 = pneg %p218
        %p514 = pneg %p215
        %p515 = pneg %p239
        %p516 = pneg %p236
        %p517 = pneg %p260
        %p518 = pneg %p257
        %p519 = pneg %p286
        %p520 = pneg %p283
        %p521 = scmp.lt.s32.totalorder %s29, 1
        %s522 = scalar_select %p521, %s29, 1
        %s523 = smul.addr %s522, 4
        %s524 = scalar_lea.vmem %s11, %s523
        %p525 = pneg %p312
        %p526 = pneg %p309
        %p527 = scmp.lt.s32.totalorder %s29, 1
        %s528 = scalar_select %p527, %s29, 1
        %s529 = smul.addr %s528, 4
        %s530 = scalar_lea.vmem %s12, %s529
        %p531 = scmp.lt.s32.totalorder %s29, 1
        %s532 = scalar_select %p531, %s29, 1
        %s533 = smul.addr %s532, 3
        %s534 = smul.addr %s533, 4
        %s535 = scalar_lea.vmem %s0, %s534
        %p536 = scmp.lt.s32.totalorder %s29, 1
        %s537 = scalar_select %p536, %s29, 1
        %s538 = smul.addr %s537, 4
        %s539 = scalar_lea.vmem %s11, %s538
        %p540 = scmp.lt.s32.totalorder %s29, 1
        %s541 = scalar_select %p540, %s29, 1
        %s542 = smul.addr %s541, 4
        %s543 = scalar_lea.vmem %s12, %s542
        %v545 = vld [vmem:[%s535] sm:$0xf]
        %v546 = vld [vmem:[%s535 + $0x4] sm:$0xf]
        %v547 = vld [vmem:[%s535 + $0x8] sm:$0xf]
        %v548 = vld [vmem:[#allocation2] sm:$0x1]
        %v549 = vld [vmem:[#allocation4] sm:$0x1]
        %v550 = vld [vmem:[%s1] sm:$0xf]
        %v551 = vld [vmem:[%s1 + $0x4] sm:$0xf]
        %s552 = scalar_lea.vmem %s1, 8
        %v553 = vld [vmem:[%s552] sm:$0xf]
        %v554 = vld [vmem:[%s552 + $0x4] sm:$0xf]
        %v558 = vunpack.c.l.b16 %v545
        %v559 = vunpack.c.l.b16 %v546
        %v560 = vunpack.c.l.b16 %v547
        %v561 = vpack.c.b16 %v559, %v558
        %v562 = vpack.c.b16 %v560, %v560
        %vm563 = vsmask.f32 7424
        %v565 = vshrl.u32 %v561, 16
        %v567 = vshll.u32 %v561, 16
        %v569 = vrot.slane %v567, 1
        %v570 = vor.u32 %v565, %v569
        %v572 = vshll.u32 %v562, 16
        %v574 = vrot.slane %v572, 1
        %v575 = vsel %vm563, %v570, %v574
        %v576 = vshrl.u32 %v562, 16
        %v578 = vor.u32 %v576, %v574
        %v581 = vunpack.c.l.b16 %v553
        %v582 = vunpack.c.l.b16 %v554
        %v583 = vpack.c.b16 %v582, %v581
        %vm585 = vcmask 130048
        %v587 = vsel %vm585, %v575, 0
        %v590 = vsel %vm585, %v578, 0
        %592 = vmatpush.bf16.msra.mxu0 0
        %593 = vmatpush.bf16.msra.mxu0 0
        %594 = vmatpush.bf16.msra.mxu0 0
        %595 = vmatpush.bf16.msra.mxu0 0
        %596 = vmatpush.bf16.msra.mxu0 0
        %597 = vmatpush.bf16.msra.mxu0 0
        %598 = vmatpush.bf16.msra.mxu0 0
        %599 = vmatpush.bf16.msra.mxu0 %v583
        %600 = vmatmul.bf16.gmra.mxu0 %v587
        %v601 = vpop.f32.mrf.mxu0
        %v602 = vadd.f32 0.0, %v601
        %v603 = vpop.f32.mrf.mxu0
        %v604 = vadd.f32 0.0, %v603
        %605 = vmatmul.bf16.gmra.mxu0 %v590
        %v606 = vpop.f32.mrf.mxu0
        %v607 = vadd.f32 0.0, %v606
        %v608 = vpop.f32.mrf.mxu0
        %609 = vdwg.mxu0
        %v612 = vunpack.c.l.b16 %v550
        %v613 = vunpack.c.l.b16 %v551
        %v614 = vpack.c.b16 %v613, %v612
        %v616 = vsel %vm585, %v561, 0
        %v618 = vsel %vm585, %v562, 0
        %620 = vmatpush.bf16.msra.mxu0 0
        %621 = vmatpush.bf16.msra.mxu0 0
        %622 = vmatpush.bf16.msra.mxu0 0
        %623 = vmatpush.bf16.msra.mxu0 0
        %624 = vmatpush.bf16.msra.mxu0 0
        %625 = vmatpush.bf16.msra.mxu0 0
        %626 = vmatpush.bf16.msra.mxu0 0
        %627 = vmatpush.bf16.msra.mxu0 %v614
        %628 = vmatmul.bf16.gmra.mxu0 %v616
        %v629 = vpop.f32.mrf.mxu0
        %v630 = vadd.f32 %v602, %v629
        %v631 = vpop.f32.mrf.mxu0
        %v632 = vadd.f32 %v604, %v631
        %633 = vmatmul.bf16.gmra.mxu0 %v618
        %v634 = vpop.f32.mrf.mxu0
        %v635 = vadd.f32 %v607, %v634
        %v636 = vpop.f32.mrf.mxu0
        %637 = vdwg.mxu0
        %s638 = scalar_lea.vmem %s1, 16
        %v639 = vld [vmem:[%s638] sm:$0xf]
        %v640 = vld [vmem:[%s638 + $0x4] sm:$0xf]
        %vm641 = vcmask 1046528
        %v642 = vrot.slane %v561, 1
        %v643 = vrot.slane %v562, 1
        %v644 = vsel %vm641, %v642, %v643
        %v647 = vunpack.c.l.b16 %v639
        %v648 = vunpack.c.l.b16 %v640
        %v649 = vpack.c.b16 %v648, %v647
        %v652 = vsel %vm585, %v644, 0
        %v655 = vsel %vm585, %v643, 0
        %657 = vmatpush.bf16.msra.mxu0 0
        %658 = vmatpush.bf16.msra.mxu0 0
        %659 = vmatpush.bf16.msra.mxu0 0
        %660 = vmatpush.bf16.msra.mxu0 0
        %661 = vmatpush.bf16.msra.mxu0 0
        %662 = vmatpush.bf16.msra.mxu0 0
        %663 = vmatpush.bf16.msra.mxu0 0
        %664 = vmatpush.bf16.msra.mxu0 %v649
        %665 = vmatmul.bf16.gmra.mxu0 %v652
        %v666 = vpop.f32.mrf.mxu0
        %v667 = vadd.f32 0.0, %v666
        %v668 = vpop.f32.mrf.mxu0
        %v669 = vadd.f32 0.0, %v668
        %670 = vmatmul.bf16.gmra.mxu0 %v655
        %v671 = vpop.f32.mrf.mxu0
        %v672 = vadd.f32 0.0, %v671
        %v673 = vpop.f32.mrf.mxu0
        %674 = vdwg.mxu0
        %v675 = vadd.f32 %v630, %v667
        %v676 = vadd.f32 %v632, %v669
        %v677 = vadd.f32 %v635, %v672
        %s678 = scalar_lea.vmem %s1, 24
        %v679 = vld [vmem:[%s678] sm:$0xf]
        %v680 = vld [vmem:[%s678 + $0x4] sm:$0xf]
        %vm681 = vsmask.f32 6400
        %v682 = vrot.slane %v565, 1
        %v683 = vrot.slane %v567, 2
        %v684 = vor.u32 %v682, %v683
        %v685 = vrot.slane %v576, 1
        %v686 = vrot.slane %v572, 2
        %v687 = vor.u32 %v685, %v686
        %v688 = vsel %vm681, %v684, %v687
        %v691 = vunpack.c.l.b16 %v679
        %v692 = vunpack.c.l.b16 %v680
        %v693 = vpack.c.b16 %v692, %v691
        %v696 = vsel %vm585, %v688, 0
        %v699 = vsel %vm585, %v687, 0
        %701 = vmatpush.bf16.msra.mxu0 0
        %702 = vmatpush.bf16.msra.mxu0 0
        %703 = vmatpush.bf16.msra.mxu0 0
        %704 = vmatpush.bf16.msra.mxu0 0
        %705 = vmatpush.bf16.msra.mxu0 0
        %706 = vmatpush.bf16.msra.mxu0 0
        %707 = vmatpush.bf16.msra.mxu0 0
        %708 = vmatpush.bf16.msra.mxu0 %v693
        %709 = vmatmul.bf16.gmra.mxu0 %v696
        %v710 = vpop.f32.mrf.mxu0
        %v711 = vadd.f32 0.0, %v710
        %v712 = vpop.f32.mrf.mxu0
        %v713 = vadd.f32 0.0, %v712
        %714 = vmatmul.bf16.gmra.mxu0 %v699
        %v715 = vpop.f32.mrf.mxu0
        %v716 = vadd.f32 0.0, %v715
        %v717 = vpop.f32.mrf.mxu0
        %718 = vdwg.mxu0
        %v719 = vadd.f32 %v675, %v711
        %v720 = vadd.f32 %v676, %v713
        %v721 = vadd.f32 %v677, %v716
        %s722 = scalar_lea.vmem %s1, 32
        %v723 = vld [vmem:[%s722] sm:$0xf]
        %v724 = vld [vmem:[%s722 + $0x4] sm:$0xf]
        %vm725 = vcmask 1045504
        %v726 = vrot.slane %v561, 2
        %v727 = vrot.slane %v562, 2
        %v728 = vsel %vm725, %v726, %v727
        %v731 = vunpack.c.l.b16 %v723
        %v732 = vunpack.c.l.b16 %v724
        %v733 = vpack.c.b16 %v732, %v731
        %v736 = vsel %vm585, %v728, 0
        %v739 = vsel %vm585, %v727, 0
        %741 = vmatpush.bf16.msra.mxu0 0
        %742 = vmatpush.bf16.msra.mxu0 0
        %743 = vmatpush.bf16.msra.mxu0 0
        %744 = vmatpush.bf16.msra.mxu0 0
        %745 = vmatpush.bf16.msra.mxu0 0
        %746 = vmatpush.bf16.msra.mxu0 0
        %747 = vmatpush.bf16.msra.mxu0 0
        %748 = vmatpush.bf16.msra.mxu0 %v733
        %749 = vmatmul.bf16.gmra.mxu0 %v736
        %v750 = vpop.f32.mrf.mxu0
        %v751 = vadd.f32 0.0, %v750
        %v752 = vpop.f32.mrf.mxu0
        %v753 = vadd.f32 0.0, %v752
        %754 = vmatmul.bf16.gmra.mxu0 %v739
        %v755 = vpop.f32.mrf.mxu0
        %v756 = vadd.f32 0.0, %v755
        %v757 = vpop.f32.mrf.mxu0
        %758 = vdwg.mxu0
        %v759 = vadd.f32 %v719, %v751
        %v760 = vadd.f32 %v720, %v753
        %v761 = vadd.f32 %v721, %v756
        %v763 = vperm.slane %v548, 0
        %v765 = vmul.f32 %v759, %v763
        %v766 = vmul.f32 %v760, %v763
        %v767 = vmul.f32 %v761, %v763
        %v769 = vperm.slane %v549, 0
        %v771 = vadd.f32 %v765, %v769
        %v772 = vadd.f32 %v766, %v769
        %v773 = vadd.f32 %v767, %v769
        %v774 = vmax.f32 %v771, 0.0
        %v775 = vmax.f32 %v772, 0.0
        %v776 = vmax.f32 %v773, 0.0
        %v777 = vld [vmem:[%s9] sm:$0xf]
        %v778 = vld [vmem:[%s9 + $0x4] sm:$0x1]
        %vm782 = vcmask 1046528
        %v783 = vrot.slane %v774, 1
        %v784 = vrot.slane %v775, 1
        %v785 = vsel %vm782, %v783, %v784
        %v786 = vrot.slane %v776, 1
        %v787 = vsel %vm782, %v784, %v786
        %v791 = vmax.f32 %v774, %v785
        %v792 = vmax.f32 %v775, %v787
        %v793 = vmax.f32 %v776, %v786
        %v794 = vpack.c.bf16 %v792, %v791
        %v795 = vpack.c.bf16 %v793, %v793
        %v798 = vunpack.c.l.b16 %v777
        %v799 = vunpack.c.l.b16 %v778
        %v800 = vpack.c.b16 %v799, %v798
        %vm801 = vcmask 154624
        %v803 = vsel %vm801, %v800, 0
        %vm805 = vcmask 1040384
        %vm806 = vcmask 1041408
        %v807 = vsel %vm805, 4294967295, 65535
        %v808 = vsel %vm806, %v807, 0
        %v810 = vand.u32 %v795, %v808
        %812 = vmatpush.bf16.msra.mxu0 0
        %813 = vmatpush.bf16.msra.mxu0 0
        %814 = vmatpush.bf16.msra.mxu0 0
        %815 = vmatpush.bf16.msra.mxu0 0
        %816 = vmatpush.bf16.msra.mxu0 0
        %817 = vmatpush.bf16.msra.mxu0 0
        %818 = vmatpush.bf16.msra.mxu0 %v810
        %819 = vmatpush.bf16.msra.mxu0 %v794
        %820 = vmatmul.bf16.gmra.mxu0 %v803
        %v821 = vpop.f32.mrf.mxu0
        %v822 = vadd.f32 0.0, %v821
        %v823 = vpop.f32.mrf.mxu0
        %v824 = vadd.f32 0.0, %v823
        %825 = vdwg.mxu0
        %v826 = vpack.c.bf16 %v822, %v822
        %v827 = vpack.c.bf16 %v824, %v824
        %v828 = vld [vmem:[#allocation7] sm:$0x1]
        %v829 = vld [vmem:[#allocation9] sm:$0x1]
        %v830 = vld [vmem:[#allocation6] sm:$0xf]
        %v831 = vld [vmem:[#allocation6 + $0x4] sm:$0xf]
        %v832 = vld [vmem:[#allocation6 + $0x8] sm:$0xf]
        %v833 = vld [vmem:[#allocation6 + $0xc] sm:$0xf]
        %v834 = vld [vmem:[#allocation6 + $0x10] sm:$0xf]
        %v835 = vld [vmem:[#allocation6 + $0x14] sm:$0xf]
        %v836 = vld [vmem:[#allocation6 + $0x18] sm:$0xf]
        %v837 = vld [vmem:[#allocation6 + $0x1c] sm:$0xf]
        %v838 = vld [vmem:[#allocation6 + $0x20] sm:$0xf]
        %v839 = vld [vmem:[#allocation6 + $0x24] sm:$0xf]
        %v840 = vld [vmem:[#allocation6 + $0x28] sm:$0xf]
        %v841 = vld [vmem:[#allocation6 + $0x2c] sm:$0xf]
        %v842 = vld [vmem:[#allocation6 + $0x30] sm:$0xf]
        %v843 = vld [vmem:[#allocation6 + $0x34] sm:$0xf]
        %v844 = vld [vmem:[#allocation6 + $0x38] sm:$0xf]
        %v845 = vld [vmem:[#allocation6 + $0x3c] sm:$0xf]
        %s846 = scalar_lea.vmem [#allocation6], 64
        %v847 = vld [vmem:[%s846] sm:$0xf]
        %v848 = vld [vmem:[%s846 + $0x4] sm:$0xf]
        %v849 = vld [vmem:[%s846 + $0x8] sm:$0xf]
        %v850 = vld [vmem:[%s846 + $0xc] sm:$0xf]
        %v851 = vld [vmem:[%s846 + $0x10] sm:$0xf]
        %v852 = vld [vmem:[%s846 + $0x14] sm:$0xf]
        %v853 = vld [vmem:[%s846 + $0x18] sm:$0xf]
        %v854 = vld [vmem:[%s846 + $0x1c] sm:$0xf]
        %v855 = vld [vmem:[%s846 + $0x20] sm:$0xf]
        %v856 = vld [vmem:[%s846 + $0x24] sm:$0xf]
        %v857 = vld [vmem:[%s846 + $0x28] sm:$0xf]
        %v858 = vld [vmem:[%s846 + $0x2c] sm:$0xf]
        %v859 = vld [vmem:[%s846 + $0x30] sm:$0xf]
        %v860 = vld [vmem:[%s846 + $0x34] sm:$0xf]
        %v861 = vld [vmem:[%s846 + $0x38] sm:$0xf]
        %v862 = vld [vmem:[%s846 + $0x3c] sm:$0xf]
        %v864 = vunpack.c.l.b16 %v826
        %v865 = vpack.c.b16 %v864, %v864
        %v867 = vshrl.u32 %v865, 16
        %v869 = vshll.u32 %v865, 16
        %v871 = vrot.slane %v869, 1
        %v872 = vor.u32 %v867, %v871
        %v890 = vunpack.c.l.b16 %v847
        %v891 = vunpack.c.l.b16 %v848
        %v892 = vunpack.c.l.b16 %v849
        %v893 = vunpack.c.l.b16 %v850
        %v894 = vunpack.c.l.b16 %v851
        %v895 = vunpack.c.l.b16 %v852
        %v896 = vunpack.c.l.b16 %v853
        %v897 = vunpack.c.l.b16 %v854
        %v898 = vunpack.c.l.b16 %v855
        %v899 = vunpack.c.l.b16 %v856
        %v900 = vunpack.c.l.b16 %v857
        %v901 = vunpack.c.l.b16 %v858
        %v902 = vunpack.c.l.b16 %v859
        %v903 = vunpack.c.l.b16 %v860
        %v904 = vunpack.c.l.b16 %v861
        %v905 = vunpack.c.l.b16 %v862
        %v906 = vpack.c.b16 %v891, %v890
        %v907 = vpack.c.b16 %v893, %v892
        %v908 = vpack.c.b16 %v895, %v894
        %v909 = vpack.c.b16 %v897, %v896
        %v910 = vpack.c.b16 %v899, %v898
        %v911 = vpack.c.b16 %v901, %v900
        %v912 = vpack.c.b16 %v903, %v902
        %v913 = vpack.c.b16 %v905, %v904
        %922 = vmatpush.bf16.msra.mxu0 %v913
        %923 = vmatpush.bf16.msra.mxu0 %v912
        %924 = vmatpush.bf16.msra.mxu0 %v911
        %925 = vmatpush.bf16.msra.mxu0 %v910
        %926 = vmatpush.bf16.msra.mxu0 %v909
        %927 = vmatpush.bf16.msra.mxu0 %v908
        %928 = vmatpush.bf16.msra.mxu0 %v907
        %929 = vmatpush.bf16.msra.mxu0 %v906
        %930 = vmatmul.bf16.gmra.mxu0 %v872
        %v931 = vpop.f32.mrf.mxu0
        %v932 = vadd.f32 0.0, %v931
        %v933 = vpop.f32.mrf.mxu0
        %934 = vdwg.mxu0
        %v951 = vunpack.c.l.b16 %v830
        %v952 = vunpack.c.l.b16 %v831
        %v953 = vunpack.c.l.b16 %v832
        %v954 = vunpack.c.l.b16 %v833
        %v955 = vunpack.c.l.b16 %v834
        %v956 = vunpack.c.l.b16 %v835
        %v957 = vunpack.c.l.b16 %v836
        %v958 = vunpack.c.l.b16 %v837
        %v959 = vunpack.c.l.b16 %v838
        %v960 = vunpack.c.l.b16 %v839
        %v961 = vunpack.c.l.b16 %v840
        %v962 = vunpack.c.l.b16 %v841
        %v963 = vunpack.c.l.b16 %v842
        %v964 = vunpack.c.l.b16 %v843
        %v965 = vunpack.c.l.b16 %v844
        %v966 = vunpack.c.l.b16 %v845
        %v967 = vpack.c.b16 %v952, %v951
        %v968 = vpack.c.b16 %v954, %v953
        %v969 = vpack.c.b16 %v956, %v955
        %v970 = vpack.c.b16 %v958, %v957
        %v971 = vpack.c.b16 %v960, %v959
        %v972 = vpack.c.b16 %v962, %v961
        %v973 = vpack.c.b16 %v964, %v963
        %v974 = vpack.c.b16 %v966, %v965
        %983 = vmatpush.bf16.msra.mxu0 %v974
        %984 = vmatpush.bf16.msra.mxu0 %v973
        %985 = vmatpush.bf16.msra.mxu0 %v972
        %986 = vmatpush.bf16.msra.mxu0 %v971
        %987 = vmatpush.bf16.msra.mxu0 %v970
        %988 = vmatpush.bf16.msra.mxu0 %v969
        %989 = vmatpush.bf16.msra.mxu0 %v968
        %990 = vmatpush.bf16.msra.mxu0 %v967
        %991 = vmatmul.bf16.gmra.mxu0 %v826
        %v992 = vpop.f32.mrf.mxu0
        %v993 = vadd.f32 %v932, %v992
        %v994 = vpop.f32.mrf.mxu0
        %995 = vdwg.mxu0
        %s996 = scalar_lea.vmem [#allocation6], 128
        %v997 = vld [vmem:[%s996] sm:$0xf]
        %v998 = vld [vmem:[%s996 + $0x4] sm:$0xf]
        %v999 = vld [vmem:[%s996 + $0x8] sm:$0xf]
        %v1000 = vld [vmem:[%s996 + $0xc] sm:$0xf]
        %v1001 = vld [vmem:[%s996 + $0x10] sm:$0xf]
        %v1002 = vld [vmem:[%s996 + $0x14] sm:$0xf]
        %v1003 = vld [vmem:[%s996 + $0x18] sm:$0xf]
        %v1004 = vld [vmem:[%s996 + $0x1c] sm:$0xf]
        %v1005 = vld [vmem:[%s996 + $0x20] sm:$0xf]
        %v1006 = vld [vmem:[%s996 + $0x24] sm:$0xf]
        %v1007 = vld [vmem:[%s996 + $0x28] sm:$0xf]
        %v1008 = vld [vmem:[%s996 + $0x2c] sm:$0xf]
        %v1009 = vld [vmem:[%s996 + $0x30] sm:$0xf]
        %v1010 = vld [vmem:[%s996 + $0x34] sm:$0xf]
        %v1011 = vld [vmem:[%s996 + $0x38] sm:$0xf]
        %v1012 = vld [vmem:[%s996 + $0x3c] sm:$0xf]
        %v1013 = vrot.slane %v865, 1
        %v1031 = vunpack.c.l.b16 %v997
        %v1032 = vunpack.c.l.b16 %v998
        %v1033 = vunpack.c.l.b16 %v999
        %v1034 = vunpack.c.l.b16 %v1000
        %v1035 = vunpack.c.l.b16 %v1001
        %v1036 = vunpack.c.l.b16 %v1002
        %v1037 = vunpack.c.l.b16 %v1003
        %v1038 = vunpack.c.l.b16 %v1004
        %v1039 = vunpack.c.l.b16 %v1005
        %v1040 = vunpack.c.l.b16 %v1006
        %v1041 = vunpack.c.l.b16 %v1007
        %v1042 = vunpack.c.l.b16 %v1008
        %v1043 = vunpack.c.l.b16 %v1009
        %v1044 = vunpack.c.l.b16 %v1010
        %v1045 = vunpack.c.l.b16 %v1011
        %v1046 = vunpack.c.l.b16 %v1012
        %v1047 = vpack.c.b16 %v1032, %v1031
        %v1048 = vpack.c.b16 %v1034, %v1033
        %v1049 = vpack.c.b16 %v1036, %v1035
        %v1050 = vpack.c.b16 %v1038, %v1037
        %v1051 = vpack.c.b16 %v1040, %v1039
        %v1052 = vpack.c.b16 %v1042, %v1041
        %v1053 = vpack.c.b16 %v1044, %v1043
        %v1054 = vpack.c.b16 %v1046, %v1045
        %1063 = vmatpush.bf16.msra.mxu0 %v1054
        %1064 = vmatpush.bf16.msra.mxu0 %v1053
        %1065 = vmatpush.bf16.msra.mxu0 %v1052
        %1066 = vmatpush.bf16.msra.mxu0 %v1051
        %1067 = vmatpush.bf16.msra.mxu0 %v1050
        %1068 = vmatpush.bf16.msra.mxu0 %v1049
        %1069 = vmatpush.bf16.msra.mxu0 %v1048
        %1070 = vmatpush.bf16.msra.mxu0 %v1047
        %1071 = vmatmul.bf16.gmra.mxu0 %v1013
        %v1072 = vpop.f32.mrf.mxu0
        %v1073 = vadd.f32 0.0, %v1072
        %v1074 = vpop.f32.mrf.mxu0
        %1075 = vdwg.mxu0
        %v1076 = vadd.f32 %v993, %v1073
        %s1077 = scalar_lea.vmem [#allocation6], 192
        %v1078 = vld [vmem:[%s1077] sm:$0xf]
        %v1079 = vld [vmem:[%s1077 + $0x4] sm:$0xf]
        %v1080 = vld [vmem:[%s1077 + $0x8] sm:$0xf]
        %v1081 = vld [vmem:[%s1077 + $0xc] sm:$0xf]
        %v1082 = vld [vmem:[%s1077 + $0x10] sm:$0xf]
        %v1083 = vld [vmem:[%s1077 + $0x14] sm:$0xf]
        %v1084 = vld [vmem:[%s1077 + $0x18] sm:$0xf]
        %v1085 = vld [vmem:[%s1077 + $0x1c] sm:$0xf]
        %v1086 = vld [vmem:[%s1077 + $0x20] sm:$0xf]
        %v1087 = vld [vmem:[%s1077 + $0x24] sm:$0xf]
        %v1088 = vld [vmem:[%s1077 + $0x28] sm:$0xf]
        %v1089 = vld [vmem:[%s1077 + $0x2c] sm:$0xf]
        %v1090 = vld [vmem:[%s1077 + $0x30] sm:$0xf]
        %v1091 = vld [vmem:[%s1077 + $0x34] sm:$0xf]
        %v1092 = vld [vmem:[%s1077 + $0x38] sm:$0xf]
        %v1093 = vld [vmem:[%s1077 + $0x3c] sm:$0xf]
        %v1095 = vunpack.c.l.b16 %v827
        %v1096 = vpack.c.b16 %v1095, %v864
        %v1098 = vshrl.u32 %v1096, 16
        %v1100 = vrot.slane %v1098, 1
        %v1101 = vshll.u32 %v1096, 16
        %v1103 = vrot.slane %v1101, 2
        %v1104 = vor.u32 %v1100, %v1103
        %v1122 = vunpack.c.l.b16 %v1078
        %v1123 = vunpack.c.l.b16 %v1079
        %v1124 = vunpack.c.l.b16 %v1080
        %v1125 = vunpack.c.l.b16 %v1081
        %v1126 = vunpack.c.l.b16 %v1082
        %v1127 = vunpack.c.l.b16 %v1083
        %v1128 = vunpack.c.l.b16 %v1084
        %v1129 = vunpack.c.l.b16 %v1085
        %v1130 = vunpack.c.l.b16 %v1086
        %v1131 = vunpack.c.l.b16 %v1087
        %v1132 = vunpack.c.l.b16 %v1088
        %v1133 = vunpack.c.l.b16 %v1089
        %v1134 = vunpack.c.l.b16 %v1090
        %v1135 = vunpack.c.l.b16 %v1091
        %v1136 = vunpack.c.l.b16 %v1092
        %v1137 = vunpack.c.l.b16 %v1093
        %v1138 = vpack.c.b16 %v1123, %v1122
        %v1139 = vpack.c.b16 %v1125, %v1124
        %v1140 = vpack.c.b16 %v1127, %v1126
        %v1141 = vpack.c.b16 %v1129, %v1128
        %v1142 = vpack.c.b16 %v1131, %v1130
        %v1143 = vpack.c.b16 %v1133, %v1132
        %v1144 = vpack.c.b16 %v1135, %v1134
        %v1145 = vpack.c.b16 %v1137, %v1136
        %1154 = vmatpush.bf16.msra.mxu0 %v1145
        %1155 = vmatpush.bf16.msra.mxu0 %v1144
        %1156 = vmatpush.bf16.msra.mxu0 %v1143
        %1157 = vmatpush.bf16.msra.mxu0 %v1142
        %1158 = vmatpush.bf16.msra.mxu0 %v1141
        %1159 = vmatpush.bf16.msra.mxu0 %v1140
        %1160 = vmatpush.bf16.msra.mxu0 %v1139
        %1161 = vmatpush.bf16.msra.mxu0 %v1138
        %1162 = vmatmul.bf16.gmra.mxu0 %v1104
        %v1163 = vpop.f32.mrf.mxu0
        %v1164 = vadd.f32 0.0, %v1163
        %v1165 = vpop.f32.mrf.mxu0
        %1166 = vdwg.mxu0
        %v1167 = vadd.f32 %v1076, %v1164
        %s1168 = scalar_lea.vmem [#allocation6], 256
        %v1169 = vld [vmem:[%s1168] sm:$0xf]
        %v1170 = vld [vmem:[%s1168 + $0x4] sm:$0xf]
        %v1171 = vld [vmem:[%s1168 + $0x8] sm:$0xf]
        %v1172 = vld [vmem:[%s1168 + $0xc] sm:$0xf]
        %v1173 = vld [vmem:[%s1168 + $0x10] sm:$0xf]
        %v1174 = vld [vmem:[%s1168 + $0x14] sm:$0xf]
        %v1175 = vld [vmem:[%s1168 + $0x18] sm:$0xf]
        %v1176 = vld [vmem:[%s1168 + $0x1c] sm:$0xf]
        %v1177 = vld [vmem:[%s1168 + $0x20] sm:$0xf]
        %v1178 = vld [vmem:[%s1168 + $0x24] sm:$0xf]
        %v1179 = vld [vmem:[%s1168 + $0x28] sm:$0xf]
        %v1180 = vld [vmem:[%s1168 + $0x2c] sm:$0xf]
        %v1181 = vld [vmem:[%s1168 + $0x30] sm:$0xf]
        %v1182 = vld [vmem:[%s1168 + $0x34] sm:$0xf]
        %v1183 = vld [vmem:[%s1168 + $0x38] sm:$0xf]
        %v1184 = vld [vmem:[%s1168 + $0x3c] sm:$0xf]
        %v1185 = vrot.slane %v1096, 2
        %v1203 = vunpack.c.l.b16 %v1169
        %v1204 = vunpack.c.l.b16 %v1170
        %v1205 = vunpack.c.l.b16 %v1171
        %v1206 = vunpack.c.l.b16 %v1172
        %v1207 = vunpack.c.l.b16 %v1173
        %v1208 = vunpack.c.l.b16 %v1174
        %v1209 = vunpack.c.l.b16 %v1175
        %v1210 = vunpack.c.l.b16 %v1176
        %v1211 = vunpack.c.l.b16 %v1177
        %v1212 = vunpack.c.l.b16 %v1178
        %v1213 = vunpack.c.l.b16 %v1179
        %v1214 = vunpack.c.l.b16 %v1180
        %v1215 = vunpack.c.l.b16 %v1181
        %v1216 = vunpack.c.l.b16 %v1182
        %v1217 = vunpack.c.l.b16 %v1183
        %v1218 = vunpack.c.l.b16 %v1184
        %v1219 = vpack.c.b16 %v1204, %v1203
        %v1220 = vpack.c.b16 %v1206, %v1205
        %v1221 = vpack.c.b16 %v1208, %v1207
        %v1222 = vpack.c.b16 %v1210, %v1209
        %v1223 = vpack.c.b16 %v1212, %v1211
        %v1224 = vpack.c.b16 %v1214, %v1213
        %v1225 = vpack.c.b16 %v1216, %v1215
        %v1226 = vpack.c.b16 %v1218, %v1217
        %1235 = vmatpush.bf16.msra.mxu0 %v1226
        %1236 = vmatpush.bf16.msra.mxu0 %v1225
        %1237 = vmatpush.bf16.msra.mxu0 %v1224
        %1238 = vmatpush.bf16.msra.mxu0 %v1223
        %1239 = vmatpush.bf16.msra.mxu0 %v1222
        %1240 = vmatpush.bf16.msra.mxu0 %v1221
        %1241 = vmatpush.bf16.msra.mxu0 %v1220
        %1242 = vmatpush.bf16.msra.mxu0 %v1219
        %1243 = vmatmul.bf16.gmra.mxu0 %v1185
        %v1244 = vpop.f32.mrf.mxu0
        %v1245 = vadd.f32 0.0, %v1244
        %v1246 = vpop.f32.mrf.mxu0
        %1247 = vdwg.mxu0
        %v1248 = vadd.f32 %v1167, %v1245
        %v1250 = vperm.slane %v828, 0
        %v1252 = vmul.f32 %v1248, %v1250
        %v1254 = vperm.slane %v829, 0
        %v1256 = vadd.f32 %v1252, %v1254
        %v1257 = vmax.f32 %v1256, 0.0
        %v1258 = vld [vmem:[#allocation13] sm:$0x3]
        %v1260 = vrot.slane %v1257, 1
        %v1262 = vmax.f32 %v1257, %v1260
        %v1263 = vpack.c.bf16 %v1262, %v1262
        %vm1264 = vcmask 39936
        %v1266 = vsel %vm1264, %v1258, 0
        %vm1268 = vcmask 1042432
        %v1269 = vsel %vm806, 4294967295, 65535
        %v1270 = vsel %vm1268, %v1269, 0
        %v1272 = vand.u32 %v1263, %v1270
        %1274 = vmatpush.bf16.msra.mxu0 0
        %1275 = vmatpush.bf16.msra.mxu0 0
        %1276 = vmatpush.bf16.msra.mxu0 0
        %1277 = vmatpush.bf16.msra.mxu0 0
        %1278 = vmatpush.bf16.msra.mxu0 0
        %1279 = vmatpush.bf16.msra.mxu0 0
        %1280 = vmatpush.bf16.msra.mxu0 0
        %1281 = vmatpush.bf16.msra.mxu0 %v1272
        %1282 = vmatmul.bf16.gmra.mxu0 %v1266
        %v1283 = vpop.f32.mrf.mxu0
        %v1284 = vadd.f32 0.0, %v1283
        %v1285 = vpop.f32.mrf.mxu0
        %1286 = vdwg.mxu0
        %v1287 = vpack.c.bf16 %v1284, %v1284
        %v1288 = vld [vmem:[#allocation10] sm:$0xf]
        %v1289 = vld [vmem:[#allocation10 + $0x4] sm:$0xf]
        %v1290 = vld [vmem:[#allocation10 + $0x8] sm:$0xf]
        %v1291 = vld [vmem:[#allocation10 + $0xc] sm:$0xf]
        %v1292 = vld [vmem:[#allocation10 + $0x10] sm:$0xf]
        %v1293 = vld [vmem:[#allocation10 + $0x14] sm:$0xf]
        %v1294 = vld [vmem:[#allocation10 + $0x18] sm:$0xf]
        %v1295 = vld [vmem:[#allocation10 + $0x1c] sm:$0xf]
        %v1296 = vld [vmem:[#allocation10 + $0x20] sm:$0xf]
        %v1297 = vld [vmem:[#allocation10 + $0x24] sm:$0xf]
        %v1298 = vld [vmem:[#allocation10 + $0x28] sm:$0xf]
        %v1299 = vld [vmem:[#allocation10 + $0x2c] sm:$0xf]
        %v1300 = vld [vmem:[#allocation10 + $0x30] sm:$0xf]
        %v1301 = vld [vmem:[#allocation10 + $0x34] sm:$0xf]
        %v1302 = vld [vmem:[#allocation10 + $0x38] sm:$0xf]
        %v1303 = vld [vmem:[#allocation10 + $0x3c] sm:$0xf]
        %v1304 = vld [vmem:[#allocation12] sm:$0x1]
        %v1306 = vperm.slane %v1304, 0
        %v1324 = vunpack.c.l.b16 %v1288
        %v1325 = vunpack.c.l.b16 %v1289
        %v1326 = vunpack.c.l.b16 %v1290
        %v1327 = vunpack.c.l.b16 %v1291
        %v1328 = vunpack.c.l.b16 %v1292
        %v1329 = vunpack.c.l.b16 %v1293
        %v1330 = vunpack.c.l.b16 %v1294
        %v1331 = vunpack.c.l.b16 %v1295
        %v1332 = vunpack.c.l.b16 %v1296
        %v1333 = vunpack.c.l.b16 %v1297
        %v1334 = vunpack.c.l.b16 %v1298
        %v1335 = vunpack.c.l.b16 %v1299
        %v1336 = vunpack.c.l.b16 %v1300
        %v1337 = vunpack.c.l.b16 %v1301
        %v1338 = vunpack.c.l.b16 %v1302
        %v1339 = vunpack.c.l.b16 %v1303
        %v1340 = vpack.c.b16 %v1325, %v1324
        %v1341 = vpack.c.b16 %v1327, %v1326
        %v1342 = vpack.c.b16 %v1329, %v1328
        %v1343 = vpack.c.b16 %v1331, %v1330
        %v1344 = vpack.c.b16 %v1333, %v1332
        %v1345 = vpack.c.b16 %v1335, %v1334
        %v1346 = vpack.c.b16 %v1337, %v1336
        %v1347 = vpack.c.b16 %v1339, %v1338
        %1356 = vmatpush.bf16.msra.mxu0 %v1347
        %1357 = vmatpush.bf16.msra.mxu0 %v1346
        %1358 = vmatpush.bf16.msra.mxu0 %v1345
        %1359 = vmatpush.bf16.msra.mxu0 %v1344
        %1360 = vmatpush.bf16.msra.mxu0 %v1343
        %1361 = vmatpush.bf16.msra.mxu0 %v1342
        %1362 = vmatpush.bf16.msra.mxu0 %v1341
        %1363 = vmatpush.bf16.msra.mxu0 %v1340
        %1364 = vmatmul.bf16.gmra.mxu0 %v1287
        %v1365 = vpop.f32.mrf.mxu0
        %v1366 = vadd.f32 %v1306, %v1365
        %v1367 = vpop.f32.mrf.mxu0
        %1368 = vdwg.mxu0
        %1369 = vst [vmem:[%s539] sm:$0x7] %v1284
        %1370 = vst [vmem:[%s543] sm:$0x7] %v1366
        %p1371 = scmp.lt.s32.totalorder %s29, 1
        %s1372 = scalar_select %p1371, %s29, 1
        %s1373 = smul.addr %s1372, 4
        %s1374 = scalar_lea.vmem %s11, %s1373
        %p1375 = scmp.lt.s32.totalorder %s29, 1
        %s1376 = scalar_select %p1375, %s29, 1
        %s1377 = smul.addr %s1376, 4
        %s1378 = scalar_lea.vmem %s12, %s1377
        // Predicated region
        $region97: #{tpu_custom_call.1} parent=63 // pred_check
          %p1379 = pneg %p283
        $region98: #{tpu_custom_call.1} parent=63 // pred_check_branch
          %1381 = sbr.rel (%p1379) target = $region100
        $region99: #{tpu_custom_call.1} parent=63 // pred_region
          _
        $region100: #{tpu_custom_call.1} parent=63 // pred_fallthru
          _
        // Predicated region
        $region101: #{tpu_custom_call.1} parent=63 // pred_check
          %p1382 = pneg %p309
        $region102: #{tpu_custom_call.1} parent=63 // pred_check_branch
          %1384 = sbr.rel (%p1382) target = $region104
        $region103: #{tpu_custom_call.1} parent=63 // pred_region
          _
        $region104: #{tpu_custom_call.1} parent=63 // pred_fallthru
          _
      $region64: #{tpu_custom_call.1} parent=5 // pred_fallthru
        _
      %p1385 = scmp.le.s32.totalorder 2, %s24
      // Predicated region
      $region105: #{tpu_custom_call.1} parent=5 // pred_check
        %p1386 = pneg %p1385
      $region106: #{tpu_custom_call.1} parent=5 // pred_check_branch
        %1388 = sbr.rel (%p1386) target = $region108
      $region107: #{tpu_custom_call.1} parent=5 // pred_region
        %s1389 = ssub.s32 %s24, 2
        // Predicated region
        $region109: #{tpu_custom_call.1} parent=107 // pred_check
          %p1390 = pneg %p289
        $region110: #{tpu_custom_call.1} parent=107 // pred_check_branch
          %1392 = sbr.rel (%p1390) target = $region112
        $region111: #{tpu_custom_call.1} parent=107 // pred_region
          %p1393 = scmp.lt.s32.totalorder %s30, 1
          %s1394 = scalar_select %p1393, %s30, 1
          %s1395 = smul.addr %s1394, 4
          %s1396 = scalar_lea.vmem %s11, %s1395
        $region112: #{tpu_custom_call.1} parent=107 // pred_fallthru
          _
        // Predicated region
        $region113: #{tpu_custom_call.1} parent=107 // pred_check
          %p1397 = pneg %p315
        $region114: #{tpu_custom_call.1} parent=107 // pred_check_branch
          %1399 = sbr.rel (%p1397) target = $region116
        $region115: #{tpu_custom_call.1} parent=107 // pred_region
          %p1400 = scmp.lt.s32.totalorder %s30, 1
          %s1401 = scalar_select %p1400, %s30, 1
          %s1402 = smul.addr %s1401, 4
          %s1403 = scalar_lea.vmem %s12, %s1402
        $region116: #{tpu_custom_call.1} parent=107 // pred_fallthru
          _
      $region108: #{tpu_custom_call.1} parent=5 // pred_fallthru
        _
    $region6: #{tpu_custom_call.1} parent=1 // loop_footer
      %s28 = sadd.s32 1, %s24
    $region7: #{tpu_custom_call.1} parent=1 // loop_footer_branch
      %23 = sbr.rel target = $region3
    $region8: #{tpu_custom_call.1} parent=1 // loop_exit
      _
    %1404 = vsyncpa [#allocation3], 1
    %s1405 = scalar_lea.sflag [#allocation3], 1
    %1406 = vsyncpa %s1405, 1
    %1407 = vsyncpa [#allocation5], 1
    %1408 = vsyncpa [#allocation8], 1
    %1409 = vsyncpa [#allocation11], 1
    %1410 = vsyncpa [#allocation14], 1

</llo_original>
